<compile_context>
chip_gen: v5e
topology: v5e:2x2
jax: 0.10.0
libtpu: 0.0.40
codegen_flags: <defaults>
</compile_context>

<pallas_src>
import functools

import jax
import jax.numpy as jnp
import numpy as np
from jax.experimental import pallas as pl
from jax.experimental.pallas import tpu as pltpu

EDGE_DIM = 16          # configer.get('protoseg', 'edge_dim') -- small synthetic value
XIN_CHANNELS = 720
MXU_DTYPE = jnp.bfloat16  # MXU-native operand dtype; accumulation stays f32.


def _round_up(x, m):
    return (x + m - 1) // m * m


def _pick_vmem_limit():
    """32 MiB scoped limit on 64-MiB-VMEM chips (v7x), 64 MiB on 128-MiB chips (v5e/v6e)."""
    cap = None
    try:
        info = pltpu.get_tpu_info()
        for name in ("vmem_capacity_bytes", "vmem_size_bytes", "vmem_bytes"):
            v = getattr(info, name, None)
            if isinstance(v, (int, float)) and v > 0:
                cap = int(v)
                break
    except Exception:
        cap = None
    if cap is None:
        cap = 128 << 20
    return (32 << 20) if cap <= (64 << 20) else (64 << 20)


_VMEM_LIMIT = _pick_vmem_limit()


# ---------------------------------------------------------------------------
# Pallas kernels
# ---------------------------------------------------------------------------

def _conv3x3_kernel(x_ref, w_ref, b_ref, o_ref, *, Ho, Wo):
    """Fused 3x3 'valid' conv + folded-BN bias + ReLU on one (padded) image.
    x_ref: (Hp, Wp, Cin) bf16; w_ref: (9, Cin, Cout) bf16; b_ref: (1, Cout) f32;
    o_ref: (Ho, Wo, Cout).  im2col = 9 shifted VMEM reads per output row (never hits HBM)."""
    cout = o_ref.shape[-1]

    def row_body(r, carry):
        acc = jnp.zeros((Wo, cout), jnp.float32)
        for k in range(9):
            ky, kx = divmod(k, 3)
            patch = x_ref[r + ky, pl.ds(kx, Wo), :]          # (Wo, Cin)
            acc = acc + jnp.dot(patch, w_ref[k], preferred_element_type=jnp.float32)
        y = jnp.maximum(acc + b_ref[...], 0.0)
        o_ref[r] = y.astype(o_ref.dtype)
        return carry

    jax.lax.fori_loop(0, Ho, row_body, 0)


def _edge_fuse_kernel(x_ref, wd_ref, bd_ref, wo_ref, bo_ref, feat_ref, score_ref, *, Ho, Wo):
    """Fused edge_down (3x3 conv + folded BN + ReLU) and edge_out (4 block-diag 1x1 sigmoid
    heads, summed).  x_ref: (Ho+2, Wo+2, 4*mid) padded e_cat for one image -- read once."""
    mid = feat_ref.shape[-1]

    def row_body(r, carry):
        # edge_down: 3x3 conv (padding=1 applied on the host ring)
        acc = jnp.zeros((Wo, mid), jnp.float32)
        for k in range(9):
            ky, kx = divmod(k, 3)
            patch = x_ref[r + ky, pl.ds(kx, Wo), :]
            acc = acc + jnp.dot(patch, wd_ref[k], preferred_element_type=jnp.float32)
        feat_ref[r] = jnp.maximum(acc + bd_ref[...], 0.0).astype(feat_ref.dtype)

        # edge_out: the un-padded center row, 4 sigmoid heads, summed (exact sigmoid)
        center = x_ref[r + 1, pl.ds(1, Wo), :]               # (Wo, 4*mid)
        logits = jnp.dot(center, wo_ref[...], preferred_element_type=jnp.float32) + bo_ref[...]
        sig = 1.0 / (1.0 + jnp.exp(-logits))
        score_ref[r] = jnp.sum(sig, axis=-1, keepdims=True).astype(score_ref.dtype)
        return carry

    jax.lax.fori_loop(0, Ho, row_body, 0)


def _mm_bias_act_kernel(x_ref, w_ref, b_ref, o_ref, *, act):
    """out = act(x @ w + bias). BN scale pre-folded into w; epilogue stays f32."""
    y = jnp.dot(x_ref[...], w_ref[...], preferred_element_type=jnp.float32) + b_ref[...]
    if act == "relu":
        y = jnp.maximum(y, 0.0)
    o_ref[...] = y.astype(o_ref.dtype)


def _bca_attn_kernel(fx_ref, fy_ref, fv_ref, o_ref):
    """Per (batch, query-tile): softmax(fx @ fy_t, -1) @ fv with exact normalization."""
    sim = jnp.dot(fx_ref[...], fy_ref[...], preferred_element_type=jnp.float32)
    sim = sim - jnp.max(sim, axis=-1, keepdims=True)
    p = jnp.exp(sim)
    p = p / jnp.sum(p, axis=-1, keepdims=True)
    o_ref[...] = jnp.dot(p.astype(fv_ref.dtype), fv_ref[...],
                         preferred_element_type=jnp.float32).astype(o_ref.dtype)


# ---------------------------------------------------------------------------
# Kernel wrappers
# ---------------------------------------------------------------------------

def conv3x3_bn_relu(x_nhwc, w9, bias, *, padding, out_dtype=MXU_DTYPE):
    """Fused 3x3 conv + folded-BN bias + ReLU; im2col inside the kernel."""
    x_nhwc = x_nhwc.astype(MXU_DTYPE)
    if padding:
        x_nhwc = jnp.pad(x_nhwc, ((0, 0), (1, 1), (1, 1), (0, 0)))
    N, Hp, Wp, Cin = x_nhwc.shape
    Ho, Wo = Hp - 2, Wp - 2
    Cout = w9.shape[-1]
    # TODO(synk): one whole (padded) image per grid step; at very large H*W*C this should be
    # row-tiled with a manual halo DMA instead of a full-image VMEM block.
    return pl.pallas_call(
        functools.partial(_conv3x3_kernel, Ho=Ho, Wo=Wo),
        out_shape=jax.ShapeDtypeStruct((N, Ho, Wo, Cout), out_dtype),
        grid=(N,),
        in_specs=[
            pl.BlockSpec((None, Hp, Wp, Cin), lambda n: (n, 0, 0, 0)),
            pl.BlockSpec((9, Cin, Cout), lambda n: (0, 0, 0)),
            pl.BlockSpec((1, Cout), lambda n: (0, 0)),
        ],
        out_specs=pl.BlockSpec((None, Ho, Wo, Cout), lambda n: (n, 0, 0, 0)),
        compiler_params=pltpu.CompilerParams(
            dimension_semantics=("parallel",), vmem_limit_bytes=_VMEM_LIMIT),
    )(x_nhwc, w9, bias)


def edge_down_and_score(e_cat, wd, bd, wo, bo):
    """edge_down (3x3, pad=1) and the 4 summed sigmoid edge_out heads in one kernel."""
    N, H, W, C = e_cat.shape
    mid = wd.shape[-1]
    e_pad = jnp.pad(e_cat.astype(MXU_DTYPE), ((0, 0), (1, 1), (1, 1), (0, 0)))
    return pl.pallas_call(
        functools.partial(_edge_fuse_kernel, Ho=H, Wo=W),
        out_shape=(jax.ShapeDtypeStruct((N, H, W, mid), MXU_DTYPE),
                   jax.ShapeDtypeStruct((N, H, W, 1), jnp.float32)),
        grid=(N,),
        in_specs=[
            pl.BlockSpec((None, H + 2, W + 2, C), lambda n: (n, 0, 0, 0)),
            pl.BlockSpec((9, C, mid), lambda n: (0, 0, 0)),
            pl.BlockSpec((1, mid), lambda n: (0, 0)),
            pl.BlockSpec((C, 4), lambda n: (0, 0)),
            pl.BlockSpec((1, 4), lambda n: (0, 0)),
        ],
        out_specs=(pl.BlockSpec((None, H, W, mid), lambda n: (n, 0, 0, 0)),
                   pl.BlockSpec((None, H, W, 1), lambda n: (n, 0, 0, 0))),
        compiler_params=pltpu.CompilerParams(
            dimension_semantics=("parallel",), vmem_limit_bytes=_VMEM_LIMIT),
    )(e_pad, wd, bd, wo, bo)


def matmul_bias_act(x2d, w, bias, act="none", *, out_dtype=jnp.float32, tm=512):
    """Row-tiled fused matmul + bias + act.  Weights/bias pre-folded & pre-cast in
    prepare_params; M padded only up to a multiple of 8 (never a full pad to tm)."""
    M, K = x2d.shape
    N = w.shape[1]
    Mp = _round_up(M, 8)
    if Mp != M:
        x2d = jnp.pad(x2d, ((0, Mp - M), (0, 0)))
    x2d = x2d.astype(MXU_DTYPE)
    tm = min(tm, Mp)
    if Mp > 8 and tm >= Mp:
        # keep >= 2 row blocks so the "parallel" M axis can feed both v7x TensorCores
        tm = _round_up(pl.cdiv(Mp, 2), 8)
    grid_m = pl.cdiv(Mp, tm)
    out = pl.pallas_call(
        functools.partial(_mm_bias_act_kernel, act=act),
        out_shape=jax.ShapeDtypeStruct((Mp, N), out_dtype),
        grid=(grid_m,),
        in_specs=[
            pl.BlockSpec((tm, K), lambda i: (i, 0)),
            pl.BlockSpec((K, N), lambda i: (0, 0)),
            pl.BlockSpec((1, N), lambda i: (0, 0)),
        ],
        out_specs=pl.BlockSpec((tm, N), lambda i: (i, 0)),
        compiler_params=pltpu.CompilerParams(
            dimension_semantics=("parallel",), vmem_limit_bytes=_VMEM_LIMIT),
    )(x2d, w.astype(MXU_DTYPE), bias)
    return out[:M] if Mp != M else out


def bca_attention(fx, fy_t, fv, *, out_dtype=jnp.float32):
    """softmax(fx @ fy_t, -1) @ fv per batch, query (HW) axis tiled so the f32 logits tile
    stays bounded in VMEM (v7x-safe) and provides a second parallel grid axis."""
    B, HW, mid = fx.shape
    HWd = fv.shape[1]
    HWp = _round_up(HW, 8)
    if HWp != HW:
        fx = jnp.pad(fx, ((0, 0), (0, HWp - HW), (0, 0)))
    # bound per-step f32 logits (tq, HWd) to ~4 MiB; tq a multiple of 8
    tq_cap = max(8, ((4 << 20) // max(HWd * 4, 1)) // 8 * 8)
    tq = min(512, HWp, tq_cap)
    grid = (B, pl.cdiv(HWp, tq))
    # TODO(synk): if the downsampled key count HWd itself grows large, switch to an
    # online-softmax (flash) formulation with the key axis as an "arbitrary" grid dim.
    out = pl.pallas_call(
        _bca_attn_kernel,
        out_shape=jax.ShapeDtypeStruct((B, HWp, mid), out_dtype),
        grid=grid,
        in_specs=[
            pl.BlockSpec((None, tq, mid), lambda b, q: (b, q, 0)),
            pl.BlockSpec((None, mid, HWd), lambda b, q: (b, 0, 0)),
            pl.BlockSpec((None, HWd, mid), lambda b, q: (b, 0, 0)),
        ],
        out_specs=pl.BlockSpec((None, tq, mid), lambda b, q: (b, q, 0)),
        compiler_params=pltpu.CompilerParams(
            dimension_semantics=("parallel", "parallel"), vmem_limit_bytes=_VMEM_LIMIT),
    )(fx.astype(MXU_DTYPE), fy_t.astype(MXU_DTYPE), fv.astype(MXU_DTYPE))
    return out[:, :HW] if HWp != HW else out


# ---------------------------------------------------------------------------
# JAX glue: layout, bilinear resize (align_corners=True), max pooling
# ---------------------------------------------------------------------------

def to_nhwc(x):
    return jnp.transpose(x, (0, 2, 3, 1))


def _interp_matrix(n_out, n_in):
    """1-D linear interpolation matrix with F.interpolate align_corners=True semantics."""
    if n_in == 1:
        return jnp.ones((n_out, 1), jnp.float32)
    idx = jnp.arange(n_out, dtype=jnp.float32)
    src = jnp.zeros((n_out,), jnp.float32) if n_out == 1 else idx * (n_in - 1) / (n_out - 1)
    i0 = jnp.clip(jnp.floor(src), 0, n_in - 2).astype(jnp.int32)
    w1 = src - i0.astype(jnp.float32)
    w0 = 1.0 - w1
    r = jnp.arange(n_out)
    A = jnp.zeros((n_out, n_in), jnp.float32)
    A = A.at[r, i0].add(w0)
    A = A.at[r, i0 + 1].add(w1)
    return A


def bilinear_resize(x_nhwc, h_out, w_out):
    if x_nhwc.shape[1] == h_out and x_nhwc.shape[2] == w_out:
        return x_nhwc  # identity resize (align_corners=True) -> skip
    Ah = _interp_matrix(h_out, x_nhwc.shape[1])
    Aw = _interp_matrix(w_out, x_nhwc.shape[2])
    y = jnp.einsum("ph,nhwc->npwc", Ah, x_nhwc.astype(jnp.float32))
    y = jnp.einsum("qw,npwc->npqc", Aw, y)
    return y


def maxpool4(x_nhwc):
    # nn.MaxPool2d(4): kernel 4, stride 4, floor division of the spatial size.
    N, H, W, C = x_nhwc.shape
    Hc, Wc = (H // 4) * 4, (W // 4) * 4
    x_nhwc = x_nhwc[:, :Hc, :Wc, :]
    return x_nhwc.reshape(N, Hc // 4, 4, Wc // 4, 4, C).max(axis=(2, 4))


# ---------------------------------------------------------------------------
# Deterministic synthetic parameters (shapes from the module __init__)
# ---------------------------------------------------------------------------

def init_params(key, edge_dim=EDGE_DIM):
    kit = iter(jax.random.split(key, 48))

    def nrm(shape, scale=0.05):
        return scale * jax.random.normal(next(kit), shape, jnp.float32)

    def bn(c):  # folded inference-mode BatchNorm -> (scale, bias)
        s = 1.0 + 0.1 * jax.random.normal(next(kit), (c,), jnp.float32)
        b = 0.05 * jax.random.normal(next(kit), (c,), jnp.float32)
        return s, b

    p = {}
    for name, cin in (("edge_conv1", 48), ("edge_conv2", 96), ("edge_conv3", 192)):
        s, b = bn(edge_dim)
        p[name] = {"w": nrm((9 * cin, edge_dim)), "s": s, "b": b}
    for name in ("edge_out1", "edge_out2", "edge_out3"):
        p[name] = {"w": nrm((edge_dim, 1), 0.2), "s": jnp.ones((1,), jnp.float32),
                   "b": nrm((1,), 0.1)}
    s, b = bn(edge_dim)
    p["edge_down"] = {"w": nrm((9 * 4 * edge_dim, edge_dim)), "s": s, "b": b}

    def two_stage(cin):  # Conv1x1(cin->mid)+BN, Conv1x1(mid->mid)+BN (no bias, no relu)
        s1, b1 = bn(edge_dim)
        s2, b2 = bn(edge_dim)
        return {"w1": nrm((cin, edge_dim)), "s1": s1, "b1": b1,
                "w2": nrm((edge_dim, edge_dim)), "s2": s2, "b2": b2}

    p["f_self"] = two_stage(XIN_CHANNELS)
    p["f_x"] = two_stage(XIN_CHANNELS)
    p["f_y"] = two_stage(edge_dim)
    # f_up: Conv1x1(mid -> 720, bias=False) + BN whose weight/bias are constant-0.
    p["f_up_w"] = nrm((edge_dim, XIN_CHANNELS))
    p["f_up_s"] = jnp.zeros((XIN_CHANNELS,), jnp.float32)
    p["f_up_b"] = jnp.zeros((XIN_CHANNELS,), jnp.float32)
    return p


def prepare_params(raw, edge_dim=EDGE_DIM):
    """Fold BN scales into weights, collapse two-stage projections, batch edge_out heads,
    pre-cast weights to bf16 and pre-shape biases to (1, N) f32.
    Returns (array-only params dict, static f_up_zero flag)."""
    p = {}
    for name, cin in (("edge_conv1", 48), ("edge_conv2", 96), ("edge_conv3", 192),
                      ("edge_down", 4 * edge_dim)):
        q = raw[name]
        w = (q["w"] * q["s"][None, :]).reshape(9, cin, edge_dim)
        p[name] = {"w": w.astype(MXU_DTYPE), "b": q["b"].reshape(1, edge_dim)}

    # Batched edge_out heads (4th scale reuses edge_out3, as the PyTorch forward does).
    heads = ("edge_out1", "edge_out2", "edge_out3", "edge_out3")
    w_bd = jnp.zeros((4 * edge_dim, 4), jnp.float32)
    b_bd = jnp.zeros((4,), jnp.float32)
    for j, name in enumerate(heads):
        q = raw[name]
        w_bd = w_bd.at[j * edge_dim:(j + 1) * edge_dim, j].set((q["w"] * q["s"][None, :])[:, 0])
        b_bd = b_bd.at[j].set(q["b"][0])
    p["edge_out_w"] = w_bd.astype(MXU_DTYPE)
    p["edge_out_b"] = b_bd.reshape(1, 4)

    def collapse(q):
        # no activation between the stages: x@w1*s1+b1 -> @w2*s2+b2  ==  x@W + B
        w1 = q["w1"] * q["s1"][None, :]
        w2 = q["w2"] * q["s2"][None, :]
        return w1 @ w2, q["b1"] @ w2 + q["b2"]

    w_self, b_self = collapse(raw["f_self"])
    w_x, b_x = collapse(raw["f_x"])
    p["w_sx"] = jnp.concatenate([w_self, w_x], axis=1).astype(MXU_DTYPE)   # (720, 2*mid)
    p["b_sx"] = jnp.concatenate([b_self, b_x], axis=0).reshape(1, 2 * edge_dim)
    w_y, b_y = collapse(raw["f_y"])
    p["w_y"] = w_y.astype(MXU_DTYPE)
    p["b_y"] = b_y.reshape(1, edge_dim)
    p["w_up"] = (raw["f_up_w"] * raw["f_up_s"][None, :]).astype(MXU_DTYPE)
    p["b_up"] = raw["f_up_b"].reshape(1, XIN_CHANNELS)

    # Static flag, computed eagerly on the host -- prepare_params must not run under jit.
    f_up_zero = bool(np.all(np.asarray(raw["f_up_s"]) == 0.0)
                     and np.all(np.asarray(raw["f_up_b"]) == 0.0))
    return p, f_up_zero


# ---------------------------------------------------------------------------
# Module forward passes
# ---------------------------------------------------------------------------

def bca_module(c_nhwc, e_nhwc, p, f_up_zero, edge_dim=EDGE_DIM):
    if f_up_zero:
        # f_up's BN affine is constant-zero (module __init__): x + f_up(...) == x exactly,
        # so the projections, max-pools and attention are dead work -> skip them entirely.
        return c_nhwc

    B, H, W, Cx = c_nhwc.shape
    c_flat = c_nhwc.reshape(B * H * W, Cx)

    # f_self + f_x as one 32-wide matmul over the 720-channel input; f_y separately.
    sx = matmul_bias_act(c_flat, p["w_sx"], p["b_sx"], "none", out_dtype=MXU_DTYPE)
    fself = sx[:, :edge_dim].reshape(B, H, W, edge_dim)            # value
    fx = sx[:, edge_dim:].reshape(B, H, W, edge_dim)               # query
    fy = matmul_bias_act(e_nhwc.reshape(B * H * W, edge_dim), p["w_y"], p["b_y"],
                         "none", out_dtype=MXU_DTYPE).reshape(B, H, W, edge_dim)  # key

    # TODO(synk): the literal PyTorch code applies nn.MaxPool2d(4) to the already flattened
    # (B, HW, mid)/(B, mid, HW) tensors, which is shape-inconsistent with the following
    # torch.matmul; we implement the intended 4x spatial max-pool before flattening.
    fself_d = maxpool4(fself).reshape(B, -1, edge_dim)                       # (B, HWd, mid)
    fy_d = jnp.transpose(maxpool4(fy).reshape(B, -1, edge_dim), (0, 2, 1))   # (B, mid, HWd)
    fx_flat = fx.reshape(B, H * W, edge_dim)                                 # (B, HW, mid)

    fout = bca_attention(fx_flat, fy_d, fself_d, out_dtype=MXU_DTYPE)
    up = matmul_bias_act(fout.reshape(B * H * W, edge_dim), p["w_up"], p["b_up"],
                         "none", out_dtype=jnp.float32).reshape(B, H, W, Cx)
    return c_nhwc + up


@functools.partial(jax.jit, static_argnames=("f_up_zero",))
def boundary_head_forward(x_list, c, p, *, f_up_zero):
    h, w = x_list[4].shape[2], x_list[4].shape[3]
    c_nhwc = to_nhwc(c)

    # The original forward reuses edge_conv3 / edge_out3 for the 4th scale (reproduced).
    conv_names = ("edge_conv1", "edge_conv2", "edge_conv3", "edge_conv3")
    e_maps = []
    for xi, name in zip(x_list[:4], conv_names):
        q = p[name]
        e = conv3x3_bn_relu(to_nhwc(xi), q["w"], q["b"], padding=False)   # fused conv+BN+ReLU
        e_maps.append(bilinear_resize(e, h, w).astype(MXU_DTYPE))
    e_cat = jnp.concatenate(e_maps, axis=-1)                              # (N, h, w, 4*mid)

    # edge_out (4 sigmoid heads, summed) + edge_down (3x3 conv + BN + ReLU) fused so that
    # e_cat is read from HBM exactly once.
    e_feat, e_score = edge_down_and_score(e_cat, p["edge_down"]["w"], p["edge_down"]["b"],
                                          p["edge_out_w"], p["edge_out_b"])
    # F.interpolate of e_score to (h, w) is a same-size align_corners resize -> identity.

    attn = bca_module(c_nhwc, e_feat, p, f_up_zero)  # discarded by the PyTorch forward

    aux = {"edge_feat": e_feat, "edge_score": e_score, "attn": attn}
    # The PyTorch forward returns the input feature list `x` unchanged.
    return x_list, aux


# ---------------------------------------------------------------------------

if __name__ == "__main__":
    key = jax.random.PRNGKey(0)
    k_in, k_p = jax.random.split(key)
    ks = jax.random.split(k_in, 6)

    # Multi-resolution HRNet-48 style features (NCHW, like the PyTorch module).
    x_list = [
        jax.random.normal(ks[0], (2, 48, 16, 16), jnp.float32),
        jax.random.normal(ks[1], (2, 96, 12, 12), jnp.float32),
        jax.random.normal(ks[2], (2, 192, 10, 10), jnp.float32),
        # forward applies edge_conv3 (192-in) to x[3], so x[3] carries 192 channels
        jax.random.normal(ks[3], (2, 192, 8, 8), jnp.float32),
        jax.random.normal(ks[4], (2, 4, 16, 16), jnp.float32),    # only its (h, w) is used
    ]
    c = jax.random.normal(ks[5], (2, XIN_CHANNELS, 16, 16), jnp.float32)

    raw = init_params(k_p)

    # 1) Default module config: f_up's BN affine is constant-zero -> attention is dead work
    #    and is skipped statically (bca_module returns c).
    params, f_up_zero = prepare_params(raw)
    out_x, aux = boundary_head_forward(x_list, c, params, f_up_zero=f_up_zero)
    jax.block_until_ready((out_x, aux))
    assert f_up_zero
    assert aux["edge_feat"].shape == (2, 16, 16, EDGE_DIM)
    assert aux["edge_score"].shape == (2, 16, 16, 1)
    assert aux["attn"].shape == (2, 16, 16, XIN_CHANNELS)
    assert all(o.shape == xi.shape for o, xi in zip(out_x, x_list))
    assert bool(jnp.all(jnp.isfinite(aux["edge_score"])))
    assert bool(jnp.all(jnp.isfinite(aux["edge_feat"].astype(jnp.float32))))

    # 2) Non-zero f_up affine: exercises the BCA projection matmuls + tiled attention kernel.
    raw_nz = dict(raw)
    raw_nz["f_up_s"] = 0.1 * jnp.ones((XIN_CHANNELS,), jnp.float32)
    raw_nz["f_up_b"] = 0.01 * jnp.ones((XIN_CHANNELS,), jnp.float32)
    params_nz, f_up_zero_nz = prepare_params(raw_nz)
    out_x2, aux2 = boundary_head_forward(x_list, c, params_nz, f_up_zero=f_up_zero_nz)
    jax.block_until_ready((out_x2, aux2))
    assert not f_up_zero_nz
    assert aux2["attn"].shape == (2, 16, 16, XIN_CHANNELS)
    assert bool(jnp.all(jnp.isfinite(aux2["attn"])))

    print("KERNEL_OK")
</pallas_src>

<mosaic_0001>
module attributes {stable_mosaic.version = 11 : i64} {
  func.func @_conv3x3_kernel(%arg0: i32, %arg1: memref<1x16x16x48xbf16, #tpu.memory_space<vmem>>, %arg2: memref<9x48x16xbf16, #tpu.memory_space<vmem>>, %arg3: memref<1x16xf32, #tpu.memory_space<vmem>>, %arg4: memref<1x14x14x16xbf16, #tpu.memory_space<vmem>>) attributes {dimension_semantics = [#tpu.dimension_semantics<parallel>], iteration_bounds = array<i64: 2>, scalar_prefetch = 0 : i64, scratch_operands = 0 : i64, tpu.core_type = #tpu.core_type<tc>, window_params = [{transform_indices = @transform_0, window_bounds = array<i64: 1, 16, 16, 48>}, {pipeline_mode = #tpu.pipeline_mode<synchronous>, transform_indices = @transform_1, window_bounds = array<i64: 9, 48, 16>}, {pipeline_mode = #tpu.pipeline_mode<synchronous>, transform_indices = @transform_2, window_bounds = array<i64: 1, 16>}, {transform_indices = @transform_3, window_bounds = array<i64: 1, 14, 14, 16>}]} {
    %c0_i32 = arith.constant 0 : i32
    %c14_i32 = arith.constant 14 : i32
    %0 = arith.addi %c0_i32, %c14_i32 : i32
    %c1_i32 = arith.constant 1 : i32
    scf.for %arg5 = %c0_i32 to %0 step %c1_i32  : i32 {
      %cst = arith.constant 0.000000e+00 : f32
      %1 = vector.broadcast %cst : f32 to vector<14x16xf32>
      %c0_i32_1 = arith.constant 0 : i32
      %2 = arith.addi %arg5, %c0_i32_1 : i32
      %c0 = arith.constant 0 : index
      %3 = arith.index_cast %2 : i32 to index
      %c0_2 = arith.constant 0 : index
      %c0_3 = arith.constant 0 : index
      %4 = vector.load %arg1[%c0, %3, %c0_2, %c0_3] : memref<1x16x16x48xbf16, #tpu.memory_space<vmem>>, vector<1x1x14x48xbf16>
      %5 = vector.shape_cast %4 : vector<1x1x14x48xbf16> to vector<14x48xbf16>
      %c0_4 = arith.constant 0 : index
      %c0_5 = arith.constant 0 : index
      %c0_6 = arith.constant 0 : index
      %6 = vector.load %arg2[%c0_4, %c0_5, %c0_6] : memref<9x48x16xbf16, #tpu.memory_space<vmem>>, vector<1x48x16xbf16>
      %7 = vector.shape_cast %6 : vector<1x48x16xbf16> to vector<48x16xbf16>
      %cst_7 = arith.constant dense<0.000000e+00> : vector<14x16xf32>
      %8 = tpu.matmul %5, %7, %cst_7 {dimension_numbers = #tpu.dot_dimension_numbers<[1], [0], [0], [1], [0, 0, 1, 1], [], []>} : vector<14x48xbf16>, vector<48x16xbf16>, vector<14x16xf32> -> vector<14x16xf32>
      %9 = arith.addf %1, %8 : vector<14x16xf32>
      %c0_i32_8 = arith.constant 0 : i32
      %10 = arith.addi %arg5, %c0_i32_8 : i32
      %c0_9 = arith.constant 0 : index
      %11 = arith.index_cast %10 : i32 to index
      %c1 = arith.constant 1 : index
      %c0_10 = arith.constant 0 : index
      %12 = vector.load %arg1[%c0_9, %11, %c1, %c0_10] : memref<1x16x16x48xbf16, #tpu.memory_space<vmem>>, vector<1x1x14x48xbf16>
      %13 = vector.shape_cast %12 : vector<1x1x14x48xbf16> to vector<14x48xbf16>
      %c1_11 = arith.constant 1 : index
      %c0_12 = arith.constant 0 : index
      %c0_13 = arith.constant 0 : index
      %14 = vector.load %arg2[%c1_11, %c0_12, %c0_13] : memref<9x48x16xbf16, #tpu.memory_space<vmem>>, vector<1x48x16xbf16>
      %15 = vector.shape_cast %14 : vector<1x48x16xbf16> to vector<48x16xbf16>
      %cst_14 = arith.constant dense<0.000000e+00> : vector<14x16xf32>
      %16 = tpu.matmul %13, %15, %cst_14 {dimension_numbers = #tpu.dot_dimension_numbers<[1], [0], [0], [1], [0, 0, 1, 1], [], []>} : vector<14x48xbf16>, vector<48x16xbf16>, vector<14x16xf32> -> vector<14x16xf32>
      %17 = arith.addf %9, %16 : vector<14x16xf32>
      %c0_i32_15 = arith.constant 0 : i32
      %18 = arith.addi %arg5, %c0_i32_15 : i32
      %c0_16 = arith.constant 0 : index
      %19 = arith.index_cast %18 : i32 to index
      %c2 = arith.constant 2 : index
      %c0_17 = arith.constant 0 : index
      %20 = vector.load %arg1[%c0_16, %19, %c2, %c0_17] : memref<1x16x16x48xbf16, #tpu.memory_space<vmem>>, vector<1x1x14x48xbf16>
      %21 = vector.shape_cast %20 : vector<1x1x14x48xbf16> to vector<14x48xbf16>
      %c2_18 = arith.constant 2 : index
      %c0_19 = arith.constant 0 : index
      %c0_20 = arith.constant 0 : index
      %22 = vector.load %arg2[%c2_18, %c0_19, %c0_20] : memref<9x48x16xbf16, #tpu.memory_space<vmem>>, vector<1x48x16xbf16>
      %23 = vector.shape_cast %22 : vector<1x48x16xbf16> to vector<48x16xbf16>
      %cst_21 = arith.constant dense<0.000000e+00> : vector<14x16xf32>
      %24 = tpu.matmul %21, %23, %cst_21 {dimension_numbers = #tpu.dot_dimension_numbers<[1], [0], [0], [1], [0, 0, 1, 1], [], []>} : vector<14x48xbf16>, vector<48x16xbf16>, vector<14x16xf32> -> vector<14x16xf32>
      %25 = arith.addf %17, %24 : vector<14x16xf32>
      %c1_i32_22 = arith.constant 1 : i32
      %26 = arith.addi %arg5, %c1_i32_22 : i32
      %c0_23 = arith.constant 0 : index
      %27 = arith.index_cast %26 : i32 to index
      %c0_24 = arith.constant 0 : index
      %c0_25 = arith.constant 0 : index
      %28 = vector.load %arg1[%c0_23, %27, %c0_24, %c0_25] : memref<1x16x16x48xbf16, #tpu.memory_space<vmem>>, vector<1x1x14x48xbf16>
      %29 = vector.shape_cast %28 : vector<1x1x14x48xbf16> to vector<14x48xbf16>
      %c3 = arith.constant 3 : index
      %c0_26 = arith.constant 0 : index
      %c0_27 = arith.constant 0 : index
      %30 = vector.load %arg2[%c3, %c0_26, %c0_27] : memref<9x48x16xbf16, #tpu.memory_space<vmem>>, vector<1x48x16xbf16>
      %31 = vector.shape_cast %30 : vector<1x48x16xbf16> to vector<48x16xbf16>
      %cst_28 = arith.constant dense<0.000000e+00> : vector<14x16xf32>
      %32 = tpu.matmul %29, %31, %cst_28 {dimension_numbers = #tpu.dot_dimension_numbers<[1], [0], [0], [1], [0, 0, 1, 1], [], []>} : vector<14x48xbf16>, vector<48x16xbf16>, vector<14x16xf32> -> vector<14x16xf32>
      %33 = arith.addf %25, %32 : vector<14x16xf32>
      %c1_i32_29 = arith.constant 1 : i32
      %34 = arith.addi %arg5, %c1_i32_29 : i32
      %c0_30 = arith.constant 0 : index
      %35 = arith.index_cast %34 : i32 to index
      %c1_31 = arith.constant 1 : index
      %c0_32 = arith.constant 0 : index
      %36 = vector.load %arg1[%c0_30, %35, %c1_31, %c0_32] : memref<1x16x16x48xbf16, #tpu.memory_space<vmem>>, vector<1x1x14x48xbf16>
      %37 = vector.shape_cast %36 : vector<1x1x14x48xbf16> to vector<14x48xbf16>
      %c4 = arith.constant 4 : index
      %c0_33 = arith.constant 0 : index
      %c0_34 = arith.constant 0 : index
      %38 = vector.load %arg2[%c4, %c0_33, %c0_34] : memref<9x48x16xbf16, #tpu.memory_space<vmem>>, vector<1x48x16xbf16>
      %39 = vector.shape_cast %38 : vector<1x48x16xbf16> to vector<48x16xbf16>
      %cst_35 = arith.constant dense<0.000000e+00> : vector<14x16xf32>
      %40 = tpu.matmul %37, %39, %cst_35 {dimension_numbers = #tpu.dot_dimension_numbers<[1], [0], [0], [1], [0, 0, 1, 1], [], []>} : vector<14x48xbf16>, vector<48x16xbf16>, vector<14x16xf32> -> vector<14x16xf32>
      %41 = arith.addf %33, %40 : vector<14x16xf32>
      %c1_i32_36 = arith.constant 1 : i32
      %42 = arith.addi %arg5, %c1_i32_36 : i32
      %c0_37 = arith.constant 0 : index
      %43 = arith.index_cast %42 : i32 to index
      %c2_38 = arith.constant 2 : index
      %c0_39 = arith.constant 0 : index
      %44 = vector.load %arg1[%c0_37, %43, %c2_38, %c0_39] : memref<1x16x16x48xbf16, #tpu.memory_space<vmem>>, vector<1x1x14x48xbf16>
      %45 = vector.shape_cast %44 : vector<1x1x14x48xbf16> to vector<14x48xbf16>
      %c5 = arith.constant 5 : index
      %c0_40 = arith.constant 0 : index
      %c0_41 = arith.constant 0 : index
      %46 = vector.load %arg2[%c5, %c0_40, %c0_41] : memref<9x48x16xbf16, #tpu.memory_space<vmem>>, vector<1x48x16xbf16>
      %47 = vector.shape_cast %46 : vector<1x48x16xbf16> to vector<48x16xbf16>
      %cst_42 = arith.constant dense<0.000000e+00> : vector<14x16xf32>
      %48 = tpu.matmul %45, %47, %cst_42 {dimension_numbers = #tpu.dot_dimension_numbers<[1], [0], [0], [1], [0, 0, 1, 1], [], []>} : vector<14x48xbf16>, vector<48x16xbf16>, vector<14x16xf32> -> vector<14x16xf32>
      %49 = arith.addf %41, %48 : vector<14x16xf32>
      %c2_i32 = arith.constant 2 : i32
      %50 = arith.addi %arg5, %c2_i32 : i32
      %c0_43 = arith.constant 0 : index
      %51 = arith.index_cast %50 : i32 to index
      %c0_44 = arith.constant 0 : index
      %c0_45 = arith.constant 0 : index
      %52 = vector.load %arg1[%c0_43, %51, %c0_44, %c0_45] : memref<1x16x16x48xbf16, #tpu.memory_space<vmem>>, vector<1x1x14x48xbf16>
      %53 = vector.shape_cast %52 : vector<1x1x14x48xbf16> to vector<14x48xbf16>
      %c6 = arith.constant 6 : index
      %c0_46 = arith.constant 0 : index
      %c0_47 = arith.constant 0 : index
      %54 = vector.load %arg2[%c6, %c0_46, %c0_47] : memref<9x48x16xbf16, #tpu.memory_space<vmem>>, vector<1x48x16xbf16>
      %55 = vector.shape_cast %54 : vector<1x48x16xbf16> to vector<48x16xbf16>
      %cst_48 = arith.constant dense<0.000000e+00> : vector<14x16xf32>
      %56 = tpu.matmul %53, %55, %cst_48 {dimension_numbers = #tpu.dot_dimension_numbers<[1], [0], [0], [1], [0, 0, 1, 1], [], []>} : vector<14x48xbf16>, vector<48x16xbf16>, vector<14x16xf32> -> vector<14x16xf32>
      %57 = arith.addf %49, %56 : vector<14x16xf32>
      %c2_i32_49 = arith.constant 2 : i32
      %58 = arith.addi %arg5, %c2_i32_49 : i32
      %c0_50 = arith.constant 0 : index
      %59 = arith.index_cast %58 : i32 to index
      %c1_51 = arith.constant 1 : index
      %c0_52 = arith.constant 0 : index
      %60 = vector.load %arg1[%c0_50, %59, %c1_51, %c0_52] : memref<1x16x16x48xbf16, #tpu.memory_space<vmem>>, vector<1x1x14x48xbf16>
      %61 = vector.shape_cast %60 : vector<1x1x14x48xbf16> to vector<14x48xbf16>
      %c7 = arith.constant 7 : index
      %c0_53 = arith.constant 0 : index
      %c0_54 = arith.constant 0 : index
      %62 = vector.load %arg2[%c7, %c0_53, %c0_54] : memref<9x48x16xbf16, #tpu.memory_space<vmem>>, vector<1x48x16xbf16>
      %63 = vector.shape_cast %62 : vector<1x48x16xbf16> to vector<48x16xbf16>
      %cst_55 = arith.constant dense<0.000000e+00> : vector<14x16xf32>
      %64 = tpu.matmul %61, %63, %cst_55 {dimension_numbers = #tpu.dot_dimension_numbers<[1], [0], [0], [1], [0, 0, 1, 1], [], []>} : vector<14x48xbf16>, vector<48x16xbf16>, vector<14x16xf32> -> vector<14x16xf32>
      %65 = arith.addf %57, %64 : vector<14x16xf32>
      %c2_i32_56 = arith.constant 2 : i32
      %66 = arith.addi %arg5, %c2_i32_56 : i32
      %c0_57 = arith.constant 0 : index
      %67 = arith.index_cast %66 : i32 to index
      %c2_58 = arith.constant 2 : index
      %c0_59 = arith.constant 0 : index
      %68 = vector.load %arg1[%c0_57, %67, %c2_58, %c0_59] : memref<1x16x16x48xbf16, #tpu.memory_space<vmem>>, vector<1x1x14x48xbf16>
      %69 = vector.shape_cast %68 : vector<1x1x14x48xbf16> to vector<14x48xbf16>
      %c8 = arith.constant 8 : index
      %c0_60 = arith.constant 0 : index
      %c0_61 = arith.constant 0 : index
      %70 = vector.load %arg2[%c8, %c0_60, %c0_61] : memref<9x48x16xbf16, #tpu.memory_space<vmem>>, vector<1x48x16xbf16>
      %71 = vector.shape_cast %70 : vector<1x48x16xbf16> to vector<48x16xbf16>
      %cst_62 = arith.constant dense<0.000000e+00> : vector<14x16xf32>
      %72 = tpu.matmul %69, %71, %cst_62 {dimension_numbers = #tpu.dot_dimension_numbers<[1], [0], [0], [1], [0, 0, 1, 1], [], []>} : vector<14x48xbf16>, vector<48x16xbf16>, vector<14x16xf32> -> vector<14x16xf32>
      %73 = arith.addf %65, %72 : vector<14x16xf32>
      %c0_63 = arith.constant 0 : index
      %c0_64 = arith.constant 0 : index
      %74 = vector.load %arg3[%c0_63, %c0_64] : memref<1x16xf32, #tpu.memory_space<vmem>>, vector<1x16xf32>
      %75 = vector.broadcast %74 : vector<1x16xf32> to vector<14x16xf32>
      %76 = arith.addf %73, %75 : vector<14x16xf32>
      %cst_65 = arith.constant 0.000000e+00 : f32
      %77 = vector.broadcast %cst_65 : f32 to vector<14x16xf32>
      %78 = arith.maximumf %76, %77 : vector<14x16xf32>
      %79 = arith.truncf %78 : vector<14x16xf32> to vector<14x16xbf16>
      %c0_66 = arith.constant 0 : index
      %80 = arith.index_cast %arg5 : i32 to index
      %c0_67 = arith.constant 0 : index
      %c0_68 = arith.constant 0 : index
      %81 = vector.load %arg4[%c0_66, %80, %c0_67, %c0_68] : memref<1x14x14x16xbf16, #tpu.memory_space<vmem>>, vector<1x1x14x16xbf16>
      %82 = vector.shape_cast %81 : vector<1x1x14x16xbf16> to vector<14x16xbf16>
      %83 = vector.shape_cast %79 : vector<14x16xbf16> to vector<1x1x14x16xbf16>
      tpu.vector_store %arg4[%c0_66, %80, %c0_67, %c0_68], %83 {strides = array<i32>} : memref<1x14x14x16xbf16, #tpu.memory_space<vmem>>, vector<1x1x14x16xbf16>,
    }
    %c14_i32_0 = arith.constant 14 : i32
    return
  }
  func.func @transform_0(%arg0: i32) -> (i32, i32, i32, i32) {
    %c0_i32 = arith.constant 0 : i32
    %c0_i32_0 = arith.constant 0 : i32
    %c0_i32_1 = arith.constant 0 : i32
    %c0_i32_2 = arith.constant 0 : i32
    return %arg0, %c0_i32, %c0_i32_0, %c0_i32_1 : i32, i32, i32, i32
  }
  func.func @transform_1(%arg0: i32) -> (i32, i32, i32) {
    %c0_i32 = arith.constant 0 : i32
    %c0_i32_0 = arith.constant 0 : i32
    %c0_i32_1 = arith.constant 0 : i32
    %c0_i32_2 = arith.constant 0 : i32
    return %c0_i32, %c0_i32_0, %c0_i32_1 : i32, i32, i32
  }
  func.func @transform_2(%arg0: i32) -> (i32, i32) {
    %c0_i32 = arith.constant 0 : i32
    %c0_i32_0 = arith.constant 0 : i32
    %c0_i32_1 = arith.constant 0 : i32
    return %c0_i32, %c0_i32_0 : i32, i32
  }
  func.func @transform_3(%arg0: i32) -> (i32, i32, i32, i32) {
    %c0_i32 = arith.constant 0 : i32
    %c0_i32_0 = arith.constant 0 : i32
    %c0_i32_1 = arith.constant 0 : i32
    %c0_i32_2 = arith.constant 0 : i32
    return %arg0, %c0_i32, %c0_i32_0, %c0_i32_1 : i32, i32, i32, i32
  }
}

module attributes {stable_mosaic.version = 11 : i64} {
  func.func @_conv3x3_kernel(%arg0: i32, %arg1: memref<1x12x12x96xbf16, #tpu.memory_space<vmem>>, %arg2: memref<9x96x16xbf16, #tpu.memory_space<vmem>>, %arg3: memref<1x16xf32, #tpu.memory_space<vmem>>, %arg4: memref<1x10x10x16xbf16, #tpu.memory_space<vmem>>) attributes {dimension_semantics = [#tpu.dimension_semantics<parallel>], iteration_bounds = array<i64: 2>, scalar_prefetch = 0 : i64, scratch_operands = 0 : i64, tpu.core_type = #tpu.core_type<tc>, window_params = [{transform_indices = @transform_0, window_bounds = array<i64: 1, 12, 12, 96>}, {pipeline_mode = #tpu.pipeline_mode<synchronous>, transform_indices = @transform_1, window_bounds = array<i64: 9, 96, 16>}, {pipeline_mode = #tpu.pipeline_mode<synchronous>, transform_indices = @transform_2, window_bounds = array<i64: 1, 16>}, {transform_indices = @transform_3, window_bounds = array<i64: 1, 10, 10, 16>}]} {
    %c0_i32 = arith.constant 0 : i32
    %c10_i32 = arith.constant 10 : i32
    %0 = arith.addi %c0_i32, %c10_i32 : i32
    %c1_i32 = arith.constant 1 : i32
    scf.for %arg5 = %c0_i32 to %0 step %c1_i32  : i32 {
      %cst = arith.constant 0.000000e+00 : f32
      %1 = vector.broadcast %cst : f32 to vector<10x16xf32>
      %c0_i32_1 = arith.constant 0 : i32
      %2 = arith.addi %arg5, %c0_i32_1 : i32
      %c0 = arith.constant 0 : index
      %3 = arith.index_cast %2 : i32 to index
      %c0_2 = arith.constant 0 : index
      %c0_3 = arith.constant 0 : index
      %4 = vector.load %arg1[%c0, %3, %c0_2, %c0_3] : memref<1x12x12x96xbf16, #tpu.memory_space<vmem>>, vector<1x1x10x96xbf16>
      %5 = vector.shape_cast %4 : vector<1x1x10x96xbf16> to vector<10x96xbf16>
      %c0_4 = arith.constant 0 : index
      %c0_5 = arith.constant 0 : index
      %c0_6 = arith.constant 0 : index
      %6 = vector.load %arg2[%c0_4, %c0_5, %c0_6] : memref<9x96x16xbf16, #tpu.memory_space<vmem>>, vector<1x96x16xbf16>
      %7 = vector.shape_cast %6 : vector<1x96x16xbf16> to vector<96x16xbf16>
      %cst_7 = arith.constant dense<0.000000e+00> : vector<10x16xf32>
      %8 = tpu.matmul %5, %7, %cst_7 {dimension_numbers = #tpu.dot_dimension_numbers<[1], [0], [0], [1], [0, 0, 1, 1], [], []>} : vector<10x96xbf16>, vector<96x16xbf16>, vector<10x16xf32> -> vector<10x16xf32>
      %9 = arith.addf %1, %8 : vector<10x16xf32>
      %c0_i32_8 = arith.constant 0 : i32
      %10 = arith.addi %arg5, %c0_i32_8 : i32
      %c0_9 = arith.constant 0 : index
      %11 = arith.index_cast %10 : i32 to index
      %c1 = arith.constant 1 : index
      %c0_10 = arith.constant 0 : index
      %12 = vector.load %arg1[%c0_9, %11, %c1, %c0_10] : memref<1x12x12x96xbf16, #tpu.memory_space<vmem>>, vector<1x1x10x96xbf16>
      %13 = vector.shape_cast %12 : vector<1x1x10x96xbf16> to vector<10x96xbf16>
      %c1_11 = arith.constant 1 : index
      %c0_12 = arith.constant 0 : index
      %c0_13 = arith.constant 0 : index
      %14 = vector.load %arg2[%c1_11, %c0_12, %c0_13] : memref<9x96x16xbf16, #tpu.memory_space<vmem>>, vector<1x96x16xbf16>
      %15 = vector.shape_cast %14 : vector<1x96x16xbf16> to vector<96x16xbf16>
      %cst_14 = arith.constant dense<0.000000e+00> : vector<10x16xf32>
      %16 = tpu.matmul %13, %15, %cst_14 {dimension_numbers = #tpu.dot_dimension_numbers<[1], [0], [0], [1], [0, 0, 1, 1], [], []>} : vector<10x96xbf16>, vector<96x16xbf16>, vector<10x16xf32> -> vector<10x16xf32>
      %17 = arith.addf %9, %16 : vector<10x16xf32>
      %c0_i32_15 = arith.constant 0 : i32
      %18 = arith.addi %arg5, %c0_i32_15 : i32
      %c0_16 = arith.constant 0 : index
      %19 = arith.index_cast %18 : i32 to index
      %c2 = arith.constant 2 : index
      %c0_17 = arith.constant 0 : index
      %20 = vector.load %arg1[%c0_16, %19, %c2, %c0_17] : memref<1x12x12x96xbf16, #tpu.memory_space<vmem>>, vector<1x1x10x96xbf16>
      %21 = vector.shape_cast %20 : vector<1x1x10x96xbf16> to vector<10x96xbf16>
      %c2_18 = arith.constant 2 : index
      %c0_19 = arith.constant 0 : index
      %c0_20 = arith.constant 0 : index
      %22 = vector.load %arg2[%c2_18, %c0_19, %c0_20] : memref<9x96x16xbf16, #tpu.memory_space<vmem>>, vector<1x96x16xbf16>
      %23 = vector.shape_cast %22 : vector<1x96x16xbf16> to vector<96x16xbf16>
      %cst_21 = arith.constant dense<0.000000e+00> : vector<10x16xf32>
      %24 = tpu.matmul %21, %23, %cst_21 {dimension_numbers = #tpu.dot_dimension_numbers<[1], [0], [0], [1], [0, 0, 1, 1], [], []>} : vector<10x96xbf16>, vector<96x16xbf16>, vector<10x16xf32> -> vector<10x16xf32>
      %25 = arith.addf %17, %24 : vector<10x16xf32>
      %c1_i32_22 = arith.constant 1 : i32
      %26 = arith.addi %arg5, %c1_i32_22 : i32
      %c0_23 = arith.constant 0 : index
      %27 = arith.index_cast %26 : i32 to index
      %c0_24 = arith.constant 0 : index
      %c0_25 = arith.constant 0 : index
      %28 = vector.load %arg1[%c0_23, %27, %c0_24, %c0_25] : memref<1x12x12x96xbf16, #tpu.memory_space<vmem>>, vector<1x1x10x96xbf16>
      %29 = vector.shape_cast %28 : vector<1x1x10x96xbf16> to vector<10x96xbf16>
      %c3 = arith.constant 3 : index
      %c0_26 = arith.constant 0 : index
      %c0_27 = arith.constant 0 : index
      %30 = vector.load %arg2[%c3, %c0_26, %c0_27] : memref<9x96x16xbf16, #tpu.memory_space<vmem>>, vector<1x96x16xbf16>
      %31 = vector.shape_cast %30 : vector<1x96x16xbf16> to vector<96x16xbf16>
      %cst_28 = arith.constant dense<0.000000e+00> : vector<10x16xf32>
      %32 = tpu.matmul %29, %31, %cst_28 {dimension_numbers = #tpu.dot_dimension_numbers<[1], [0], [0], [1], [0, 0, 1, 1], [], []>} : vector<10x96xbf16>, vector<96x16xbf16>, vector<10x16xf32> -> vector<10x16xf32>
      %33 = arith.addf %25, %32 : vector<10x16xf32>
      %c1_i32_29 = arith.constant 1 : i32
      %34 = arith.addi %arg5, %c1_i32_29 : i32
      %c0_30 = arith.constant 0 : index
      %35 = arith.index_cast %34 : i32 to index
      %c1_31 = arith.constant 1 : index
      %c0_32 = arith.constant 0 : index
      %36 = vector.load %arg1[%c0_30, %35, %c1_31, %c0_32] : memref<1x12x12x96xbf16, #tpu.memory_space<vmem>>, vector<1x1x10x96xbf16>
      %37 = vector.shape_cast %36 : vector<1x1x10x96xbf16> to vector<10x96xbf16>
      %c4 = arith.constant 4 : index
      %c0_33 = arith.constant 0 : index
      %c0_34 = arith.constant 0 : index
      %38 = vector.load %arg2[%c4, %c0_33, %c0_34] : memref<9x96x16xbf16, #tpu.memory_space<vmem>>, vector<1x96x16xbf16>
      %39 = vector.shape_cast %38 : vector<1x96x16xbf16> to vector<96x16xbf16>
      %cst_35 = arith.constant dense<0.000000e+00> : vector<10x16xf32>
      %40 = tpu.matmul %37, %39, %cst_35 {dimension_numbers = #tpu.dot_dimension_numbers<[1], [0], [0], [1], [0, 0, 1, 1], [], []>} : vector<10x96xbf16>, vector<96x16xbf16>, vector<10x16xf32> -> vector<10x16xf32>
      %41 = arith.addf %33, %40 : vector<10x16xf32>
      %c1_i32_36 = arith.constant 1 : i32
      %42 = arith.addi %arg5, %c1_i32_36 : i32
      %c0_37 = arith.constant 0 : index
      %43 = arith.index_cast %42 : i32 to index
      %c2_38 = arith.constant 2 : index
      %c0_39 = arith.constant 0 : index
      %44 = vector.load %arg1[%c0_37, %43, %c2_38, %c0_39] : memref<1x12x12x96xbf16, #tpu.memory_space<vmem>>, vector<1x1x10x96xbf16>
      %45 = vector.shape_cast %44 : vector<1x1x10x96xbf16> to vector<10x96xbf16>
      %c5 = arith.constant 5 : index
      %c0_40 = arith.constant 0 : index
      %c0_41 = arith.constant 0 : index
      %46 = vector.load %arg2[%c5, %c0_40, %c0_41] : memref<9x96x16xbf16, #tpu.memory_space<vmem>>, vector<1x96x16xbf16>
      %47 = vector.shape_cast %46 : vector<1x96x16xbf16> to vector<96x16xbf16>
      %cst_42 = arith.constant dense<0.000000e+00> : vector<10x16xf32>
      %48 = tpu.matmul %45, %47, %cst_42 {dimension_numbers = #tpu.dot_dimension_numbers<[1], [0], [0], [1], [0, 0, 1, 1], [], []>} : vector<10x96xbf16>, vector<96x16xbf16>, vector<10x16xf32> -> vector<10x16xf32>
      %49 = arith.addf %41, %48 : vector<10x16xf32>
      %c2_i32 = arith.constant 2 : i32
      %50 = arith.addi %arg5, %c2_i32 : i32
      %c0_43 = arith.constant 0 : index
      %51 = arith.index_cast %50 : i32 to index
      %c0_44 = arith.constant 0 : index
      %c0_45 = arith.constant 0 : index
      %52 = vector.load %arg1[%c0_43, %51, %c0_44, %c0_45] : memref<1x12x12x96xbf16, #tpu.memory_space<vmem>>, vector<1x1x10x96xbf16>
      %53 = vector.shape_cast %52 : vector<1x1x10x96xbf16> to vector<10x96xbf16>
      %c6 = arith.constant 6 : index
      %c0_46 = arith.constant 0 : index
      %c0_47 = arith.constant 0 : index
      %54 = vector.load %arg2[%c6, %c0_46, %c0_47] : memref<9x96x16xbf16, #tpu.memory_space<vmem>>, vector<1x96x16xbf16>
      %55 = vector.shape_cast %54 : vector<1x96x16xbf16> to vector<96x16xbf16>
      %cst_48 = arith.constant dense<0.000000e+00> : vector<10x16xf32>
      %56 = tpu.matmul %53, %55, %cst_48 {dimension_numbers = #tpu.dot_dimension_numbers<[1], [0], [0], [1], [0, 0, 1, 1], [], []>} : vector<10x96xbf16>, vector<96x16xbf16>, vector<10x16xf32> -> vector<10x16xf32>
      %57 = arith.addf %49, %56 : vector<10x16xf32>
      %c2_i32_49 = arith.constant 2 : i32
      %58 = arith.addi %arg5, %c2_i32_49 : i32
      %c0_50 = arith.constant 0 : index
      %59 = arith.index_cast %58 : i32 to index
      %c1_51 = arith.constant 1 : index
      %c0_52 = arith.constant 0 : index
      %60 = vector.load %arg1[%c0_50, %59, %c1_51, %c0_52] : memref<1x12x12x96xbf16, #tpu.memory_space<vmem>>, vector<1x1x10x96xbf16>
      %61 = vector.shape_cast %60 : vector<1x1x10x96xbf16> to vector<10x96xbf16>
      %c7 = arith.constant 7 : index
      %c0_53 = arith.constant 0 : index
      %c0_54 = arith.constant 0 : index
      %62 = vector.load %arg2[%c7, %c0_53, %c0_54] : memref<9x96x16xbf16, #tpu.memory_space<vmem>>, vector<1x96x16xbf16>
      %63 = vector.shape_cast %62 : vector<1x96x16xbf16> to vector<96x16xbf16>
      %cst_55 = arith.constant dense<0.000000e+00> : vector<10x16xf32>
      %64 = tpu.matmul %61, %63, %cst_55 {dimension_numbers = #tpu.dot_dimension_numbers<[1], [0], [0], [1], [0, 0, 1, 1], [], []>} : vector<10x96xbf16>, vector<96x16xbf16>, vector<10x16xf32> -> vector<10x16xf32>
      %65 = arith.addf %57, %64 : vector<10x16xf32>
      %c2_i32_56 = arith.constant 2 : i32
      %66 = arith.addi %arg5, %c2_i32_56 : i32
      %c0_57 = arith.constant 0 : index
      %67 = arith.index_cast %66 : i32 to index
      %c2_58 = arith.constant 2 : index
      %c0_59 = arith.constant 0 : index
      %68 = vector.load %arg1[%c0_57, %67, %c2_58, %c0_59] : memref<1x12x12x96xbf16, #tpu.memory_space<vmem>>, vector<1x1x10x96xbf16>
      %69 = vector.shape_cast %68 : vector<1x1x10x96xbf16> to vector<10x96xbf16>
      %c8 = arith.constant 8 : index
      %c0_60 = arith.constant 0 : index
      %c0_61 = arith.constant 0 : index
      %70 = vector.load %arg2[%c8, %c0_60, %c0_61] : memref<9x96x16xbf16, #tpu.memory_space<vmem>>, vector<1x96x16xbf16>
      %71 = vector.shape_cast %70 : vector<1x96x16xbf16> to vector<96x16xbf16>
      %cst_62 = arith.constant dense<0.000000e+00> : vector<10x16xf32>
      %72 = tpu.matmul %69, %71, %cst_62 {dimension_numbers = #tpu.dot_dimension_numbers<[1], [0], [0], [1], [0, 0, 1, 1], [], []>} : vector<10x96xbf16>, vector<96x16xbf16>, vector<10x16xf32> -> vector<10x16xf32>
      %73 = arith.addf %65, %72 : vector<10x16xf32>
      %c0_63 = arith.constant 0 : index
      %c0_64 = arith.constant 0 : index
      %74 = vector.load %arg3[%c0_63, %c0_64] : memref<1x16xf32, #tpu.memory_space<vmem>>, vector<1x16xf32>
      %75 = vector.broadcast %74 : vector<1x16xf32> to vector<10x16xf32>
      %76 = arith.addf %73, %75 : vector<10x16xf32>
      %cst_65 = arith.constant 0.000000e+00 : f32
      %77 = vector.broadcast %cst_65 : f32 to vector<10x16xf32>
      %78 = arith.maximumf %76, %77 : vector<10x16xf32>
      %79 = arith.truncf %78 : vector<10x16xf32> to vector<10x16xbf16>
      %c0_66 = arith.constant 0 : index
      %80 = arith.index_cast %arg5 : i32 to index
      %c0_67 = arith.constant 0 : index
      %c0_68 = arith.constant 0 : index
      %81 = vector.load %arg4[%c0_66, %80, %c0_67, %c0_68] : memref<1x10x10x16xbf16, #tpu.memory_space<vmem>>, vector<1x1x10x16xbf16>
      %82 = vector.shape_cast %81 : vector<1x1x10x16xbf16> to vector<10x16xbf16>
      %83 = vector.shape_cast %79 : vector<10x16xbf16> to vector<1x1x10x16xbf16>
      tpu.vector_store %arg4[%c0_66, %80, %c0_67, %c0_68], %83 {strides = array<i32>} : memref<1x10x10x16xbf16, #tpu.memory_space<vmem>>, vector<1x1x10x16xbf16>,
    }
    %c10_i32_0 = arith.constant 10 : i32
    return
  }
  func.func @transform_0(%arg0: i32) -> (i32, i32, i32, i32) {
    %c0_i32 = arith.constant 0 : i32
    %c0_i32_0 = arith.constant 0 : i32
    %c0_i32_1 = arith.constant 0 : i32
    %c0_i32_2 = arith.constant 0 : i32
    return %arg0, %c0_i32, %c0_i32_0, %c0_i32_1 : i32, i32, i32, i32
  }
  func.func @transform_1(%arg0: i32) -> (i32, i32, i32) {
    %c0_i32 = arith.constant 0 : i32
    %c0_i32_0 = arith.constant 0 : i32
    %c0_i32_1 = arith.constant 0 : i32
    %c0_i32_2 = arith.constant 0 : i32
    return %c0_i32, %c0_i32_0, %c0_i32_1 : i32, i32, i32
  }
  func.func @transform_2(%arg0: i32) -> (i32, i32) {
    %c0_i32 = arith.constant 0 : i32
    %c0_i32_0 = arith.constant 0 : i32
    %c0_i32_1 = arith.constant 0 : i32
    return %c0_i32, %c0_i32_0 : i32, i32
  }
  func.func @transform_3(%arg0: i32) -> (i32, i32, i32, i32) {
    %c0_i32 = arith.constant 0 : i32
    %c0_i32_0 = arith.constant 0 : i32
    %c0_i32_1 = arith.constant 0 : i32
    %c0_i32_2 = arith.constant 0 : i32
    return %arg0, %c0_i32, %c0_i32_0, %c0_i32_1 : i32, i32, i32, i32
  }
}

module attributes {stable_mosaic.version = 11 : i64} {
  func.func @_conv3x3_kernel(%arg0: i32, %arg1: memref<1x10x10x192xbf16, #tpu.memory_space<vmem>>, %arg2: memref<9x192x16xbf16, #tpu.memory_space<vmem>>, %arg3: memref<1x16xf32, #tpu.memory_space<vmem>>, %arg4: memref<1x8x8x16xbf16, #tpu.memory_space<vmem>>) attributes {dimension_semantics = [#tpu.dimension_semantics<parallel>], iteration_bounds = array<i64: 2>, scalar_prefetch = 0 : i64, scratch_operands = 0 : i64, tpu.core_type = #tpu.core_type<tc>, window_params = [{transform_indices = @transform_0, window_bounds = array<i64: 1, 10, 10, 192>}, {pipeline_mode = #tpu.pipeline_mode<synchronous>, transform_indices = @transform_1, window_bounds = array<i64: 9, 192, 16>}, {pipeline_mode = #tpu.pipeline_mode<synchronous>, transform_indices = @transform_2, window_bounds = array<i64: 1, 16>}, {transform_indices = @transform_3, window_bounds = array<i64: 1, 8, 8, 16>}]} {
    %c0_i32 = arith.constant 0 : i32
    %c8_i32 = arith.constant 8 : i32
    %0 = arith.addi %c0_i32, %c8_i32 : i32
    %c1_i32 = arith.constant 1 : i32
    scf.for %arg5 = %c0_i32 to %0 step %c1_i32  : i32 {
      %cst = arith.constant 0.000000e+00 : f32
      %1 = vector.broadcast %cst : f32 to vector<8x16xf32>
      %c0_i32_1 = arith.constant 0 : i32
      %2 = arith.addi %arg5, %c0_i32_1 : i32
      %c0 = arith.constant 0 : index
      %3 = arith.index_cast %2 : i32 to index
      %c0_2 = arith.constant 0 : index
      %c0_3 = arith.constant 0 : index
      %4 = vector.load %arg1[%c0, %3, %c0_2, %c0_3] : memref<1x10x10x192xbf16, #tpu.memory_space<vmem>>, vector<1x1x8x192xbf16>
      %5 = vector.shape_cast %4 : vector<1x1x8x192xbf16> to vector<8x192xbf16>
      %c0_4 = arith.constant 0 : index
      %c0_5 = arith.constant 0 : index
      %c0_6 = arith.constant 0 : index
      %6 = vector.load %arg2[%c0_4, %c0_5, %c0_6] : memref<9x192x16xbf16, #tpu.memory_space<vmem>>, vector<1x192x16xbf16>
      %7 = vector.shape_cast %6 : vector<1x192x16xbf16> to vector<192x16xbf16>
      %cst_7 = arith.constant dense<0.000000e+00> : vector<8x16xf32>
      %8 = tpu.matmul %5, %7, %cst_7 {dimension_numbers = #tpu.dot_dimension_numbers<[1], [0], [0], [1], [0, 0, 1, 1], [], []>} : vector<8x192xbf16>, vector<192x16xbf16>, vector<8x16xf32> -> vector<8x16xf32>
      %9 = arith.addf %1, %8 : vector<8x16xf32>
      %c0_i32_8 = arith.constant 0 : i32
      %10 = arith.addi %arg5, %c0_i32_8 : i32
      %c0_9 = arith.constant 0 : index
      %11 = arith.index_cast %10 : i32 to index
      %c1 = arith.constant 1 : index
      %c0_10 = arith.constant 0 : index
      %12 = vector.load %arg1[%c0_9, %11, %c1, %c0_10] : memref<1x10x10x192xbf16, #tpu.memory_space<vmem>>, vector<1x1x8x192xbf16>
      %13 = vector.shape_cast %12 : vector<1x1x8x192xbf16> to vector<8x192xbf16>
      %c1_11 = arith.constant 1 : index
      %c0_12 = arith.constant 0 : index
      %c0_13 = arith.constant 0 : index
      %14 = vector.load %arg2[%c1_11, %c0_12, %c0_13] : memref<9x192x16xbf16, #tpu.memory_space<vmem>>, vector<1x192x16xbf16>
      %15 = vector.shape_cast %14 : vector<1x192x16xbf16> to vector<192x16xbf16>
      %cst_14 = arith.constant dense<0.000000e+00> : vector<8x16xf32>
      %16 = tpu.matmul %13, %15, %cst_14 {dimension_numbers = #tpu.dot_dimension_numbers<[1], [0], [0], [1], [0, 0, 1, 1], [], []>} : vector<8x192xbf16>, vector<192x16xbf16>, vector<8x16xf32> -> vector<8x16xf32>
      %17 = arith.addf %9, %16 : vector<8x16xf32>
      %c0_i32_15 = arith.constant 0 : i32
      %18 = arith.addi %arg5, %c0_i32_15 : i32
      %c0_16 = arith.constant 0 : index
      %19 = arith.index_cast %18 : i32 to index
      %c2 = arith.constant 2 : index
      %c0_17 = arith.constant 0 : index
      %20 = vector.load %arg1[%c0_16, %19, %c2, %c0_17] : memref<1x10x10x192xbf16, #tpu.memory_space<vmem>>, vector<1x1x8x192xbf16>
      %21 = vector.shape_cast %20 : vector<1x1x8x192xbf16> to vector<8x192xbf16>
      %c2_18 = arith.constant 2 : index
      %c0_19 = arith.constant 0 : index
      %c0_20 = arith.constant 0 : index
      %22 = vector.load %arg2[%c2_18, %c0_19, %c0_20] : memref<9x192x16xbf16, #tpu.memory_space<vmem>>, vector<1x192x16xbf16>
      %23 = vector.shape_cast %22 : vector<1x192x16xbf16> to vector<192x16xbf16>
      %cst_21 = arith.constant dense<0.000000e+00> : vector<8x16xf32>
      %24 = tpu.matmul %21, %23, %cst_21 {dimension_numbers = #tpu.dot_dimension_numbers<[1], [0], [0], [1], [0, 0, 1, 1], [], []>} : vector<8x192xbf16>, vector<192x16xbf16>, vector<8x16xf32> -> vector<8x16xf32>
      %25 = arith.addf %17, %24 : vector<8x16xf32>
      %c1_i32_22 = arith.constant 1 : i32
      %26 = arith.addi %arg5, %c1_i32_22 : i32
      %c0_23 = arith.constant 0 : index
      %27 = arith.index_cast %26 : i32 to index
      %c0_24 = arith.constant 0 : index
      %c0_25 = arith.constant 0 : index
      %28 = vector.load %arg1[%c0_23, %27, %c0_24, %c0_25] : memref<1x10x10x192xbf16, #tpu.memory_space<vmem>>, vector<1x1x8x192xbf16>
      %29 = vector.shape_cast %28 : vector<1x1x8x192xbf16> to vector<8x192xbf16>
      %c3 = arith.constant 3 : index
      %c0_26 = arith.constant 0 : index
      %c0_27 = arith.constant 0 : index
      %30 = vector.load %arg2[%c3, %c0_26, %c0_27] : memref<9x192x16xbf16, #tpu.memory_space<vmem>>, vector<1x192x16xbf16>
      %31 = vector.shape_cast %30 : vector<1x192x16xbf16> to vector<192x16xbf16>
      %cst_28 = arith.constant dense<0.000000e+00> : vector<8x16xf32>
      %32 = tpu.matmul %29, %31, %cst_28 {dimension_numbers = #tpu.dot_dimension_numbers<[1], [0], [0], [1], [0, 0, 1, 1], [], []>} : vector<8x192xbf16>, vector<192x16xbf16>, vector<8x16xf32> -> vector<8x16xf32>
      %33 = arith.addf %25, %32 : vector<8x16xf32>
      %c1_i32_29 = arith.constant 1 : i32
      %34 = arith.addi %arg5, %c1_i32_29 : i32
      %c0_30 = arith.constant 0 : index
      %35 = arith.index_cast %34 : i32 to index
      %c1_31 = arith.constant 1 : index
      %c0_32 = arith.constant 0 : index
      %36 = vector.load %arg1[%c0_30, %35, %c1_31, %c0_32] : memref<1x10x10x192xbf16, #tpu.memory_space<vmem>>, vector<1x1x8x192xbf16>
      %37 = vector.shape_cast %36 : vector<1x1x8x192xbf16> to vector<8x192xbf16>
      %c4 = arith.constant 4 : index
      %c0_33 = arith.constant 0 : index
      %c0_34 = arith.constant 0 : index
      %38 = vector.load %arg2[%c4, %c0_33, %c0_34] : memref<9x192x16xbf16, #tpu.memory_space<vmem>>, vector<1x192x16xbf16>
      %39 = vector.shape_cast %38 : vector<1x192x16xbf16> to vector<192x16xbf16>
      %cst_35 = arith.constant dense<0.000000e+00> : vector<8x16xf32>
      %40 = tpu.matmul %37, %39, %cst_35 {dimension_numbers = #tpu.dot_dimension_numbers<[1], [0], [0], [1], [0, 0, 1, 1], [], []>} : vector<8x192xbf16>, vector<192x16xbf16>, vector<8x16xf32> -> vector<8x16xf32>
      %41 = arith.addf %33, %40 : vector<8x16xf32>
      %c1_i32_36 = arith.constant 1 : i32
      %42 = arith.addi %arg5, %c1_i32_36 : i32
      %c0_37 = arith.constant 0 : index
      %43 = arith.index_cast %42 : i32 to index
      %c2_38 = arith.constant 2 : index
      %c0_39 = arith.constant 0 : index
      %44 = vector.load %arg1[%c0_37, %43, %c2_38, %c0_39] : memref<1x10x10x192xbf16, #tpu.memory_space<vmem>>, vector<1x1x8x192xbf16>
      %45 = vector.shape_cast %44 : vector<1x1x8x192xbf16> to vector<8x192xbf16>
      %c5 = arith.constant 5 : index
      %c0_40 = arith.constant 0 : index
      %c0_41 = arith.constant 0 : index
      %46 = vector.load %arg2[%c5, %c0_40, %c0_41] : memref<9x192x16xbf16, #tpu.memory_space<vmem>>, vector<1x192x16xbf16>
      %47 = vector.shape_cast %46 : vector<1x192x16xbf16> to vector<192x16xbf16>
      %cst_42 = arith.constant dense<0.000000e+00> : vector<8x16xf32>
      %48 = tpu.matmul %45, %47, %cst_42 {dimension_numbers = #tpu.dot_dimension_numbers<[1], [0], [0], [1], [0, 0, 1, 1], [], []>} : vector<8x192xbf16>, vector<192x16xbf16>, vector<8x16xf32> -> vector<8x16xf32>
      %49 = arith.addf %41, %48 : vector<8x16xf32>
      %c2_i32 = arith.constant 2 : i32
      %50 = arith.addi %arg5, %c2_i32 : i32
      %c0_43 = arith.constant 0 : index
      %51 = arith.index_cast %50 : i32 to index
      %c0_44 = arith.constant 0 : index
      %c0_45 = arith.constant 0 : index
      %52 = vector.load %arg1[%c0_43, %51, %c0_44, %c0_45] : memref<1x10x10x192xbf16, #tpu.memory_space<vmem>>, vector<1x1x8x192xbf16>
      %53 = vector.shape_cast %52 : vector<1x1x8x192xbf16> to vector<8x192xbf16>
      %c6 = arith.constant 6 : index
      %c0_46 = arith.constant 0 : index
      %c0_47 = arith.constant 0 : index
      %54 = vector.load %arg2[%c6, %c0_46, %c0_47] : memref<9x192x16xbf16, #tpu.memory_space<vmem>>, vector<1x192x16xbf16>
      %55 = vector.shape_cast %54 : vector<1x192x16xbf16> to vector<192x16xbf16>
      %cst_48 = arith.constant dense<0.000000e+00> : vector<8x16xf32>
      %56 = tpu.matmul %53, %55, %cst_48 {dimension_numbers = #tpu.dot_dimension_numbers<[1], [0], [0], [1], [0, 0, 1, 1], [], []>} : vector<8x192xbf16>, vector<192x16xbf16>, vector<8x16xf32> -> vector<8x16xf32>
      %57 = arith.addf %49, %56 : vector<8x16xf32>
      %c2_i32_49 = arith.constant 2 : i32
      %58 = arith.addi %arg5, %c2_i32_49 : i32
      %c0_50 = arith.constant 0 : index
      %59 = arith.index_cast %58 : i32 to index
      %c1_51 = arith.constant 1 : index
      %c0_52 = arith.constant 0 : index
      %60 = vector.load %arg1[%c0_50, %59, %c1_51, %c0_52] : memref<1x10x10x192xbf16, #tpu.memory_space<vmem>>, vector<1x1x8x192xbf16>
      %61 = vector.shape_cast %60 : vector<1x1x8x192xbf16> to vector<8x192xbf16>
      %c7 = arith.constant 7 : index
      %c0_53 = arith.constant 0 : index
      %c0_54 = arith.constant 0 : index
      %62 = vector.load %arg2[%c7, %c0_53, %c0_54] : memref<9x192x16xbf16, #tpu.memory_space<vmem>>, vector<1x192x16xbf16>
      %63 = vector.shape_cast %62 : vector<1x192x16xbf16> to vector<192x16xbf16>
      %cst_55 = arith.constant dense<0.000000e+00> : vector<8x16xf32>
      %64 = tpu.matmul %61, %63, %cst_55 {dimension_numbers = #tpu.dot_dimension_numbers<[1], [0], [0], [1], [0, 0, 1, 1], [], []>} : vector<8x192xbf16>, vector<192x16xbf16>, vector<8x16xf32> -> vector<8x16xf32>
      %65 = arith.addf %57, %64 : vector<8x16xf32>
      %c2_i32_56 = arith.constant 2 : i32
      %66 = arith.addi %arg5, %c2_i32_56 : i32
      %c0_57 = arith.constant 0 : index
      %67 = arith.index_cast %66 : i32 to index
      %c2_58 = arith.constant 2 : index
      %c0_59 = arith.constant 0 : index
      %68 = vector.load %arg1[%c0_57, %67, %c2_58, %c0_59] : memref<1x10x10x192xbf16, #tpu.memory_space<vmem>>, vector<1x1x8x192xbf16>
      %69 = vector.shape_cast %68 : vector<1x1x8x192xbf16> to vector<8x192xbf16>
      %c8 = arith.constant 8 : index
      %c0_60 = arith.constant 0 : index
      %c0_61 = arith.constant 0 : index
      %70 = vector.load %arg2[%c8, %c0_60, %c0_61] : memref<9x192x16xbf16, #tpu.memory_space<vmem>>, vector<1x192x16xbf16>
      %71 = vector.shape_cast %70 : vector<1x192x16xbf16> to vector<192x16xbf16>
      %cst_62 = arith.constant dense<0.000000e+00> : vector<8x16xf32>
      %72 = tpu.matmul %69, %71, %cst_62 {dimension_numbers = #tpu.dot_dimension_numbers<[1], [0], [0], [1], [0, 0, 1, 1], [], []>} : vector<8x192xbf16>, vector<192x16xbf16>, vector<8x16xf32> -> vector<8x16xf32>
      %73 = arith.addf %65, %72 : vector<8x16xf32>
      %c0_63 = arith.constant 0 : index
      %c0_64 = arith.constant 0 : index
      %74 = vector.load %arg3[%c0_63, %c0_64] : memref<1x16xf32, #tpu.memory_space<vmem>>, vector<1x16xf32>
      %75 = vector.broadcast %74 : vector<1x16xf32> to vector<8x16xf32>
      %76 = arith.addf %73, %75 : vector<8x16xf32>
      %cst_65 = arith.constant 0.000000e+00 : f32
      %77 = vector.broadcast %cst_65 : f32 to vector<8x16xf32>
      %78 = arith.maximumf %76, %77 : vector<8x16xf32>
      %79 = arith.truncf %78 : vector<8x16xf32> to vector<8x16xbf16>
      %c0_66 = arith.constant 0 : index
      %80 = arith.index_cast %arg5 : i32 to index
      %c0_67 = arith.constant 0 : index
      %c0_68 = arith.constant 0 : index
      %81 = vector.load %arg4[%c0_66, %80, %c0_67, %c0_68] : memref<1x8x8x16xbf16, #tpu.memory_space<vmem>>, vector<1x1x8x16xbf16>
      %82 = vector.shape_cast %81 : vector<1x1x8x16xbf16> to vector<8x16xbf16>
      %83 = vector.shape_cast %79 : vector<8x16xbf16> to vector<1x1x8x16xbf16>
      tpu.vector_store %arg4[%c0_66, %80, %c0_67, %c0_68], %83 {strides = array<i32>} : memref<1x8x8x16xbf16, #tpu.memory_space<vmem>>, vector<1x1x8x16xbf16>,
    }
    %c8_i32_0 = arith.constant 8 : i32
    return
  }
  func.func @transform_0(%arg0: i32) -> (i32, i32, i32, i32) {
    %c0_i32 = arith.constant 0 : i32
    %c0_i32_0 = arith.constant 0 : i32
    %c0_i32_1 = arith.constant 0 : i32
    %c0_i32_2 = arith.constant 0 : i32
    return %arg0, %c0_i32, %c0_i32_0, %c0_i32_1 : i32, i32, i32, i32
  }
  func.func @transform_1(%arg0: i32) -> (i32, i32, i32) {
    %c0_i32 = arith.constant 0 : i32
    %c0_i32_0 = arith.constant 0 : i32
    %c0_i32_1 = arith.constant 0 : i32
    %c0_i32_2 = arith.constant 0 : i32
    return %c0_i32, %c0_i32_0, %c0_i32_1 : i32, i32, i32
  }
  func.func @transform_2(%arg0: i32) -> (i32, i32) {
    %c0_i32 = arith.constant 0 : i32
    %c0_i32_0 = arith.constant 0 : i32
    %c0_i32_1 = arith.constant 0 : i32
    return %c0_i32, %c0_i32_0 : i32, i32
  }
  func.func @transform_3(%arg0: i32) -> (i32, i32, i32, i32) {
    %c0_i32 = arith.constant 0 : i32
    %c0_i32_0 = arith.constant 0 : i32
    %c0_i32_1 = arith.constant 0 : i32
    %c0_i32_2 = arith.constant 0 : i32
    return %arg0, %c0_i32, %c0_i32_0, %c0_i32_1 : i32, i32, i32, i32
  }
}

module attributes {stable_mosaic.version = 11 : i64} {
  func.func @_conv3x3_kernel(%arg0: i32, %arg1: memref<1x8x8x192xbf16, #tpu.memory_space<vmem>>, %arg2: memref<9x192x16xbf16, #tpu.memory_space<vmem>>, %arg3: memref<1x16xf32, #tpu.memory_space<vmem>>, %arg4: memref<1x6x6x16xbf16, #tpu.memory_space<vmem>>) attributes {dimension_semantics = [#tpu.dimension_semantics<parallel>], iteration_bounds = array<i64: 2>, scalar_prefetch = 0 : i64, scratch_operands = 0 : i64, tpu.core_type = #tpu.core_type<tc>, window_params = [{transform_indices = @transform_0, window_bounds = array<i64: 1, 8, 8, 192>}, {pipeline_mode = #tpu.pipeline_mode<synchronous>, transform_indices = @transform_1, window_bounds = array<i64: 9, 192, 16>}, {pipeline_mode = #tpu.pipeline_mode<synchronous>, transform_indices = @transform_2, window_bounds = array<i64: 1, 16>}, {transform_indices = @transform_3, window_bounds = array<i64: 1, 6, 6, 16>}]} {
    %c0_i32 = arith.constant 0 : i32
    %c6_i32 = arith.constant 6 : i32
    %0 = arith.addi %c0_i32, %c6_i32 : i32
    %c1_i32 = arith.constant 1 : i32
    scf.for %arg5 = %c0_i32 to %0 step %c1_i32  : i32 {
      %cst = arith.constant 0.000000e+00 : f32
      %1 = vector.broadcast %cst : f32 to vector<6x16xf32>
      %c0_i32_1 = arith.constant 0 : i32
      %2 = arith.addi %arg5, %c0_i32_1 : i32
      %c0 = arith.constant 0 : index
      %3 = arith.index_cast %2 : i32 to index
      %c0_2 = arith.constant 0 : index
      %c0_3 = arith.constant 0 : index
      %4 = vector.load %arg1[%c0, %3, %c0_2, %c0_3] : memref<1x8x8x192xbf16, #tpu.memory_space<vmem>>, vector<1x1x6x192xbf16>
      %5 = vector.shape_cast %4 : vector<1x1x6x192xbf16> to vector<6x192xbf16>
      %c0_4 = arith.constant 0 : index
      %c0_5 = arith.constant 0 : index
      %c0_6 = arith.constant 0 : index
      %6 = vector.load %arg2[%c0_4, %c0_5, %c0_6] : memref<9x192x16xbf16, #tpu.memory_space<vmem>>, vector<1x192x16xbf16>
      %7 = vector.shape_cast %6 : vector<1x192x16xbf16> to vector<192x16xbf16>
      %cst_7 = arith.constant dense<0.000000e+00> : vector<6x16xf32>
      %8 = tpu.matmul %5, %7, %cst_7 {dimension_numbers = #tpu.dot_dimension_numbers<[1], [0], [0], [1], [0, 0, 1, 1], [], []>} : vector<6x192xbf16>, vector<192x16xbf16>, vector<6x16xf32> -> vector<6x16xf32>
      %9 = arith.addf %1, %8 : vector<6x16xf32>
      %c0_i32_8 = arith.constant 0 : i32
      %10 = arith.addi %arg5, %c0_i32_8 : i32
      %c0_9 = arith.constant 0 : index
      %11 = arith.index_cast %10 : i32 to index
      %c1 = arith.constant 1 : index
      %c0_10 = arith.constant 0 : index
      %12 = vector.load %arg1[%c0_9, %11, %c1, %c0_10] : memref<1x8x8x192xbf16, #tpu.memory_space<vmem>>, vector<1x1x6x192xbf16>
      %13 = vector.shape_cast %12 : vector<1x1x6x192xbf16> to vector<6x192xbf16>
      %c1_11 = arith.constant 1 : index
      %c0_12 = arith.constant 0 : index
      %c0_13 = arith.constant 0 : index
      %14 = vector.load %arg2[%c1_11, %c0_12, %c0_13] : memref<9x192x16xbf16, #tpu.memory_space<vmem>>, vector<1x192x16xbf16>
      %15 = vector.shape_cast %14 : vector<1x192x16xbf16> to vector<192x16xbf16>
      %cst_14 = arith.constant dense<0.000000e+00> : vector<6x16xf32>
      %16 = tpu.matmul %13, %15, %cst_14 {dimension_numbers = #tpu.dot_dimension_numbers<[1], [0], [0], [1], [0, 0, 1, 1], [], []>} : vector<6x192xbf16>, vector<192x16xbf16>, vector<6x16xf32> -> vector<6x16xf32>
      %17 = arith.addf %9, %16 : vector<6x16xf32>
      %c0_i32_15 = arith.constant 0 : i32
      %18 = arith.addi %arg5, %c0_i32_15 : i32
      %c0_16 = arith.constant 0 : index
      %19 = arith.index_cast %18 : i32 to index
      %c2 = arith.constant 2 : index
      %c0_17 = arith.constant 0 : index
      %20 = vector.load %arg1[%c0_16, %19, %c2, %c0_17] : memref<1x8x8x192xbf16, #tpu.memory_space<vmem>>, vector<1x1x6x192xbf16>
      %21 = vector.shape_cast %20 : vector<1x1x6x192xbf16> to vector<6x192xbf16>
      %c2_18 = arith.constant 2 : index
      %c0_19 = arith.constant 0 : index
      %c0_20 = arith.constant 0 : index
      %22 = vector.load %arg2[%c2_18, %c0_19, %c0_20] : memref<9x192x16xbf16, #tpu.memory_space<vmem>>, vector<1x192x16xbf16>
      %23 = vector.shape_cast %22 : vector<1x192x16xbf16> to vector<192x16xbf16>
      %cst_21 = arith.constant dense<0.000000e+00> : vector<6x16xf32>
      %24 = tpu.matmul %21, %23, %cst_21 {dimension_numbers = #tpu.dot_dimension_numbers<[1], [0], [0], [1], [0, 0, 1, 1], [], []>} : vector<6x192xbf16>, vector<192x16xbf16>, vector<6x16xf32> -> vector<6x16xf32>
      %25 = arith.addf %17, %24 : vector<6x16xf32>
      %c1_i32_22 = arith.constant 1 : i32
      %26 = arith.addi %arg5, %c1_i32_22 : i32
      %c0_23 = arith.constant 0 : index
      %27 = arith.index_cast %26 : i32 to index
      %c0_24 = arith.constant 0 : index
      %c0_25 = arith.constant 0 : index
      %28 = vector.load %arg1[%c0_23, %27, %c0_24, %c0_25] : memref<1x8x8x192xbf16, #tpu.memory_space<vmem>>, vector<1x1x6x192xbf16>
      %29 = vector.shape_cast %28 : vector<1x1x6x192xbf16> to vector<6x192xbf16>
      %c3 = arith.constant 3 : index
      %c0_26 = arith.constant 0 : index
      %c0_27 = arith.constant 0 : index
      %30 = vector.load %arg2[%c3, %c0_26, %c0_27] : memref<9x192x16xbf16, #tpu.memory_space<vmem>>, vector<1x192x16xbf16>
      %31 = vector.shape_cast %30 : vector<1x192x16xbf16> to vector<192x16xbf16>
      %cst_28 = arith.constant dense<0.000000e+00> : vector<6x16xf32>
      %32 = tpu.matmul %29, %31, %cst_28 {dimension_numbers = #tpu.dot_dimension_numbers<[1], [0], [0], [1], [0, 0, 1, 1], [], []>} : vector<6x192xbf16>, vector<192x16xbf16>, vector<6x16xf32> -> vector<6x16xf32>
      %33 = arith.addf %25, %32 : vector<6x16xf32>
      %c1_i32_29 = arith.constant 1 : i32
      %34 = arith.addi %arg5, %c1_i32_29 : i32
      %c0_30 = arith.constant 0 : index
      %35 = arith.index_cast %34 : i32 to index
      %c1_31 = arith.constant 1 : index
      %c0_32 = arith.constant 0 : index
      %36 = vector.load %arg1[%c0_30, %35, %c1_31, %c0_32] : memref<1x8x8x192xbf16, #tpu.memory_space<vmem>>, vector<1x1x6x192xbf16>
      %37 = vector.shape_cast %36 : vector<1x1x6x192xbf16> to vector<6x192xbf16>
      %c4 = arith.constant 4 : index
      %c0_33 = arith.constant 0 : index
      %c0_34 = arith.constant 0 : index
      %38 = vector.load %arg2[%c4, %c0_33, %c0_34] : memref<9x192x16xbf16, #tpu.memory_space<vmem>>, vector<1x192x16xbf16>
      %39 = vector.shape_cast %38 : vector<1x192x16xbf16> to vector<192x16xbf16>
      %cst_35 = arith.constant dense<0.000000e+00> : vector<6x16xf32>
      %40 = tpu.matmul %37, %39, %cst_35 {dimension_numbers = #tpu.dot_dimension_numbers<[1], [0], [0], [1], [0, 0, 1, 1], [], []>} : vector<6x192xbf16>, vector<192x16xbf16>, vector<6x16xf32> -> vector<6x16xf32>
      %41 = arith.addf %33, %40 : vector<6x16xf32>
      %c1_i32_36 = arith.constant 1 : i32
      %42 = arith.addi %arg5, %c1_i32_36 : i32
      %c0_37 = arith.constant 0 : index
      %43 = arith.index_cast %42 : i32 to index
      %c2_38 = arith.constant 2 : index
      %c0_39 = arith.constant 0 : index
      %44 = vector.load %arg1[%c0_37, %43, %c2_38, %c0_39] : memref<1x8x8x192xbf16, #tpu.memory_space<vmem>>, vector<1x1x6x192xbf16>
      %45 = vector.shape_cast %44 : vector<1x1x6x192xbf16> to vector<6x192xbf16>
      %c5 = arith.constant 5 : index
      %c0_40 = arith.constant 0 : index
      %c0_41 = arith.constant 0 : index
      %46 = vector.load %arg2[%c5, %c0_40, %c0_41] : memref<9x192x16xbf16, #tpu.memory_space<vmem>>, vector<1x192x16xbf16>
      %47 = vector.shape_cast %46 : vector<1x192x16xbf16> to vector<192x16xbf16>
      %cst_42 = arith.constant dense<0.000000e+00> : vector<6x16xf32>
      %48 = tpu.matmul %45, %47, %cst_42 {dimension_numbers = #tpu.dot_dimension_numbers<[1], [0], [0], [1], [0, 0, 1, 1], [], []>} : vector<6x192xbf16>, vector<192x16xbf16>, vector<6x16xf32> -> vector<6x16xf32>
      %49 = arith.addf %41, %48 : vector<6x16xf32>
      %c2_i32 = arith.constant 2 : i32
      %50 = arith.addi %arg5, %c2_i32 : i32
      %c0_43 = arith.constant 0 : index
      %51 = arith.index_cast %50 : i32 to index
      %c0_44 = arith.constant 0 : index
      %c0_45 = arith.constant 0 : index
      %52 = vector.load %arg1[%c0_43, %51, %c0_44, %c0_45] : memref<1x8x8x192xbf16, #tpu.memory_space<vmem>>, vector<1x1x6x192xbf16>
      %53 = vector.shape_cast %52 : vector<1x1x6x192xbf16> to vector<6x192xbf16>
      %c6 = arith.constant 6 : index
      %c0_46 = arith.constant 0 : index
      %c0_47 = arith.constant 0 : index
      %54 = vector.load %arg2[%c6, %c0_46, %c0_47] : memref<9x192x16xbf16, #tpu.memory_space<vmem>>, vector<1x192x16xbf16>
      %55 = vector.shape_cast %54 : vector<1x192x16xbf16> to vector<192x16xbf16>
      %cst_48 = arith.constant dense<0.000000e+00> : vector<6x16xf32>
      %56 = tpu.matmul %53, %55, %cst_48 {dimension_numbers = #tpu.dot_dimension_numbers<[1], [0], [0], [1], [0, 0, 1, 1], [], []>} : vector<6x192xbf16>, vector<192x16xbf16>, vector<6x16xf32> -> vector<6x16xf32>
      %57 = arith.addf %49, %56 : vector<6x16xf32>
      %c2_i32_49 = arith.constant 2 : i32
      %58 = arith.addi %arg5, %c2_i32_49 : i32
      %c0_50 = arith.constant 0 : index
      %59 = arith.index_cast %58 : i32 to index
      %c1_51 = arith.constant 1 : index
      %c0_52 = arith.constant 0 : index
      %60 = vector.load %arg1[%c0_50, %59, %c1_51, %c0_52] : memref<1x8x8x192xbf16, #tpu.memory_space<vmem>>, vector<1x1x6x192xbf16>
      %61 = vector.shape_cast %60 : vector<1x1x6x192xbf16> to vector<6x192xbf16>
      %c7 = arith.constant 7 : index
      %c0_53 = arith.constant 0 : index
      %c0_54 = arith.constant 0 : index
      %62 = vector.load %arg2[%c7, %c0_53, %c0_54] : memref<9x192x16xbf16, #tpu.memory_space<vmem>>, vector<1x192x16xbf16>
      %63 = vector.shape_cast %62 : vector<1x192x16xbf16> to vector<192x16xbf16>
      %cst_55 = arith.constant dense<0.000000e+00> : vector<6x16xf32>
      %64 = tpu.matmul %61, %63, %cst_55 {dimension_numbers = #tpu.dot_dimension_numbers<[1], [0], [0], [1], [0, 0, 1, 1], [], []>} : vector<6x192xbf16>, vector<192x16xbf16>, vector<6x16xf32> -> vector<6x16xf32>
      %65 = arith.addf %57, %64 : vector<6x16xf32>
      %c2_i32_56 = arith.constant 2 : i32
      %66 = arith.addi %arg5, %c2_i32_56 : i32
      %c0_57 = arith.constant 0 : index
      %67 = arith.index_cast %66 : i32 to index
      %c2_58 = arith.constant 2 : index
      %c0_59 = arith.constant 0 : index
      %68 = vector.load %arg1[%c0_57, %67, %c2_58, %c0_59] : memref<1x8x8x192xbf16, #tpu.memory_space<vmem>>, vector<1x1x6x192xbf16>
      %69 = vector.shape_cast %68 : vector<1x1x6x192xbf16> to vector<6x192xbf16>
      %c8 = arith.constant 8 : index
      %c0_60 = arith.constant 0 : index
      %c0_61 = arith.constant 0 : index
      %70 = vector.load %arg2[%c8, %c0_60, %c0_61] : memref<9x192x16xbf16, #tpu.memory_space<vmem>>, vector<1x192x16xbf16>
      %71 = vector.shape_cast %70 : vector<1x192x16xbf16> to vector<192x16xbf16>
      %cst_62 = arith.constant dense<0.000000e+00> : vector<6x16xf32>
      %72 = tpu.matmul %69, %71, %cst_62 {dimension_numbers = #tpu.dot_dimension_numbers<[1], [0], [0], [1], [0, 0, 1, 1], [], []>} : vector<6x192xbf16>, vector<192x16xbf16>, vector<6x16xf32> -> vector<6x16xf32>
      %73 = arith.addf %65, %72 : vector<6x16xf32>
      %c0_63 = arith.constant 0 : index
      %c0_64 = arith.constant 0 : index
      %74 = vector.load %arg3[%c0_63, %c0_64] : memref<1x16xf32, #tpu.memory_space<vmem>>, vector<1x16xf32>
      %75 = vector.broadcast %74 : vector<1x16xf32> to vector<6x16xf32>
      %76 = arith.addf %73, %75 : vector<6x16xf32>
      %cst_65 = arith.constant 0.000000e+00 : f32
      %77 = vector.broadcast %cst_65 : f32 to vector<6x16xf32>
      %78 = arith.maximumf %76, %77 : vector<6x16xf32>
      %79 = arith.truncf %78 : vector<6x16xf32> to vector<6x16xbf16>
      %c0_66 = arith.constant 0 : index
      %80 = arith.index_cast %arg5 : i32 to index
      %c0_67 = arith.constant 0 : index
      %c0_68 = arith.constant 0 : index
      %81 = vector.load %arg4[%c0_66, %80, %c0_67, %c0_68] : memref<1x6x6x16xbf16, #tpu.memory_space<vmem>>, vector<1x1x6x16xbf16>
      %82 = vector.shape_cast %81 : vector<1x1x6x16xbf16> to vector<6x16xbf16>
      %83 = vector.shape_cast %79 : vector<6x16xbf16> to vector<1x1x6x16xbf16>
      tpu.vector_store %arg4[%c0_66, %80, %c0_67, %c0_68], %83 {strides = array<i32>} : memref<1x6x6x16xbf16, #tpu.memory_space<vmem>>, vector<1x1x6x16xbf16>,
    }
    %c6_i32_0 = arith.constant 6 : i32
    return
  }
  func.func @transform_0(%arg0: i32) -> (i32, i32, i32, i32) {
    %c0_i32 = arith.constant 0 : i32
    %c0_i32_0 = arith.constant 0 : i32
    %c0_i32_1 = arith.constant 0 : i32
    %c0_i32_2 = arith.constant 0 : i32
    return %arg0, %c0_i32, %c0_i32_0, %c0_i32_1 : i32, i32, i32, i32
  }
  func.func @transform_1(%arg0: i32) -> (i32, i32, i32) {
    %c0_i32 = arith.constant 0 : i32
    %c0_i32_0 = arith.constant 0 : i32
    %c0_i32_1 = arith.constant 0 : i32
    %c0_i32_2 = arith.constant 0 : i32
    return %c0_i32, %c0_i32_0, %c0_i32_1 : i32, i32, i32
  }
  func.func @transform_2(%arg0: i32) -> (i32, i32) {
    %c0_i32 = arith.constant 0 : i32
    %c0_i32_0 = arith.constant 0 : i32
    %c0_i32_1 = arith.constant 0 : i32
    return %c0_i32, %c0_i32_0 : i32, i32
  }
  func.func @transform_3(%arg0: i32) -> (i32, i32, i32, i32) {
    %c0_i32 = arith.constant 0 : i32
    %c0_i32_0 = arith.constant 0 : i32
    %c0_i32_1 = arith.constant 0 : i32
    %c0_i32_2 = arith.constant 0 : i32
    return %arg0, %c0_i32, %c0_i32_0, %c0_i32_1 : i32, i32, i32, i32
  }
}

module attributes {stable_mosaic.version = 11 : i64} {
  func.func @_edge_fuse_kernel(%arg0: i32, %arg1: memref<1x18x18x64xbf16, #tpu.memory_space<vmem>>, %arg2: memref<9x64x16xbf16, #tpu.memory_space<vmem>>, %arg3: memref<1x16xf32, #tpu.memory_space<vmem>>, %arg4: memref<64x4xbf16, #tpu.memory_space<vmem>>, %arg5: memref<1x4xf32, #tpu.memory_space<vmem>>, %arg6: memref<1x16x16x16xbf16, #tpu.memory_space<vmem>>, %arg7: memref<1x16x16x1xf32, #tpu.memory_space<vmem>>) attributes {dimension_semantics = [#tpu.dimension_semantics<parallel>], iteration_bounds = array<i64: 2>, scalar_prefetch = 0 : i64, scratch_operands = 0 : i64, tpu.core_type = #tpu.core_type<tc>, window_params = [{transform_indices = @transform_0, window_bounds = array<i64: 1, 18, 18, 64>}, {pipeline_mode = #tpu.pipeline_mode<synchronous>, transform_indices = @transform_1, window_bounds = array<i64: 9, 64, 16>}, {pipeline_mode = #tpu.pipeline_mode<synchronous>, transform_indices = @transform_2, window_bounds = array<i64: 1, 16>}, {pipeline_mode = #tpu.pipeline_mode<synchronous>, transform_indices = @transform_3, window_bounds = array<i64: 64, 4>}, {pipeline_mode = #tpu.pipeline_mode<synchronous>, transform_indices = @transform_4, window_bounds = array<i64: 1, 4>}, {transform_indices = @transform_5, window_bounds = array<i64: 1, 16, 16, 16>}, {transform_indices = @transform_6, window_bounds = array<i64: 1, 16, 16, 1>}]} {
    %c0_i32 = arith.constant 0 : i32
    %c16_i32 = arith.constant 16 : i32
    %0 = arith.addi %c0_i32, %c16_i32 : i32
    %c1_i32 = arith.constant 1 : i32
    scf.for %arg8 = %c0_i32 to %0 step %c1_i32  : i32 {
      %cst = arith.constant 0.000000e+00 : f32
      %1 = vector.broadcast %cst : f32 to vector<16x16xf32>
      %c0_i32_1 = arith.constant 0 : i32
      %2 = arith.addi %arg8, %c0_i32_1 : i32
      %c0 = arith.constant 0 : index
      %3 = arith.index_cast %2 : i32 to index
      %c0_2 = arith.constant 0 : index
      %c0_3 = arith.constant 0 : index
      %4 = vector.load %arg1[%c0, %3, %c0_2, %c0_3] : memref<1x18x18x64xbf16, #tpu.memory_space<vmem>>, vector<1x1x16x64xbf16>
      %5 = vector.shape_cast %4 : vector<1x1x16x64xbf16> to vector<16x64xbf16>
      %c0_4 = arith.constant 0 : index
      %c0_5 = arith.constant 0 : index
      %c0_6 = arith.constant 0 : index
      %6 = vector.load %arg2[%c0_4, %c0_5, %c0_6] : memref<9x64x16xbf16, #tpu.memory_space<vmem>>, vector<1x64x16xbf16>
      %7 = vector.shape_cast %6 : vector<1x64x16xbf16> to vector<64x16xbf16>
      %cst_7 = arith.constant dense<0.000000e+00> : vector<16x16xf32>
      %8 = tpu.matmul %5, %7, %cst_7 {dimension_numbers = #tpu.dot_dimension_numbers<[1], [0], [0], [1], [0, 0, 1, 1], [], []>} : vector<16x64xbf16>, vector<64x16xbf16>, vector<16x16xf32> -> vector<16x16xf32>
      %9 = arith.addf %1, %8 : vector<16x16xf32>
      %c0_i32_8 = arith.constant 0 : i32
      %10 = arith.addi %arg8, %c0_i32_8 : i32
      %c0_9 = arith.constant 0 : index
      %11 = arith.index_cast %10 : i32 to index
      %c1 = arith.constant 1 : index
      %c0_10 = arith.constant 0 : index
      %12 = vector.load %arg1[%c0_9, %11, %c1, %c0_10] : memref<1x18x18x64xbf16, #tpu.memory_space<vmem>>, vector<1x1x16x64xbf16>
      %13 = vector.shape_cast %12 : vector<1x1x16x64xbf16> to vector<16x64xbf16>
      %c1_11 = arith.constant 1 : index
      %c0_12 = arith.constant 0 : index
      %c0_13 = arith.constant 0 : index
      %14 = vector.load %arg2[%c1_11, %c0_12, %c0_13] : memref<9x64x16xbf16, #tpu.memory_space<vmem>>, vector<1x64x16xbf16>
      %15 = vector.shape_cast %14 : vector<1x64x16xbf16> to vector<64x16xbf16>
      %cst_14 = arith.constant dense<0.000000e+00> : vector<16x16xf32>
      %16 = tpu.matmul %13, %15, %cst_14 {dimension_numbers = #tpu.dot_dimension_numbers<[1], [0], [0], [1], [0, 0, 1, 1], [], []>} : vector<16x64xbf16>, vector<64x16xbf16>, vector<16x16xf32> -> vector<16x16xf32>
      %17 = arith.addf %9, %16 : vector<16x16xf32>
      %c0_i32_15 = arith.constant 0 : i32
      %18 = arith.addi %arg8, %c0_i32_15 : i32
      %c0_16 = arith.constant 0 : index
      %19 = arith.index_cast %18 : i32 to index
      %c2 = arith.constant 2 : index
      %c0_17 = arith.constant 0 : index
      %20 = vector.load %arg1[%c0_16, %19, %c2, %c0_17] : memref<1x18x18x64xbf16, #tpu.memory_space<vmem>>, vector<1x1x16x64xbf16>
      %21 = vector.shape_cast %20 : vector<1x1x16x64xbf16> to vector<16x64xbf16>
      %c2_18 = arith.constant 2 : index
      %c0_19 = arith.constant 0 : index
      %c0_20 = arith.constant 0 : index
      %22 = vector.load %arg2[%c2_18, %c0_19, %c0_20] : memref<9x64x16xbf16, #tpu.memory_space<vmem>>, vector<1x64x16xbf16>
      %23 = vector.shape_cast %22 : vector<1x64x16xbf16> to vector<64x16xbf16>
      %cst_21 = arith.constant dense<0.000000e+00> : vector<16x16xf32>
      %24 = tpu.matmul %21, %23, %cst_21 {dimension_numbers = #tpu.dot_dimension_numbers<[1], [0], [0], [1], [0, 0, 1, 1], [], []>} : vector<16x64xbf16>, vector<64x16xbf16>, vector<16x16xf32> -> vector<16x16xf32>
      %25 = arith.addf %17, %24 : vector<16x16xf32>
      %c1_i32_22 = arith.constant 1 : i32
      %26 = arith.addi %arg8, %c1_i32_22 : i32
      %c0_23 = arith.constant 0 : index
      %27 = arith.index_cast %26 : i32 to index
      %c0_24 = arith.constant 0 : index
      %c0_25 = arith.constant 0 : index
      %28 = vector.load %arg1[%c0_23, %27, %c0_24, %c0_25] : memref<1x18x18x64xbf16, #tpu.memory_space<vmem>>, vector<1x1x16x64xbf16>
      %29 = vector.shape_cast %28 : vector<1x1x16x64xbf16> to vector<16x64xbf16>
      %c3 = arith.constant 3 : index
      %c0_26 = arith.constant 0 : index
      %c0_27 = arith.constant 0 : index
      %30 = vector.load %arg2[%c3, %c0_26, %c0_27] : memref<9x64x16xbf16, #tpu.memory_space<vmem>>, vector<1x64x16xbf16>
      %31 = vector.shape_cast %30 : vector<1x64x16xbf16> to vector<64x16xbf16>
      %cst_28 = arith.constant dense<0.000000e+00> : vector<16x16xf32>
      %32 = tpu.matmul %29, %31, %cst_28 {dimension_numbers = #tpu.dot_dimension_numbers<[1], [0], [0], [1], [0, 0, 1, 1], [], []>} : vector<16x64xbf16>, vector<64x16xbf16>, vector<16x16xf32> -> vector<16x16xf32>
      %33 = arith.addf %25, %32 : vector<16x16xf32>
      %c1_i32_29 = arith.constant 1 : i32
      %34 = arith.addi %arg8, %c1_i32_29 : i32
      %c0_30 = arith.constant 0 : index
      %35 = arith.index_cast %34 : i32 to index
      %c1_31 = arith.constant 1 : index
      %c0_32 = arith.constant 0 : index
      %36 = vector.load %arg1[%c0_30, %35, %c1_31, %c0_32] : memref<1x18x18x64xbf16, #tpu.memory_space<vmem>>, vector<1x1x16x64xbf16>
      %37 = vector.shape_cast %36 : vector<1x1x16x64xbf16> to vector<16x64xbf16>
      %c4 = arith.constant 4 : index
      %c0_33 = arith.constant 0 : index
      %c0_34 = arith.constant 0 : index
      %38 = vector.load %arg2[%c4, %c0_33, %c0_34] : memref<9x64x16xbf16, #tpu.memory_space<vmem>>, vector<1x64x16xbf16>
      %39 = vector.shape_cast %38 : vector<1x64x16xbf16> to vector<64x16xbf16>
      %cst_35 = arith.constant dense<0.000000e+00> : vector<16x16xf32>
      %40 = tpu.matmul %37, %39, %cst_35 {dimension_numbers = #tpu.dot_dimension_numbers<[1], [0], [0], [1], [0, 0, 1, 1], [], []>} : vector<16x64xbf16>, vector<64x16xbf16>, vector<16x16xf32> -> vector<16x16xf32>
      %41 = arith.addf %33, %40 : vector<16x16xf32>
      %c1_i32_36 = arith.constant 1 : i32
      %42 = arith.addi %arg8, %c1_i32_36 : i32
      %c0_37 = arith.constant 0 : index
      %43 = arith.index_cast %42 : i32 to index
      %c2_38 = arith.constant 2 : index
      %c0_39 = arith.constant 0 : index
      %44 = vector.load %arg1[%c0_37, %43, %c2_38, %c0_39] : memref<1x18x18x64xbf16, #tpu.memory_space<vmem>>, vector<1x1x16x64xbf16>
      %45 = vector.shape_cast %44 : vector<1x1x16x64xbf16> to vector<16x64xbf16>
      %c5 = arith.constant 5 : index
      %c0_40 = arith.constant 0 : index
      %c0_41 = arith.constant 0 : index
      %46 = vector.load %arg2[%c5, %c0_40, %c0_41] : memref<9x64x16xbf16, #tpu.memory_space<vmem>>, vector<1x64x16xbf16>
      %47 = vector.shape_cast %46 : vector<1x64x16xbf16> to vector<64x16xbf16>
      %cst_42 = arith.constant dense<0.000000e+00> : vector<16x16xf32>
      %48 = tpu.matmul %45, %47, %cst_42 {dimension_numbers = #tpu.dot_dimension_numbers<[1], [0], [0], [1], [0, 0, 1, 1], [], []>} : vector<16x64xbf16>, vector<64x16xbf16>, vector<16x16xf32> -> vector<16x16xf32>
      %49 = arith.addf %41, %48 : vector<16x16xf32>
      %c2_i32 = arith.constant 2 : i32
      %50 = arith.addi %arg8, %c2_i32 : i32
      %c0_43 = arith.constant 0 : index
      %51 = arith.index_cast %50 : i32 to index
      %c0_44 = arith.constant 0 : index
      %c0_45 = arith.constant 0 : index
      %52 = vector.load %arg1[%c0_43, %51, %c0_44, %c0_45] : memref<1x18x18x64xbf16, #tpu.memory_space<vmem>>, vector<1x1x16x64xbf16>
      %53 = vector.shape_cast %52 : vector<1x1x16x64xbf16> to vector<16x64xbf16>
      %c6 = arith.constant 6 : index
      %c0_46 = arith.constant 0 : index
      %c0_47 = arith.constant 0 : index
      %54 = vector.load %arg2[%c6, %c0_46, %c0_47] : memref<9x64x16xbf16, #tpu.memory_space<vmem>>, vector<1x64x16xbf16>
      %55 = vector.shape_cast %54 : vector<1x64x16xbf16> to vector<64x16xbf16>
      %cst_48 = arith.constant dense<0.000000e+00> : vector<16x16xf32>
      %56 = tpu.matmul %53, %55, %cst_48 {dimension_numbers = #tpu.dot_dimension_numbers<[1], [0], [0], [1], [0, 0, 1, 1], [], []>} : vector<16x64xbf16>, vector<64x16xbf16>, vector<16x16xf32> -> vector<16x16xf32>
      %57 = arith.addf %49, %56 : vector<16x16xf32>
      %c2_i32_49 = arith.constant 2 : i32
      %58 = arith.addi %arg8, %c2_i32_49 : i32
      %c0_50 = arith.constant 0 : index
      %59 = arith.index_cast %58 : i32 to index
      %c1_51 = arith.constant 1 : index
      %c0_52 = arith.constant 0 : index
      %60 = vector.load %arg1[%c0_50, %59, %c1_51, %c0_52] : memref<1x18x18x64xbf16, #tpu.memory_space<vmem>>, vector<1x1x16x64xbf16>
      %61 = vector.shape_cast %60 : vector<1x1x16x64xbf16> to vector<16x64xbf16>
      %c7 = arith.constant 7 : index
      %c0_53 = arith.constant 0 : index
      %c0_54 = arith.constant 0 : index
      %62 = vector.load %arg2[%c7, %c0_53, %c0_54] : memref<9x64x16xbf16, #tpu.memory_space<vmem>>, vector<1x64x16xbf16>
      %63 = vector.shape_cast %62 : vector<1x64x16xbf16> to vector<64x16xbf16>
      %cst_55 = arith.constant dense<0.000000e+00> : vector<16x16xf32>
      %64 = tpu.matmul %61, %63, %cst_55 {dimension_numbers = #tpu.dot_dimension_numbers<[1], [0], [0], [1], [0, 0, 1, 1], [], []>} : vector<16x64xbf16>, vector<64x16xbf16>, vector<16x16xf32> -> vector<16x16xf32>
      %65 = arith.addf %57, %64 : vector<16x16xf32>
      %c2_i32_56 = arith.constant 2 : i32
      %66 = arith.addi %arg8, %c2_i32_56 : i32
      %c0_57 = arith.constant 0 : index
      %67 = arith.index_cast %66 : i32 to index
      %c2_58 = arith.constant 2 : index
      %c0_59 = arith.constant 0 : index
      %68 = vector.load %arg1[%c0_57, %67, %c2_58, %c0_59] : memref<1x18x18x64xbf16, #tpu.memory_space<vmem>>, vector<1x1x16x64xbf16>
      %69 = vector.shape_cast %68 : vector<1x1x16x64xbf16> to vector<16x64xbf16>
      %c8 = arith.constant 8 : index
      %c0_60 = arith.constant 0 : index
      %c0_61 = arith.constant 0 : index
      %70 = vector.load %arg2[%c8, %c0_60, %c0_61] : memref<9x64x16xbf16, #tpu.memory_space<vmem>>, vector<1x64x16xbf16>
      %71 = vector.shape_cast %70 : vector<1x64x16xbf16> to vector<64x16xbf16>
      %cst_62 = arith.constant dense<0.000000e+00> : vector<16x16xf32>
      %72 = tpu.matmul %69, %71, %cst_62 {dimension_numbers = #tpu.dot_dimension_numbers<[1], [0], [0], [1], [0, 0, 1, 1], [], []>} : vector<16x64xbf16>, vector<64x16xbf16>, vector<16x16xf32> -> vector<16x16xf32>
      %73 = arith.addf %65, %72 : vector<16x16xf32>
      %c0_63 = arith.constant 0 : index
      %c0_64 = arith.constant 0 : index
      %74 = vector.load %arg3[%c0_63, %c0_64] : memref<1x16xf32, #tpu.memory_space<vmem>>, vector<1x16xf32>
      %75 = vector.broadcast %74 : vector<1x16xf32> to vector<16x16xf32>
      %76 = arith.addf %73, %75 : vector<16x16xf32>
      %cst_65 = arith.constant 0.000000e+00 : f32
      %77 = vector.broadcast %cst_65 : f32 to vector<16x16xf32>
      %78 = arith.maximumf %76, %77 : vector<16x16xf32>
      %79 = arith.truncf %78 : vector<16x16xf32> to vector<16x16xbf16>
      %c0_66 = arith.constant 0 : index
      %80 = arith.index_cast %arg8 : i32 to index
      %c0_67 = arith.constant 0 : index
      %c0_68 = arith.constant 0 : index
      %81 = vector.load %arg6[%c0_66, %80, %c0_67, %c0_68] : memref<1x16x16x16xbf16, #tpu.memory_space<vmem>>, vector<1x1x16x16xbf16>
      %82 = vector.shape_cast %81 : vector<1x1x16x16xbf16> to vector<16x16xbf16>
      %83 = vector.shape_cast %79 : vector<16x16xbf16> to vector<1x1x16x16xbf16>
      tpu.vector_store %arg6[%c0_66, %80, %c0_67, %c0_68], %83 {strides = array<i32>} : memref<1x16x16x16xbf16, #tpu.memory_space<vmem>>, vector<1x1x16x16xbf16>,
      %c1_i32_69 = arith.constant 1 : i32
      %84 = arith.addi %arg8, %c1_i32_69 : i32
      %c0_70 = arith.constant 0 : index
      %85 = arith.index_cast %84 : i32 to index
      %c1_71 = arith.constant 1 : index
      %c0_72 = arith.constant 0 : index
      %86 = vector.load %arg1[%c0_70, %85, %c1_71, %c0_72] : memref<1x18x18x64xbf16, #tpu.memory_space<vmem>>, vector<1x1x16x64xbf16>
      %87 = vector.shape_cast %86 : vector<1x1x16x64xbf16> to vector<16x64xbf16>
      %c0_73 = arith.constant 0 : index
      %c0_74 = arith.constant 0 : index
      %88 = vector.load %arg4[%c0_73, %c0_74] : memref<64x4xbf16, #tpu.memory_space<vmem>>, vector<64x4xbf16>
      %cst_75 = arith.constant dense<0.000000e+00> : vector<16x4xf32>
      %89 = tpu.matmul %87, %88, %cst_75 {dimension_numbers = #tpu.dot_dimension_numbers<[1], [0], [0], [1], [0, 0, 1, 1], [], []>} : vector<16x64xbf16>, vector<64x4xbf16>, vector<16x4xf32> -> vector<16x4xf32>
      %c0_76 = arith.constant 0 : index
      %c0_77 = arith.constant 0 : index
      %90 = vector.load %arg5[%c0_76, %c0_77] : memref<1x4xf32, #tpu.memory_space<vmem>>, vector<1x4xf32>
      %91 = vector.broadcast %90 : vector<1x4xf32> to vector<16x4xf32>
      %92 = arith.addf %89, %91 : vector<16x4xf32>
      %cst_78 = arith.constant 0.000000e+00 : f32
      %93 = vector.broadcast %cst_78 : f32 to vector<16x4xf32>
      %94 = arith.subf %93, %92 : vector<16x4xf32>
      %95 = math.exp %94 : vector<16x4xf32>
      %cst_79 = arith.constant 1.000000e+00 : f32
      %96 = vector.broadcast %cst_79 : f32 to vector<16x4xf32>
      %97 = arith.addf %96, %95 : vector<16x4xf32>
      %cst_80 = arith.constant 1.000000e+00 : f32
      %98 = vector.broadcast %cst_80 : f32 to vector<16x4xf32>
      %99 = arith.divf %98, %97 : vector<16x4xf32>
      %cst_81 = arith.constant dense<0.000000e+00> : vector<16xf32>
      %100 = vector.multi_reduction <add>, %99, %cst_81 [1] : vector<16x4xf32> to vector<16xf32>
      %101 = vector.shape_cast %100 : vector<16xf32> to vector<16x1xf32>
      %c0_82 = arith.constant 0 : index
      %102 = arith.index_cast %arg8 : i32 to index
      %c0_83 = arith.constant 0 : index
      %c0_84 = arith.constant 0 : index
      %103 = vector.load %arg7[%c0_82, %102, %c0_83, %c0_84] : memref<1x16x16x1xf32, #tpu.memory_space<vmem>>, vector<1x1x16x1xf32>
      %104 = vector.shape_cast %103 : vector<1x1x16x1xf32> to vector<16x1xf32>
      %105 = vector.shape_cast %101 : vector<16x1xf32> to vector<1x1x16x1xf32>
      tpu.vector_store %arg7[%c0_82, %102, %c0_83, %c0_84], %105 {strides = array<i32>} : memref<1x16x16x1xf32, #tpu.memory_space<vmem>>, vector<1x1x16x1xf32>,
    }
    %c16_i32_0 = arith.constant 16 : i32
    return
  }
  func.func @transform_0(%arg0: i32) -> (i32, i32, i32, i32) {
    %c0_i32 = arith.constant 0 : i32
    %c0_i32_0 = arith.constant 0 : i32
    %c0_i32_1 = arith.constant 0 : i32
    %c0_i32_2 = arith.constant 0 : i32
    return %arg0, %c0_i32, %c0_i32_0, %c0_i32_1 : i32, i32, i32, i32
  }
  func.func @transform_1(%arg0: i32) -> (i32, i32, i32) {
    %c0_i32 = arith.constant 0 : i32
    %c0_i32_0 = arith.constant 0 : i32
    %c0_i32_1 = arith.constant 0 : i32
    %c0_i32_2 = arith.constant 0 : i32
    return %c0_i32, %c0_i32_0, %c0_i32_1 : i32, i32, i32
  }
  func.func @transform_2(%arg0: i32) -> (i32, i32) {
    %c0_i32 = arith.constant 0 : i32
    %c0_i32_0 = arith.constant 0 : i32
    %c0_i32_1 = arith.constant 0 : i32
    return %c0_i32, %c0_i32_0 : i32, i32
  }
  func.func @transform_3(%arg0: i32) -> (i32, i32) {
    %c0_i32 = arith.constant 0 : i32
    %c0_i32_0 = arith.constant 0 : i32
    %c0_i32_1 = arith.constant 0 : i32
    return %c0_i32, %c0_i32_0 : i32, i32
  }
  func.func @transform_4(%arg0: i32) -> (i32, i32) {
    %c0_i32 = arith.constant 0 : i32
    %c0_i32_0 = arith.constant 0 : i32
    %c0_i32_1 = arith.constant 0 : i32
    return %c0_i32, %c0_i32_0 : i32, i32
  }
  func.func @transform_5(%arg0: i32) -> (i32, i32, i32, i32) {
    %c0_i32 = arith.constant 0 : i32
    %c0_i32_0 = arith.constant 0 : i32
    %c0_i32_1 = arith.constant 0 : i32
    %c0_i32_2 = arith.constant 0 : i32
    return %arg0, %c0_i32, %c0_i32_0, %c0_i32_1 : i32, i32, i32, i32
  }
  func.func @transform_6(%arg0: i32) -> (i32, i32, i32, i32) {
    %c0_i32 = arith.constant 0 : i32
    %c0_i32_0 = arith.constant 0 : i32
    %c0_i32_1 = arith.constant 0 : i32
    %c0_i32_2 = arith.constant 0 : i32
    return %arg0, %c0_i32, %c0_i32_0, %c0_i32_1 : i32, i32, i32, i32
  }
}

</mosaic_0001>

<llo_original>
// kernel: boundary_head_forward.5
$region0: #{boundary_head_forward.5}
  #allocation0 [shape = 'u32[]', space=smem, size = 0x4, offset = 0x4, fixed_abs, tag = 'smem constant byte address 0x4 - core index']
  #allocation1 [shape = 'u32[72,128]{1,0:T(1,128)}', space=vmem, size = 0x9000, scoped, tag = 'internal scratch']
  %s0 = inlined_call_operand.vmem [shape: bf16[2,16,16,48], index: 0, kind: input, shape index: {}]
  %s1 = inlined_call_operand.vmem [shape: bf16[9,48,16], index: 1, kind: input, shape index: {}]
  %s2 = inlined_call_operand.vmem [shape: f32[1,16], index: 2, kind: input, shape index: {}]
  %s3 = inlined_call_operand.vmem [shape: bf16[2,14,14,16], index: 3, kind: output, shape index: {}]
  %s4 = sld [smem:[#allocation0]]
  $region52: #{boundary_head_forward.5} parent=0
    _
  %s6 = ssub.s32 1, %s4
  %s7 = scalar_select 0, %s6, %s4
  loop: start=0, step=1, limit=4
  $region2: #{boundary_head_forward.5} parent=0 // loop_pre_header
    _
  $region3: #{boundary_head_forward.5} parent=0 // loop_header
    %s9 = sphi 0, %s13
    %p10 = scmp.ge.s32.totalorder %s9, 4
    %s19 = sphi 0, %s21
    %s22 = sphi 0, %s19
    %s23 = sphi 0, %s22
    %s39 = sphi 0, %s23
    %s43 = sphi 0, %s43
    %s45 = sphi 0, %s43
    %s46 = sphi 0, %s45
    %s60 = sphi 0, %s46
    %s64 = sphi 0, %s64
    %s66 = sphi 0, %s64
    %s67 = sphi 0, %s66
    %s81 = sphi 0, %s67
    %s87 = sphi 0, %s89
    %s90 = sphi 0, %s87
    %s91 = sphi 0, %s90
    %s107 = sphi 0, %s91
  $region4: #{boundary_head_forward.5} parent=0 // loop_header_branch
    %12 = sbr.rel (%p10) target = $region8
  $region5: #{boundary_head_forward.5} parent=0 // loop_body
    %s14 = ssub.s32 %s9, 1
    %s15 = ssub.s32 %s9, 2
    %s16 = sadd.s32 %s9, 1
    %s17 = ssub.s32 %s9, %s16
    %p18 = scmp.eq.s32.totalorder %s17, 0
    %s20 = sadd.s32 %s19, 1
    %s21 = scalar_select %p18, %s19, %s20
    %p24 = pneg %p18
    %p25 = scmp.eq.s32.totalorder %s9, 1
    %p26 = por %p24, %p25
    %p27 = scmp.ne.s32.totalorder %s19, %s22
    %p28 = scmp.eq.s32.totalorder %s9, 0
    %p29 = por %p27, %p28
    %p30 = scmp.ne.s32.totalorder %s19, %s22
    %p31 = scmp.eq.s32.totalorder %s14, 1
    %p32 = por %p30, %p31
    %p33 = scmp.ne.s32.totalorder %s22, %s23
    %p34 = scmp.eq.s32.totalorder %s14, 0
    %p35 = por %p33, %p34
    %p36 = scmp.ne.s32.totalorder %s22, %s23
    %p37 = scmp.eq.s32.totalorder %s15, 1
    %p38 = por %p36, %p37
    %p40 = scmp.ne.s32.totalorder %s23, %s39
    %p41 = scmp.eq.s32.totalorder %s15, 0
    %p42 = por %p40, %p41
    %s44 = sadd.s32 %s43, 1
    %p47 = scmp.eq.s32.totalorder %s9, 1
    %p48 = scmp.ne.s32.totalorder %s43, %s45
    %p49 = scmp.eq.s32.totalorder %s9, 0
    %p50 = por %p48, %p49
    %p51 = scmp.ne.s32.totalorder %s43, %s45
    %p52 = scmp.eq.s32.totalorder %s14, 1
    %p53 = por %p51, %p52
    %p54 = scmp.ne.s32.totalorder %s45, %s46
    %p55 = scmp.eq.s32.totalorder %s14, 0
    %p56 = por %p54, %p55
    %p57 = scmp.ne.s32.totalorder %s45, %s46
    %p58 = scmp.eq.s32.totalorder %s15, 1
    %p59 = por %p57, %p58
    %p61 = scmp.ne.s32.totalorder %s46, %s60
    %p62 = scmp.eq.s32.totalorder %s15, 0
    %p63 = por %p61, %p62
    %s65 = sadd.s32 %s64, 1
    %p68 = scmp.eq.s32.totalorder %s9, 1
    %p69 = scmp.ne.s32.totalorder %s64, %s66
    %p70 = scmp.eq.s32.totalorder %s9, 0
    %p71 = por %p69, %p70
    %p72 = scmp.ne.s32.totalorder %s64, %s66
    %p73 = scmp.eq.s32.totalorder %s14, 1
    %p74 = por %p72, %p73
    %p75 = scmp.ne.s32.totalorder %s66, %s67
    %p76 = scmp.eq.s32.totalorder %s14, 0
    %p77 = por %p75, %p76
    %p78 = scmp.ne.s32.totalorder %s66, %s67
    %p79 = scmp.eq.s32.totalorder %s15, 1
    %p80 = por %p78, %p79
    %p82 = scmp.ne.s32.totalorder %s67, %s81
    %p83 = scmp.eq.s32.totalorder %s15, 0
    %p84 = por %p82, %p83
    %s85 = ssub.s32 %s9, %s16
    %p86 = scmp.eq.s32.totalorder %s85, 0
    %s88 = sadd.s32 %s87, 1
    %s89 = scalar_select %p86, %s87, %s88
    %p92 = pneg %p86
    %p93 = scmp.eq.s32.totalorder %s9, 1
    %p94 = por %p92, %p93
    %p95 = scmp.ne.s32.totalorder %s87, %s90
    %p96 = scmp.eq.s32.totalorder %s9, 0
    %p97 = por %p95, %p96
    %p98 = scmp.ne.s32.totalorder %s87, %s90
    %p99 = scmp.eq.s32.totalorder %s14, 1
    %p100 = por %p98, %p99
    %p101 = scmp.ne.s32.totalorder %s90, %s91
    %p102 = scmp.eq.s32.totalorder %s14, 0
    %p103 = por %p101, %p102
    %p104 = scmp.ne.s32.totalorder %s90, %s91
    %p105 = scmp.eq.s32.totalorder %s15, 1
    %p106 = por %p104, %p105
    %p108 = scmp.ne.s32.totalorder %s91, %s107
    %p109 = scmp.eq.s32.totalorder %s15, 0
    %p110 = por %p108, %p109
    %p111 = scmp.le.s32.totalorder 1, %s9
    %p112 = scmp.lt.s32.totalorder %s9, 3
    %p113 = pnand %p111, %p112
    %p114 = pneg %p113
    // Predicated region
    $region9: #{boundary_head_forward.5} parent=5 // pred_check
      _
    $region10: #{boundary_head_forward.5} parent=5 // pred_check_branch
      %116 = sbr.rel (%p113) target = $region12
    $region11: #{boundary_head_forward.5} parent=5 // pred_region
      %s117 = ssub.s32 %s9, 1
      // Predicated region
      $region13: #{boundary_head_forward.5} parent=11 // pred_check
        %p118 = pneg %p56
      $region14: #{boundary_head_forward.5} parent=11 // pred_check_branch
        %120 = sbr.rel (%p118) target = $region16
      $region15: #{boundary_head_forward.5} parent=11 // pred_region
        _
      $region16: #{boundary_head_forward.5} parent=11 // pred_fallthru
        _
      // Predicated region
      $region17: #{boundary_head_forward.5} parent=11 // pred_check
        %p121 = pneg %p77
      $region18: #{boundary_head_forward.5} parent=11 // pred_check_branch
        %123 = sbr.rel (%p121) target = $region20
      $region19: #{boundary_head_forward.5} parent=11 // pred_region
        _
      $region20: #{boundary_head_forward.5} parent=11 // pred_fallthru
        _
    $region12: #{boundary_head_forward.5} parent=5 // pred_fallthru
      _
    %p124 = scmp.lt.s32.totalorder %s9, 2
    // Predicated region
    $region21: #{boundary_head_forward.5} parent=5 // pred_check
      %p125 = pneg %p124
    $region22: #{boundary_head_forward.5} parent=5 // pred_check_branch
      %127 = sbr.rel (%p125) target = $region24
    $region23: #{boundary_head_forward.5} parent=5 // pred_region
      // Predicated region
      $region25: #{boundary_head_forward.5} parent=23 // pred_check
        %p128 = pneg %p29
      $region26: #{boundary_head_forward.5} parent=23 // pred_check_branch
        %130 = sbr.rel (%p128) target = $region28
      $region27: #{boundary_head_forward.5} parent=23 // pred_region
        %p131 = scmp.lt.s32.totalorder %s9, 1
        %s132 = scalar_select %p131, %s9, 1
        %s133 = smul.addr %s132, 32
        %s134 = smul.addr %s133, 4
        %s135 = scalar_lea.vmem %s0, %s134
      $region28: #{boundary_head_forward.5} parent=23 // pred_fallthru
        _
    $region24: #{boundary_head_forward.5} parent=5 // pred_fallthru
      _
    %p136 = scmp.le.s32.totalorder 1, %s9
    %p137 = scmp.lt.s32.totalorder %s9, 3
    %p138 = pnand %p136, %p137
    %p139 = pneg %p138
    // Predicated region
    $region29: #{boundary_head_forward.5} parent=5 // pred_check
      _
    $region30: #{boundary_head_forward.5} parent=5 // pred_check_branch
      %141 = sbr.rel (%p138) target = $region32
    $region31: #{boundary_head_forward.5} parent=5 // pred_region
      %s142 = ssub.s32 %s9, 1
      %p143 = scmp.lt.s32.totalorder %s14, 1
      %s144 = scalar_select %p143, %s14, 1
      %s145 = smul.addr %s144, 32
      %s146 = smul.addr %s145, 4
      %s147 = scalar_lea.vmem %s0, %s146
      %p148 = pneg %p35
      %p149 = pneg %p32
      %p150 = pneg %p56
      %p151 = pneg %p53
      %p152 = pneg %p77
      %p153 = pneg %p74
      %p154 = pneg %p103
      %p155 = pneg %p100
      %p156 = scmp.lt.s32.totalorder %s14, 1
      %s157 = scalar_select %p156, %s14, 1
      %s158 = smul.addr %s157, 28
      %s159 = smul.addr %s158, 4
      %s160 = scalar_lea.vmem %s3, %s159
      %p161 = scmp.lt.s32.totalorder %s14, 1
      %s162 = scalar_select %p161, %s14, 1
      %s163 = smul.addr %s162, 32
      %s164 = smul.addr %s163, 4
      %s165 = scalar_lea.vmem %s0, %s164
      %p166 = scmp.lt.s32.totalorder %s14, 1
      %s167 = scalar_select %p166, %s14, 1
      %s168 = smul.addr %s167, 28
      %s169 = smul.addr %s168, 4
      %s170 = scalar_lea.vmem %s3, %s169
      loop: start=0, step=1, limit=14
      $region33: #{boundary_head_forward.5} parent=31 // loop_pre_header
        _
      $region34: #{boundary_head_forward.5} parent=31 // loop_header
        %s173 = sphi 0, %s177
        %p174 = scmp.ge.s32.totalorder %s173, 14
      $region35: #{boundary_head_forward.5} parent=31 // loop_header_branch
        %176 = sbr.rel (%p174) target = $region39
      $region36: #{boundary_head_forward.5} parent=31 // loop_body
        %s178 = smul.u32 %s173, 2
        %s179 = smul.addr %s178, 4
        %s180 = scalar_lea.vmem %s165, %s179
        %v181 = vld [vmem:[%s180] sm:$0xf]
        %v182 = vld [vmem:[%s180 + $0x4] sm:$0x7]
        %v183 = vld [vmem:[%s1] sm:$0xf]
        %v184 = vld [vmem:[%s1 + $0x4] sm:$0xf]
        %v185 = vld [vmem:[%s1 + $0x8] sm:$0xf]
        %v186 = vld [vmem:[%s1 + $0xc] sm:$0xf]
        %v187 = vld [vmem:[%s1 + $0x10] sm:$0xf]
        %v188 = vld [vmem:[%s1 + $0x14] sm:$0xf]
        %v189 = vld [vmem:[%s180 + $0x4] sm:$0xf]
        %s190 = scalar_lea.vmem %s1, 24
        %v191 = vld [vmem:[%s190] sm:$0xf]
        %v192 = vld [vmem:[%s190 + $0x4] sm:$0xf]
        %v193 = vld [vmem:[%s190 + $0x8] sm:$0xf]
        %v194 = vld [vmem:[%s190 + $0xc] sm:$0xf]
        %v195 = vld [vmem:[%s190 + $0x10] sm:$0xf]
        %v196 = vld [vmem:[%s190 + $0x14] sm:$0xf]
        %v199 = vunpack.c.l.b16 %v181
        %v200 = vunpack.c.l.b16 %v189
        %v201 = vpack.c.b16 %v200, %v199
        %v203 = vshrl.u32 %v201, 16
        %v205 = vshll.u32 %v201, 16
        %v207 = vrot.slane %v205, 1
        %v208 = vor.u32 %v203, %v207
        %v215 = vunpack.c.l.b16 %v191
        %v216 = vunpack.c.l.b16 %v192
        %v217 = vunpack.c.l.b16 %v193
        %v218 = vunpack.c.l.b16 %v194
        %v219 = vunpack.c.l.b16 %v195
        %v220 = vunpack.c.l.b16 %v196
        %v221 = vpack.c.b16 %v216, %v215
        %v222 = vpack.c.b16 %v218, %v217
        %v223 = vpack.c.b16 %v220, %v219
        %vm227 = vcmask 392192
        %v229 = vsel %vm227, %v208, 0
        %231 = vmatpush.bf16.msra.mxu0 0
        %232 = vmatpush.bf16.msra.mxu0 0
        %233 = vmatpush.bf16.msra.mxu0 0
        %234 = vmatpush.bf16.msra.mxu0 0
        %235 = vmatpush.bf16.msra.mxu0 0
        %236 = vmatpush.bf16.msra.mxu0 %v223
        %237 = vmatpush.bf16.msra.mxu0 %v222
        %238 = vmatpush.bf16.msra.mxu0 %v221
        %239 = vmatmul.bf16.gmra.mxu0 %v229
        %v240 = vpop.f32.mrf.mxu0
        %v241 = vadd.f32 0.0, %v240
        %v242 = vpop.f32.mrf.mxu0
        %v243 = vadd.f32 0.0, %v242
        %244 = vdwg.mxu0
        %v246 = vunpack.c.l.b16 %v182
        %v247 = vpack.c.b16 %v246, %v199
        %v254 = vunpack.c.l.b16 %v183
        %v255 = vunpack.c.l.b16 %v184
        %v256 = vunpack.c.l.b16 %v185
        %v257 = vunpack.c.l.b16 %v186
        %v258 = vunpack.c.l.b16 %v187
        %v259 = vunpack.c.l.b16 %v188
        %v260 = vpack.c.b16 %v255, %v254
        %v261 = vpack.c.b16 %v257, %v256
        %v262 = vpack.c.b16 %v259, %v258
        %v267 = vsel %vm227, %v247, 0
        %269 = vmatpush.bf16.msra.mxu0 0
        %270 = vmatpush.bf16.msra.mxu0 0
        %271 = vmatpush.bf16.msra.mxu0 0
        %272 = vmatpush.bf16.msra.mxu0 0
        %273 = vmatpush.bf16.msra.mxu0 0
        %274 = vmatpush.bf16.msra.mxu0 %v262
        %275 = vmatpush.bf16.msra.mxu0 %v261
        %276 = vmatpush.bf16.msra.mxu0 %v260
        %277 = vmatmul.bf16.gmra.mxu0 %v267
        %v278 = vpop.f32.mrf.mxu0
        %v279 = vadd.f32 %v241, %v278
        %v280 = vpop.f32.mrf.mxu0
        %v281 = vadd.f32 %v243, %v280
        %282 = vdwg.mxu0
        %v283 = vld [vmem:[%s180] sm:$0xe]
        %s284 = scalar_lea.vmem %s1, 48
        %v285 = vld [vmem:[%s284] sm:$0xf]
        %v286 = vld [vmem:[%s284 + $0x4] sm:$0xf]
        %v287 = vld [vmem:[%s284 + $0x8] sm:$0xf]
        %v288 = vld [vmem:[%s284 + $0xc] sm:$0xf]
        %v289 = vld [vmem:[%s284 + $0x10] sm:$0xf]
        %v290 = vld [vmem:[%s284 + $0x14] sm:$0xf]
        %v292 = vunpack.c.l.b16 %v283
        %v293 = vpack.c.b16 %v200, %v292
        %v294 = vrot.slane %v293, 1
        %v301 = vunpack.c.l.b16 %v285
        %v302 = vunpack.c.l.b16 %v286
        %v303 = vunpack.c.l.b16 %v287
        %v304 = vunpack.c.l.b16 %v288
        %v305 = vunpack.c.l.b16 %v289
        %v306 = vunpack.c.l.b16 %v290
        %v307 = vpack.c.b16 %v302, %v301
        %v308 = vpack.c.b16 %v304, %v303
        %v309 = vpack.c.b16 %v306, %v305
        %v314 = vsel %vm227, %v294, 0
        %316 = vmatpush.bf16.msra.mxu0 0
        %317 = vmatpush.bf16.msra.mxu0 0
        %318 = vmatpush.bf16.msra.mxu0 0
        %319 = vmatpush.bf16.msra.mxu0 0
        %320 = vmatpush.bf16.msra.mxu0 0
        %321 = vmatpush.bf16.msra.mxu0 %v309
        %322 = vmatpush.bf16.msra.mxu0 %v308
        %323 = vmatpush.bf16.msra.mxu0 %v307
        %324 = vmatmul.bf16.gmra.mxu0 %v314
        %v325 = vpop.f32.mrf.mxu0
        %v326 = vadd.f32 0.0, %v325
        %v327 = vpop.f32.mrf.mxu0
        %v328 = vadd.f32 0.0, %v327
        %329 = vdwg.mxu0
        %v330 = vadd.f32 %v279, %v326
        %v331 = vadd.f32 %v281, %v328
        %s332 = sadd.s32 %s173, 1
        %s333 = smul.u32 %s332, 2
        %s334 = smul.addr %s333, 4
        %s335 = scalar_lea.vmem %s165, %s334
        %v336 = vld [vmem:[%s335] sm:$0xf]
        %v337 = vld [vmem:[%s335 + $0x4] sm:$0x7]
        %s338 = scalar_lea.vmem %s1, 72
        %v339 = vld [vmem:[%s338] sm:$0xf]
        %v340 = vld [vmem:[%s338 + $0x4] sm:$0xf]
        %v341 = vld [vmem:[%s338 + $0x8] sm:$0xf]
        %v342 = vld [vmem:[%s338 + $0xc] sm:$0xf]
        %v343 = vld [vmem:[%s338 + $0x10] sm:$0xf]
        %v344 = vld [vmem:[%s338 + $0x14] sm:$0xf]
        %v347 = vunpack.c.l.b16 %v336
        %v348 = vunpack.c.l.b16 %v337
        %v349 = vpack.c.b16 %v348, %v347
        %v356 = vunpack.c.l.b16 %v339
        %v357 = vunpack.c.l.b16 %v340
        %v358 = vunpack.c.l.b16 %v341
        %v359 = vunpack.c.l.b16 %v342
        %v360 = vunpack.c.l.b16 %v343
        %v361 = vunpack.c.l.b16 %v344
        %v362 = vpack.c.b16 %v357, %v356
        %v363 = vpack.c.b16 %v359, %v358
        %v364 = vpack.c.b16 %v361, %v360
        %v369 = vsel %vm227, %v349, 0
        %371 = vmatpush.bf16.msra.mxu0 0
        %372 = vmatpush.bf16.msra.mxu0 0
        %373 = vmatpush.bf16.msra.mxu0 0
        %374 = vmatpush.bf16.msra.mxu0 0
        %375 = vmatpush.bf16.msra.mxu0 0
        %376 = vmatpush.bf16.msra.mxu0 %v364
        %377 = vmatpush.bf16.msra.mxu0 %v363
        %378 = vmatpush.bf16.msra.mxu0 %v362
        %379 = vmatmul.bf16.gmra.mxu0 %v369
        %v380 = vpop.f32.mrf.mxu0
        %v381 = vadd.f32 0.0, %v380
        %v382 = vpop.f32.mrf.mxu0
        %v383 = vadd.f32 0.0, %v382
        %384 = vdwg.mxu0
        %v385 = vadd.f32 %v330, %v381
        %v386 = vadd.f32 %v331, %v383
        %v387 = vld [vmem:[%s335 + $0x4] sm:$0xf]
        %s388 = scalar_lea.vmem %s1, 96
        %v389 = vld [vmem:[%s388] sm:$0xf]
        %v390 = vld [vmem:[%s388 + $0x4] sm:$0xf]
        %v391 = vld [vmem:[%s388 + $0x8] sm:$0xf]
        %v392 = vld [vmem:[%s388 + $0xc] sm:$0xf]
        %v393 = vld [vmem:[%s388 + $0x10] sm:$0xf]
        %v394 = vld [vmem:[%s388 + $0x14] sm:$0xf]
        %v396 = vunpack.c.l.b16 %v387
        %v397 = vpack.c.b16 %v396, %v347
        %v399 = vshrl.u32 %v397, 16
        %v401 = vshll.u32 %v397, 16
        %v403 = vrot.slane %v401, 1
        %v404 = vor.u32 %v399, %v403
        %v411 = vunpack.c.l.b16 %v389
        %v412 = vunpack.c.l.b16 %v390
        %v413 = vunpack.c.l.b16 %v391
        %v414 = vunpack.c.l.b16 %v392
        %v415 = vunpack.c.l.b16 %v393
        %v416 = vunpack.c.l.b16 %v394
        %v417 = vpack.c.b16 %v412, %v411
        %v418 = vpack.c.b16 %v414, %v413
        %v419 = vpack.c.b16 %v416, %v415
        %v424 = vsel %vm227, %v404, 0
        %426 = vmatpush.bf16.msra.mxu0 0
        %427 = vmatpush.bf16.msra.mxu0 0
        %428 = vmatpush.bf16.msra.mxu0 0
        %429 = vmatpush.bf16.msra.mxu0 0
        %430 = vmatpush.bf16.msra.mxu0 0
        %431 = vmatpush.bf16.msra.mxu0 %v419
        %432 = vmatpush.bf16.msra.mxu0 %v418
        %433 = vmatpush.bf16.msra.mxu0 %v417
        %434 = vmatmul.bf16.gmra.mxu0 %v424
        %v435 = vpop.f32.mrf.mxu0
        %v436 = vadd.f32 0.0, %v435
        %v437 = vpop.f32.mrf.mxu0
        %v438 = vadd.f32 0.0, %v437
        %439 = vdwg.mxu0
        %v440 = vadd.f32 %v385, %v436
        %v441 = vadd.f32 %v386, %v438
        %v442 = vld [vmem:[%s335] sm:$0xe]
        %s443 = scalar_lea.vmem %s1, 120
        %v444 = vld [vmem:[%s443] sm:$0xf]
        %v445 = vld [vmem:[%s443 + $0x4] sm:$0xf]
        %v446 = vld [vmem:[%s443 + $0x8] sm:$0xf]
        %v447 = vld [vmem:[%s443 + $0xc] sm:$0xf]
        %v448 = vld [vmem:[%s443 + $0x10] sm:$0xf]
        %v449 = vld [vmem:[%s443 + $0x14] sm:$0xf]
        %v451 = vunpack.c.l.b16 %v442
        %v452 = vpack.c.b16 %v396, %v451
        %v453 = vrot.slane %v452, 1
        %v460 = vunpack.c.l.b16 %v444
        %v461 = vunpack.c.l.b16 %v445
        %v462 = vunpack.c.l.b16 %v446
        %v463 = vunpack.c.l.b16 %v447
        %v464 = vunpack.c.l.b16 %v448
        %v465 = vunpack.c.l.b16 %v449
        %v466 = vpack.c.b16 %v461, %v460
        %v467 = vpack.c.b16 %v463, %v462
        %v468 = vpack.c.b16 %v465, %v464
        %v473 = vsel %vm227, %v453, 0
        %475 = vmatpush.bf16.msra.mxu0 0
        %476 = vmatpush.bf16.msra.mxu0 0
        %477 = vmatpush.bf16.msra.mxu0 0
        %478 = vmatpush.bf16.msra.mxu0 0
        %479 = vmatpush.bf16.msra.mxu0 0
        %480 = vmatpush.bf16.msra.mxu0 %v468
        %481 = vmatpush.bf16.msra.mxu0 %v467
        %482 = vmatpush.bf16.msra.mxu0 %v466
        %483 = vmatmul.bf16.gmra.mxu0 %v473
        %v484 = vpop.f32.mrf.mxu0
        %v485 = vadd.f32 0.0, %v484
        %v486 = vpop.f32.mrf.mxu0
        %v487 = vadd.f32 0.0, %v486
        %488 = vdwg.mxu0
        %v489 = vadd.f32 %v440, %v485
        %v490 = vadd.f32 %v441, %v487
        %s491 = sadd.s32 %s173, 2
        %s492 = smul.u32 %s491, 2
        %s493 = smul.addr %s492, 4
        %s494 = scalar_lea.vmem %s165, %s493
        %v495 = vld [vmem:[%s494] sm:$0xf]
        %v496 = vld [vmem:[%s494 + $0x4] sm:$0x7]
        %s497 = scalar_lea.vmem %s1, 144
        %v498 = vld [vmem:[%s497] sm:$0xf]
        %v499 = vld [vmem:[%s497 + $0x4] sm:$0xf]
        %v500 = vld [vmem:[%s497 + $0x8] sm:$0xf]
        %v501 = vld [vmem:[%s497 + $0xc] sm:$0xf]
        %v502 = vld [vmem:[%s497 + $0x10] sm:$0xf]
        %v503 = vld [vmem:[%s497 + $0x14] sm:$0xf]
        %v506 = vunpack.c.l.b16 %v495
        %v507 = vunpack.c.l.b16 %v496
        %v508 = vpack.c.b16 %v507, %v506
        %v515 = vunpack.c.l.b16 %v498
        %v516 = vunpack.c.l.b16 %v499
        %v517 = vunpack.c.l.b16 %v500
        %v518 = vunpack.c.l.b16 %v501
        %v519 = vunpack.c.l.b16 %v502
        %v520 = vunpack.c.l.b16 %v503
        %v521 = vpack.c.b16 %v516, %v515
        %v522 = vpack.c.b16 %v518, %v517
        %v523 = vpack.c.b16 %v520, %v519
        %v528 = vsel %vm227, %v508, 0
        %530 = vmatpush.bf16.msra.mxu0 0
        %531 = vmatpush.bf16.msra.mxu0 0
        %532 = vmatpush.bf16.msra.mxu0 0
        %533 = vmatpush.bf16.msra.mxu0 0
        %534 = vmatpush.bf16.msra.mxu0 0
        %535 = vmatpush.bf16.msra.mxu0 %v523
        %536 = vmatpush.bf16.msra.mxu0 %v522
        %537 = vmatpush.bf16.msra.mxu0 %v521
        %538 = vmatmul.bf16.gmra.mxu0 %v528
        %v539 = vpop.f32.mrf.mxu0
        %v540 = vadd.f32 0.0, %v539
        %v541 = vpop.f32.mrf.mxu0
        %v542 = vadd.f32 0.0, %v541
        %543 = vdwg.mxu0
        %v544 = vadd.f32 %v489, %v540
        %v545 = vadd.f32 %v490, %v542
        %v546 = vld [vmem:[%s494 + $0x4] sm:$0xf]
        %s547 = scalar_lea.vmem %s1, 168
        %v548 = vld [vmem:[%s547] sm:$0xf]
        %v549 = vld [vmem:[%s547 + $0x4] sm:$0xf]
        %v550 = vld [vmem:[%s547 + $0x8] sm:$0xf]
        %v551 = vld [vmem:[%s547 + $0xc] sm:$0xf]
        %v552 = vld [vmem:[%s547 + $0x10] sm:$0xf]
        %v553 = vld [vmem:[%s547 + $0x14] sm:$0xf]
        %v555 = vunpack.c.l.b16 %v546
        %v556 = vpack.c.b16 %v555, %v506
        %v558 = vshrl.u32 %v556, 16
        %v560 = vshll.u32 %v556, 16
        %v562 = vrot.slane %v560, 1
        %v563 = vor.u32 %v558, %v562
        %v570 = vunpack.c.l.b16 %v548
        %v571 = vunpack.c.l.b16 %v549
        %v572 = vunpack.c.l.b16 %v550
        %v573 = vunpack.c.l.b16 %v551
        %v574 = vunpack.c.l.b16 %v552
        %v575 = vunpack.c.l.b16 %v553
        %v576 = vpack.c.b16 %v571, %v570
        %v577 = vpack.c.b16 %v573, %v572
        %v578 = vpack.c.b16 %v575, %v574
        %v583 = vsel %vm227, %v563, 0
        %585 = vmatpush.bf16.msra.mxu0 0
        %586 = vmatpush.bf16.msra.mxu0 0
        %587 = vmatpush.bf16.msra.mxu0 0
        %588 = vmatpush.bf16.msra.mxu0 0
        %589 = vmatpush.bf16.msra.mxu0 0
        %590 = vmatpush.bf16.msra.mxu0 %v578
        %591 = vmatpush.bf16.msra.mxu0 %v577
        %592 = vmatpush.bf16.msra.mxu0 %v576
        %593 = vmatmul.bf16.gmra.mxu0 %v583
        %v594 = vpop.f32.mrf.mxu0
        %v595 = vadd.f32 0.0, %v594
        %v596 = vpop.f32.mrf.mxu0
        %v597 = vadd.f32 0.0, %v596
        %598 = vdwg.mxu0
        %v599 = vadd.f32 %v544, %v595
        %v600 = vadd.f32 %v545, %v597
        %v601 = vld [vmem:[%s494] sm:$0xe]
        %s602 = scalar_lea.vmem %s1, 192
        %v603 = vld [vmem:[%s602] sm:$0xf]
        %v604 = vld [vmem:[%s602 + $0x4] sm:$0xf]
        %v605 = vld [vmem:[%s602 + $0x8] sm:$0xf]
        %v606 = vld [vmem:[%s602 + $0xc] sm:$0xf]
        %v607 = vld [vmem:[%s602 + $0x10] sm:$0xf]
        %v608 = vld [vmem:[%s602 + $0x14] sm:$0xf]
        %v610 = vunpack.c.l.b16 %v601
        %v611 = vpack.c.b16 %v555, %v610
        %v612 = vrot.slane %v611, 1
        %v619 = vunpack.c.l.b16 %v603
        %v620 = vunpack.c.l.b16 %v604
        %v621 = vunpack.c.l.b16 %v605
        %v622 = vunpack.c.l.b16 %v606
        %v623 = vunpack.c.l.b16 %v607
        %v624 = vunpack.c.l.b16 %v608
        %v625 = vpack.c.b16 %v620, %v619
        %v626 = vpack.c.b16 %v622, %v621
        %v627 = vpack.c.b16 %v624, %v623
        %v632 = vsel %vm227, %v612, 0
        %634 = vmatpush.bf16.msra.mxu0 0
        %635 = vmatpush.bf16.msra.mxu0 0
        %636 = vmatpush.bf16.msra.mxu0 0
        %637 = vmatpush.bf16.msra.mxu0 0
        %638 = vmatpush.bf16.msra.mxu0 0
        %639 = vmatpush.bf16.msra.mxu0 %v627
        %640 = vmatpush.bf16.msra.mxu0 %v626
        %641 = vmatpush.bf16.msra.mxu0 %v625
        %642 = vmatmul.bf16.gmra.mxu0 %v632
        %v643 = vpop.f32.mrf.mxu0
        %v644 = vadd.f32 0.0, %v643
        %v645 = vpop.f32.mrf.mxu0
        %v646 = vadd.f32 0.0, %v645
        %647 = vdwg.mxu0
        %v648 = vadd.f32 %v599, %v644
        %v649 = vadd.f32 %v600, %v646
        %v650 = vld [vmem:[%s2] sm:$0x1]
        %v652 = vperm.slane %v650, 0
        %v654 = vadd.f32 %v648, %v652
        %v655 = vadd.f32 %v649, %v652
        %v656 = vmax.f32 %v654, 0.0
        %v657 = vmax.f32 %v655, 0.0
        %v658 = vpack.c.bf16 %v656, %v656
        %v659 = vpack.c.bf16 %v657, %v657
        %s660 = smul.addr %s178, 4
        %s661 = scalar_lea.vmem %s170, %s660
        %vm662 = vcmask 125952
        %663 = vst.msk [vmem:[%s661] sm:$0xf] %vm662, %v658
        %vm664 = vcmask 124928
        %665 = vst.msk [vmem:[%s661 + $0x4] sm:$0x7] %vm664, %v659
      $region37: #{boundary_head_forward.5} parent=31 // loop_footer
        %s177 = sadd.s32 1, %s173
      $region38: #{boundary_head_forward.5} parent=31 // loop_footer_branch
        %172 = sbr.rel target = $region34
      $region39: #{boundary_head_forward.5} parent=31 // loop_exit
        _
      %p666 = scmp.lt.s32.totalorder %s14, 1
      %s667 = scalar_select %p666, %s14, 1
      %s668 = smul.addr %s667, 28
      %s669 = smul.addr %s668, 4
      %s670 = scalar_lea.vmem %s3, %s669
      // Predicated region
      $region40: #{boundary_head_forward.5} parent=31 // pred_check
        %p671 = pneg %p100
      $region41: #{boundary_head_forward.5} parent=31 // pred_check_branch
        %673 = sbr.rel (%p671) target = $region43
      $region42: #{boundary_head_forward.5} parent=31 // pred_region
        _
      $region43: #{boundary_head_forward.5} parent=31 // pred_fallthru
        _
    $region32: #{boundary_head_forward.5} parent=5 // pred_fallthru
      _
    %p674 = scmp.le.s32.totalorder 2, %s9
    // Predicated region
    $region44: #{boundary_head_forward.5} parent=5 // pred_check
      %p675 = pneg %p674
    $region45: #{boundary_head_forward.5} parent=5 // pred_check_branch
      %677 = sbr.rel (%p675) target = $region47
    $region46: #{boundary_head_forward.5} parent=5 // pred_region
      %s678 = ssub.s32 %s9, 2
      // Predicated region
      $region48: #{boundary_head_forward.5} parent=46 // pred_check
        %p679 = pneg %p106
      $region49: #{boundary_head_forward.5} parent=46 // pred_check_branch
        %681 = sbr.rel (%p679) target = $region51
      $region50: #{boundary_head_forward.5} parent=46 // pred_region
        %p682 = scmp.lt.s32.totalorder %s15, 1
        %s683 = scalar_select %p682, %s15, 1
        %s684 = smul.addr %s683, 28
        %s685 = smul.addr %s684, 4
        %s686 = scalar_lea.vmem %s3, %s685
      $region51: #{boundary_head_forward.5} parent=46 // pred_fallthru
        _
    $region47: #{boundary_head_forward.5} parent=5 // pred_fallthru
      _
  $region6: #{boundary_head_forward.5} parent=0 // loop_footer
    %s13 = sadd.s32 1, %s9
  $region7: #{boundary_head_forward.5} parent=0 // loop_footer_branch
    %8 = sbr.rel target = $region3
  $region8: #{boundary_head_forward.5} parent=0 // loop_exit
    _

// kernel: boundary_head_forward.6
$region0: #{boundary_head_forward.6}
  #allocation0 [shape = 'u32[]', space=smem, size = 0x4, offset = 0x4, fixed_abs, tag = 'smem constant byte address 0x4 - core index']
  #allocation1 [shape = 'u32[72,128]{1,0:T(1,128)}', space=vmem, size = 0x9000, scoped, tag = 'internal scratch']
  %s0 = inlined_call_operand.vmem [shape: bf16[2,12,12,96], index: 0, kind: input, shape index: {}]
  %s1 = inlined_call_operand.vmem [shape: bf16[9,96,16], index: 1, kind: input, shape index: {}]
  %s2 = inlined_call_operand.vmem [shape: f32[1,16], index: 2, kind: input, shape index: {}]
  %s3 = inlined_call_operand.vmem [shape: bf16[2,10,10,16], index: 3, kind: output, shape index: {}]
  %s4 = sld [smem:[#allocation0]]
  $region52: #{boundary_head_forward.6} parent=0
    _
  %s6 = ssub.s32 1, %s4
  %s7 = scalar_select 0, %s6, %s4
  loop: start=0, step=1, limit=4
  $region2: #{boundary_head_forward.6} parent=0 // loop_pre_header
    _
  $region3: #{boundary_head_forward.6} parent=0 // loop_header
    %s9 = sphi 0, %s13
    %p10 = scmp.ge.s32.totalorder %s9, 4
    %s19 = sphi 0, %s21
    %s22 = sphi 0, %s19
    %s23 = sphi 0, %s22
    %s39 = sphi 0, %s23
    %s43 = sphi 0, %s43
    %s45 = sphi 0, %s43
    %s46 = sphi 0, %s45
    %s60 = sphi 0, %s46
    %s64 = sphi 0, %s64
    %s66 = sphi 0, %s64
    %s67 = sphi 0, %s66
    %s81 = sphi 0, %s67
    %s87 = sphi 0, %s89
    %s90 = sphi 0, %s87
    %s91 = sphi 0, %s90
    %s107 = sphi 0, %s91
  $region4: #{boundary_head_forward.6} parent=0 // loop_header_branch
    %12 = sbr.rel (%p10) target = $region8
  $region5: #{boundary_head_forward.6} parent=0 // loop_body
    %s14 = ssub.s32 %s9, 1
    %s15 = ssub.s32 %s9, 2
    %s16 = sadd.s32 %s9, 1
    %s17 = ssub.s32 %s9, %s16
    %p18 = scmp.eq.s32.totalorder %s17, 0
    %s20 = sadd.s32 %s19, 1
    %s21 = scalar_select %p18, %s19, %s20
    %p24 = pneg %p18
    %p25 = scmp.eq.s32.totalorder %s9, 1
    %p26 = por %p24, %p25
    %p27 = scmp.ne.s32.totalorder %s19, %s22
    %p28 = scmp.eq.s32.totalorder %s9, 0
    %p29 = por %p27, %p28
    %p30 = scmp.ne.s32.totalorder %s19, %s22
    %p31 = scmp.eq.s32.totalorder %s14, 1
    %p32 = por %p30, %p31
    %p33 = scmp.ne.s32.totalorder %s22, %s23
    %p34 = scmp.eq.s32.totalorder %s14, 0
    %p35 = por %p33, %p34
    %p36 = scmp.ne.s32.totalorder %s22, %s23
    %p37 = scmp.eq.s32.totalorder %s15, 1
    %p38 = por %p36, %p37
    %p40 = scmp.ne.s32.totalorder %s23, %s39
    %p41 = scmp.eq.s32.totalorder %s15, 0
    %p42 = por %p40, %p41
    %s44 = sadd.s32 %s43, 1
    %p47 = scmp.eq.s32.totalorder %s9, 1
    %p48 = scmp.ne.s32.totalorder %s43, %s45
    %p49 = scmp.eq.s32.totalorder %s9, 0
    %p50 = por %p48, %p49
    %p51 = scmp.ne.s32.totalorder %s43, %s45
    %p52 = scmp.eq.s32.totalorder %s14, 1
    %p53 = por %p51, %p52
    %p54 = scmp.ne.s32.totalorder %s45, %s46
    %p55 = scmp.eq.s32.totalorder %s14, 0
    %p56 = por %p54, %p55
    %p57 = scmp.ne.s32.totalorder %s45, %s46
    %p58 = scmp.eq.s32.totalorder %s15, 1
    %p59 = por %p57, %p58
    %p61 = scmp.ne.s32.totalorder %s46, %s60
    %p62 = scmp.eq.s32.totalorder %s15, 0
    %p63 = por %p61, %p62
    %s65 = sadd.s32 %s64, 1
    %p68 = scmp.eq.s32.totalorder %s9, 1
    %p69 = scmp.ne.s32.totalorder %s64, %s66
    %p70 = scmp.eq.s32.totalorder %s9, 0
    %p71 = por %p69, %p70
    %p72 = scmp.ne.s32.totalorder %s64, %s66
    %p73 = scmp.eq.s32.totalorder %s14, 1
    %p74 = por %p72, %p73
    %p75 = scmp.ne.s32.totalorder %s66, %s67
    %p76 = scmp.eq.s32.totalorder %s14, 0
    %p77 = por %p75, %p76
    %p78 = scmp.ne.s32.totalorder %s66, %s67
    %p79 = scmp.eq.s32.totalorder %s15, 1
    %p80 = por %p78, %p79
    %p82 = scmp.ne.s32.totalorder %s67, %s81
    %p83 = scmp.eq.s32.totalorder %s15, 0
    %p84 = por %p82, %p83
    %s85 = ssub.s32 %s9, %s16
    %p86 = scmp.eq.s32.totalorder %s85, 0
    %s88 = sadd.s32 %s87, 1
    %s89 = scalar_select %p86, %s87, %s88
    %p92 = pneg %p86
    %p93 = scmp.eq.s32.totalorder %s9, 1
    %p94 = por %p92, %p93
    %p95 = scmp.ne.s32.totalorder %s87, %s90
    %p96 = scmp.eq.s32.totalorder %s9, 0
    %p97 = por %p95, %p96
    %p98 = scmp.ne.s32.totalorder %s87, %s90
    %p99 = scmp.eq.s32.totalorder %s14, 1
    %p100 = por %p98, %p99
    %p101 = scmp.ne.s32.totalorder %s90, %s91
    %p102 = scmp.eq.s32.totalorder %s14, 0
    %p103 = por %p101, %p102
    %p104 = scmp.ne.s32.totalorder %s90, %s91
    %p105 = scmp.eq.s32.totalorder %s15, 1
    %p106 = por %p104, %p105
    %p108 = scmp.ne.s32.totalorder %s91, %s107
    %p109 = scmp.eq.s32.totalorder %s15, 0
    %p110 = por %p108, %p109
    %p111 = scmp.le.s32.totalorder 1, %s9
    %p112 = scmp.lt.s32.totalorder %s9, 3
    %p113 = pnand %p111, %p112
    %p114 = pneg %p113
    // Predicated region
    $region9: #{boundary_head_forward.6} parent=5 // pred_check
      _
    $region10: #{boundary_head_forward.6} parent=5 // pred_check_branch
      %116 = sbr.rel (%p113) target = $region12
    $region11: #{boundary_head_forward.6} parent=5 // pred_region
      %s117 = ssub.s32 %s9, 1
      // Predicated region
      $region13: #{boundary_head_forward.6} parent=11 // pred_check
        %p118 = pneg %p56
      $region14: #{boundary_head_forward.6} parent=11 // pred_check_branch
        %120 = sbr.rel (%p118) target = $region16
      $region15: #{boundary_head_forward.6} parent=11 // pred_region
        _
      $region16: #{boundary_head_forward.6} parent=11 // pred_fallthru
        _
      // Predicated region
      $region17: #{boundary_head_forward.6} parent=11 // pred_check
        %p121 = pneg %p77
      $region18: #{boundary_head_forward.6} parent=11 // pred_check_branch
        %123 = sbr.rel (%p121) target = $region20
      $region19: #{boundary_head_forward.6} parent=11 // pred_region
        _
      $region20: #{boundary_head_forward.6} parent=11 // pred_fallthru
        _
    $region12: #{boundary_head_forward.6} parent=5 // pred_fallthru
      _
    %p124 = scmp.lt.s32.totalorder %s9, 2
    // Predicated region
    $region21: #{boundary_head_forward.6} parent=5 // pred_check
      %p125 = pneg %p124
    $region22: #{boundary_head_forward.6} parent=5 // pred_check_branch
      %127 = sbr.rel (%p125) target = $region24
    $region23: #{boundary_head_forward.6} parent=5 // pred_region
      // Predicated region
      $region25: #{boundary_head_forward.6} parent=23 // pred_check
        %p128 = pneg %p29
      $region26: #{boundary_head_forward.6} parent=23 // pred_check_branch
        %130 = sbr.rel (%p128) target = $region28
      $region27: #{boundary_head_forward.6} parent=23 // pred_region
        %p131 = scmp.lt.s32.totalorder %s9, 1
        %s132 = scalar_select %p131, %s9, 1
        %s133 = smul.addr %s132, 24
        %s134 = smul.addr %s133, 4
        %s135 = scalar_lea.vmem %s0, %s134
      $region28: #{boundary_head_forward.6} parent=23 // pred_fallthru
        _
    $region24: #{boundary_head_forward.6} parent=5 // pred_fallthru
      _
    %p136 = scmp.le.s32.totalorder 1, %s9
    %p137 = scmp.lt.s32.totalorder %s9, 3
    %p138 = pnand %p136, %p137
    %p139 = pneg %p138
    // Predicated region
    $region29: #{boundary_head_forward.6} parent=5 // pred_check
      _
    $region30: #{boundary_head_forward.6} parent=5 // pred_check_branch
      %141 = sbr.rel (%p138) target = $region32
    $region31: #{boundary_head_forward.6} parent=5 // pred_region
      %s142 = ssub.s32 %s9, 1
      %p143 = scmp.lt.s32.totalorder %s14, 1
      %s144 = scalar_select %p143, %s14, 1
      %s145 = smul.addr %s144, 24
      %s146 = smul.addr %s145, 4
      %s147 = scalar_lea.vmem %s0, %s146
      %p148 = pneg %p35
      %p149 = pneg %p32
      %p150 = pneg %p56
      %p151 = pneg %p53
      %p152 = pneg %p77
      %p153 = pneg %p74
      %p154 = pneg %p103
      %p155 = pneg %p100
      %p156 = scmp.lt.s32.totalorder %s14, 1
      %s157 = scalar_select %p156, %s14, 1
      %s158 = smul.addr %s157, 20
      %s159 = smul.addr %s158, 4
      %s160 = scalar_lea.vmem %s3, %s159
      %p161 = scmp.lt.s32.totalorder %s14, 1
      %s162 = scalar_select %p161, %s14, 1
      %s163 = smul.addr %s162, 24
      %s164 = smul.addr %s163, 4
      %s165 = scalar_lea.vmem %s0, %s164
      %p166 = scmp.lt.s32.totalorder %s14, 1
      %s167 = scalar_select %p166, %s14, 1
      %s168 = smul.addr %s167, 20
      %s169 = smul.addr %s168, 4
      %s170 = scalar_lea.vmem %s3, %s169
      loop: start=0, step=1, limit=10
      $region33: #{boundary_head_forward.6} parent=31 // loop_pre_header
        _
      $region34: #{boundary_head_forward.6} parent=31 // loop_header
        %s173 = sphi 0, %s177
        %p174 = scmp.ge.s32.totalorder %s173, 10
      $region35: #{boundary_head_forward.6} parent=31 // loop_header_branch
        %176 = sbr.rel (%p174) target = $region39
      $region36: #{boundary_head_forward.6} parent=31 // loop_body
        %s178 = smul.u32 %s173, 2
        %s179 = smul.addr %s178, 4
        %s180 = scalar_lea.vmem %s165, %s179
        %v181 = vld [vmem:[%s180] sm:$0xf]
        %v182 = vld [vmem:[%s180 + $0x4] sm:$0x1]
        %v183 = vld [vmem:[%s1] sm:$0xf]
        %v184 = vld [vmem:[%s1 + $0x4] sm:$0xf]
        %v185 = vld [vmem:[%s1 + $0x8] sm:$0xf]
        %v186 = vld [vmem:[%s1 + $0xc] sm:$0xf]
        %v187 = vld [vmem:[%s1 + $0x10] sm:$0xf]
        %v188 = vld [vmem:[%s1 + $0x14] sm:$0xf]
        %v189 = vld [vmem:[%s1 + $0x18] sm:$0xf]
        %v190 = vld [vmem:[%s1 + $0x1c] sm:$0xf]
        %v191 = vld [vmem:[%s1 + $0x20] sm:$0xf]
        %v192 = vld [vmem:[%s1 + $0x24] sm:$0xf]
        %v193 = vld [vmem:[%s1 + $0x28] sm:$0xf]
        %v194 = vld [vmem:[%s1 + $0x2c] sm:$0xf]
        %v195 = vld [vmem:[%s180 + $0x4] sm:$0x3]
        %s196 = scalar_lea.vmem %s1, 48
        %v197 = vld [vmem:[%s196] sm:$0xf]
        %v198 = vld [vmem:[%s196 + $0x4] sm:$0xf]
        %v199 = vld [vmem:[%s196 + $0x8] sm:$0xf]
        %v200 = vld [vmem:[%s196 + $0xc] sm:$0xf]
        %v201 = vld [vmem:[%s196 + $0x10] sm:$0xf]
        %v202 = vld [vmem:[%s196 + $0x14] sm:$0xf]
        %v203 = vld [vmem:[%s196 + $0x18] sm:$0xf]
        %v204 = vld [vmem:[%s196 + $0x1c] sm:$0xf]
        %v205 = vld [vmem:[%s196 + $0x20] sm:$0xf]
        %v206 = vld [vmem:[%s196 + $0x24] sm:$0xf]
        %v207 = vld [vmem:[%s196 + $0x28] sm:$0xf]
        %v208 = vld [vmem:[%s196 + $0x2c] sm:$0xf]
        %v211 = vunpack.c.l.b16 %v181
        %v212 = vunpack.c.l.b16 %v195
        %v213 = vpack.c.b16 %v212, %v211
        %v215 = vshrl.u32 %v213, 16
        %v217 = vshll.u32 %v213, 16
        %v219 = vrot.slane %v217, 1
        %v220 = vor.u32 %v215, %v219
        %v233 = vunpack.c.l.b16 %v197
        %v234 = vunpack.c.l.b16 %v198
        %v235 = vunpack.c.l.b16 %v199
        %v236 = vunpack.c.l.b16 %v200
        %v237 = vunpack.c.l.b16 %v201
        %v238 = vunpack.c.l.b16 %v202
        %v239 = vunpack.c.l.b16 %v203
        %v240 = vunpack.c.l.b16 %v204
        %v241 = vunpack.c.l.b16 %v205
        %v242 = vunpack.c.l.b16 %v206
        %v243 = vunpack.c.l.b16 %v207
        %v244 = vunpack.c.l.b16 %v208
        %v245 = vpack.c.b16 %v234, %v233
        %v246 = vpack.c.b16 %v236, %v235
        %v247 = vpack.c.b16 %v238, %v237
        %v248 = vpack.c.b16 %v240, %v239
        %v249 = vpack.c.b16 %v242, %v241
        %v250 = vpack.c.b16 %v244, %v243
        %vm257 = vcmask 785408
        %v259 = vsel %vm257, %v220, 0
        %261 = vmatpush.bf16.msra.mxu0 0
        %262 = vmatpush.bf16.msra.mxu0 0
        %263 = vmatpush.bf16.msra.mxu0 %v250
        %264 = vmatpush.bf16.msra.mxu0 %v249
        %265 = vmatpush.bf16.msra.mxu0 %v248
        %266 = vmatpush.bf16.msra.mxu0 %v247
        %267 = vmatpush.bf16.msra.mxu0 %v246
        %268 = vmatpush.bf16.msra.mxu0 %v245
        %269 = vmatmul.bf16.gmra.mxu0 %v259
        %v270 = vpop.f32.mrf.mxu0
        %v271 = vadd.f32 0.0, %v270
        %v272 = vpop.f32.mrf.mxu0
        %v273 = vadd.f32 0.0, %v272
        %274 = vdwg.mxu0
        %v276 = vunpack.c.l.b16 %v182
        %v277 = vpack.c.b16 %v276, %v211
        %v290 = vunpack.c.l.b16 %v183
        %v291 = vunpack.c.l.b16 %v184
        %v292 = vunpack.c.l.b16 %v185
        %v293 = vunpack.c.l.b16 %v186
        %v294 = vunpack.c.l.b16 %v187
        %v295 = vunpack.c.l.b16 %v188
        %v296 = vunpack.c.l.b16 %v189
        %v297 = vunpack.c.l.b16 %v190
        %v298 = vunpack.c.l.b16 %v191
        %v299 = vunpack.c.l.b16 %v192
        %v300 = vunpack.c.l.b16 %v193
        %v301 = vunpack.c.l.b16 %v194
        %v302 = vpack.c.b16 %v291, %v290
        %v303 = vpack.c.b16 %v293, %v292
        %v304 = vpack.c.b16 %v295, %v294
        %v305 = vpack.c.b16 %v297, %v296
        %v306 = vpack.c.b16 %v299, %v298
        %v307 = vpack.c.b16 %v301, %v300
        %v315 = vsel %vm257, %v277, 0
        %317 = vmatpush.bf16.msra.mxu0 0
        %318 = vmatpush.bf16.msra.mxu0 0
        %319 = vmatpush.bf16.msra.mxu0 %v307
        %320 = vmatpush.bf16.msra.mxu0 %v306
        %321 = vmatpush.bf16.msra.mxu0 %v305
        %322 = vmatpush.bf16.msra.mxu0 %v304
        %323 = vmatpush.bf16.msra.mxu0 %v303
        %324 = vmatpush.bf16.msra.mxu0 %v302
        %325 = vmatmul.bf16.gmra.mxu0 %v315
        %v326 = vpop.f32.mrf.mxu0
        %v327 = vadd.f32 %v271, %v326
        %v328 = vpop.f32.mrf.mxu0
        %v329 = vadd.f32 %v273, %v328
        %330 = vdwg.mxu0
        %v331 = vld [vmem:[%s180] sm:$0xe]
        %s332 = scalar_lea.vmem %s1, 96
        %v333 = vld [vmem:[%s332] sm:$0xf]
        %v334 = vld [vmem:[%s332 + $0x4] sm:$0xf]
        %v335 = vld [vmem:[%s332 + $0x8] sm:$0xf]
        %v336 = vld [vmem:[%s332 + $0xc] sm:$0xf]
        %v337 = vld [vmem:[%s332 + $0x10] sm:$0xf]
        %v338 = vld [vmem:[%s332 + $0x14] sm:$0xf]
        %v339 = vld [vmem:[%s332 + $0x18] sm:$0xf]
        %v340 = vld [vmem:[%s332 + $0x1c] sm:$0xf]
        %v341 = vld [vmem:[%s332 + $0x20] sm:$0xf]
        %v342 = vld [vmem:[%s332 + $0x24] sm:$0xf]
        %v343 = vld [vmem:[%s332 + $0x28] sm:$0xf]
        %v344 = vld [vmem:[%s332 + $0x2c] sm:$0xf]
        %v346 = vunpack.c.l.b16 %v331
        %v347 = vpack.c.b16 %v212, %v346
        %v348 = vrot.slane %v347, 1
        %v361 = vunpack.c.l.b16 %v333
        %v362 = vunpack.c.l.b16 %v334
        %v363 = vunpack.c.l.b16 %v335
        %v364 = vunpack.c.l.b16 %v336
        %v365 = vunpack.c.l.b16 %v337
        %v366 = vunpack.c.l.b16 %v338
        %v367 = vunpack.c.l.b16 %v339
        %v368 = vunpack.c.l.b16 %v340
        %v369 = vunpack.c.l.b16 %v341
        %v370 = vunpack.c.l.b16 %v342
        %v371 = vunpack.c.l.b16 %v343
        %v372 = vunpack.c.l.b16 %v344
        %v373 = vpack.c.b16 %v362, %v361
        %v374 = vpack.c.b16 %v364, %v363
        %v375 = vpack.c.b16 %v366, %v365
        %v376 = vpack.c.b16 %v368, %v367
        %v377 = vpack.c.b16 %v370, %v369
        %v378 = vpack.c.b16 %v372, %v371
        %v386 = vsel %vm257, %v348, 0
        %388 = vmatpush.bf16.msra.mxu0 0
        %389 = vmatpush.bf16.msra.mxu0 0
        %390 = vmatpush.bf16.msra.mxu0 %v378
        %391 = vmatpush.bf16.msra.mxu0 %v377
        %392 = vmatpush.bf16.msra.mxu0 %v376
        %393 = vmatpush.bf16.msra.mxu0 %v375
        %394 = vmatpush.bf16.msra.mxu0 %v374
        %395 = vmatpush.bf16.msra.mxu0 %v373
        %396 = vmatmul.bf16.gmra.mxu0 %v386
        %v397 = vpop.f32.mrf.mxu0
        %v398 = vadd.f32 0.0, %v397
        %v399 = vpop.f32.mrf.mxu0
        %v400 = vadd.f32 0.0, %v399
        %401 = vdwg.mxu0
        %v402 = vadd.f32 %v327, %v398
        %v403 = vadd.f32 %v329, %v400
        %s404 = sadd.s32 %s173, 1
        %s405 = smul.u32 %s404, 2
        %s406 = smul.addr %s405, 4
        %s407 = scalar_lea.vmem %s165, %s406
        %v408 = vld [vmem:[%s407] sm:$0xf]
        %v409 = vld [vmem:[%s407 + $0x4] sm:$0x1]
        %s410 = scalar_lea.vmem %s1, 144
        %v411 = vld [vmem:[%s410] sm:$0xf]
        %v412 = vld [vmem:[%s410 + $0x4] sm:$0xf]
        %v413 = vld [vmem:[%s410 + $0x8] sm:$0xf]
        %v414 = vld [vmem:[%s410 + $0xc] sm:$0xf]
        %v415 = vld [vmem:[%s410 + $0x10] sm:$0xf]
        %v416 = vld [vmem:[%s410 + $0x14] sm:$0xf]
        %v417 = vld [vmem:[%s410 + $0x18] sm:$0xf]
        %v418 = vld [vmem:[%s410 + $0x1c] sm:$0xf]
        %v419 = vld [vmem:[%s410 + $0x20] sm:$0xf]
        %v420 = vld [vmem:[%s410 + $0x24] sm:$0xf]
        %v421 = vld [vmem:[%s410 + $0x28] sm:$0xf]
        %v422 = vld [vmem:[%s410 + $0x2c] sm:$0xf]
        %v425 = vunpack.c.l.b16 %v408
        %v426 = vunpack.c.l.b16 %v409
        %v427 = vpack.c.b16 %v426, %v425
        %v440 = vunpack.c.l.b16 %v411
        %v441 = vunpack.c.l.b16 %v412
        %v442 = vunpack.c.l.b16 %v413
        %v443 = vunpack.c.l.b16 %v414
        %v444 = vunpack.c.l.b16 %v415
        %v445 = vunpack.c.l.b16 %v416
        %v446 = vunpack.c.l.b16 %v417
        %v447 = vunpack.c.l.b16 %v418
        %v448 = vunpack.c.l.b16 %v419
        %v449 = vunpack.c.l.b16 %v420
        %v450 = vunpack.c.l.b16 %v421
        %v451 = vunpack.c.l.b16 %v422
        %v452 = vpack.c.b16 %v441, %v440
        %v453 = vpack.c.b16 %v443, %v442
        %v454 = vpack.c.b16 %v445, %v444
        %v455 = vpack.c.b16 %v447, %v446
        %v456 = vpack.c.b16 %v449, %v448
        %v457 = vpack.c.b16 %v451, %v450
        %v465 = vsel %vm257, %v427, 0
        %467 = vmatpush.bf16.msra.mxu0 0
        %468 = vmatpush.bf16.msra.mxu0 0
        %469 = vmatpush.bf16.msra.mxu0 %v457
        %470 = vmatpush.bf16.msra.mxu0 %v456
        %471 = vmatpush.bf16.msra.mxu0 %v455
        %472 = vmatpush.bf16.msra.mxu0 %v454
        %473 = vmatpush.bf16.msra.mxu0 %v453
        %474 = vmatpush.bf16.msra.mxu0 %v452
        %475 = vmatmul.bf16.gmra.mxu0 %v465
        %v476 = vpop.f32.mrf.mxu0
        %v477 = vadd.f32 0.0, %v476
        %v478 = vpop.f32.mrf.mxu0
        %v479 = vadd.f32 0.0, %v478
        %480 = vdwg.mxu0
        %v481 = vadd.f32 %v402, %v477
        %v482 = vadd.f32 %v403, %v479
        %v483 = vld [vmem:[%s407 + $0x4] sm:$0x3]
        %s484 = scalar_lea.vmem %s1, 192
        %v485 = vld [vmem:[%s484] sm:$0xf]
        %v486 = vld [vmem:[%s484 + $0x4] sm:$0xf]
        %v487 = vld [vmem:[%s484 + $0x8] sm:$0xf]
        %v488 = vld [vmem:[%s484 + $0xc] sm:$0xf]
        %v489 = vld [vmem:[%s484 + $0x10] sm:$0xf]
        %v490 = vld [vmem:[%s484 + $0x14] sm:$0xf]
        %v491 = vld [vmem:[%s484 + $0x18] sm:$0xf]
        %v492 = vld [vmem:[%s484 + $0x1c] sm:$0xf]
        %v493 = vld [vmem:[%s484 + $0x20] sm:$0xf]
        %v494 = vld [vmem:[%s484 + $0x24] sm:$0xf]
        %v495 = vld [vmem:[%s484 + $0x28] sm:$0xf]
        %v496 = vld [vmem:[%s484 + $0x2c] sm:$0xf]
        %v498 = vunpack.c.l.b16 %v483
        %v499 = vpack.c.b16 %v498, %v425
        %v501 = vshrl.u32 %v499, 16
        %v503 = vshll.u32 %v499, 16
        %v505 = vrot.slane %v503, 1
        %v506 = vor.u32 %v501, %v505
        %v519 = vunpack.c.l.b16 %v485
        %v520 = vunpack.c.l.b16 %v486
        %v521 = vunpack.c.l.b16 %v487
        %v522 = vunpack.c.l.b16 %v488
        %v523 = vunpack.c.l.b16 %v489
        %v524 = vunpack.c.l.b16 %v490
        %v525 = vunpack.c.l.b16 %v491
        %v526 = vunpack.c.l.b16 %v492
        %v527 = vunpack.c.l.b16 %v493
        %v528 = vunpack.c.l.b16 %v494
        %v529 = vunpack.c.l.b16 %v495
        %v530 = vunpack.c.l.b16 %v496
        %v531 = vpack.c.b16 %v520, %v519
        %v532 = vpack.c.b16 %v522, %v521
        %v533 = vpack.c.b16 %v524, %v523
        %v534 = vpack.c.b16 %v526, %v525
        %v535 = vpack.c.b16 %v528, %v527
        %v536 = vpack.c.b16 %v530, %v529
        %v544 = vsel %vm257, %v506, 0
        %546 = vmatpush.bf16.msra.mxu0 0
        %547 = vmatpush.bf16.msra.mxu0 0
        %548 = vmatpush.bf16.msra.mxu0 %v536
        %549 = vmatpush.bf16.msra.mxu0 %v535
        %550 = vmatpush.bf16.msra.mxu0 %v534
        %551 = vmatpush.bf16.msra.mxu0 %v533
        %552 = vmatpush.bf16.msra.mxu0 %v532
        %553 = vmatpush.bf16.msra.mxu0 %v531
        %554 = vmatmul.bf16.gmra.mxu0 %v544
        %v555 = vpop.f32.mrf.mxu0
        %v556 = vadd.f32 0.0, %v555
        %v557 = vpop.f32.mrf.mxu0
        %v558 = vadd.f32 0.0, %v557
        %559 = vdwg.mxu0
        %v560 = vadd.f32 %v481, %v556
        %v561 = vadd.f32 %v482, %v558
        %v562 = vld [vmem:[%s407] sm:$0xe]
        %s563 = scalar_lea.vmem %s1, 240
        %v564 = vld [vmem:[%s563] sm:$0xf]
        %v565 = vld [vmem:[%s563 + $0x4] sm:$0xf]
        %v566 = vld [vmem:[%s563 + $0x8] sm:$0xf]
        %v567 = vld [vmem:[%s563 + $0xc] sm:$0xf]
        %v568 = vld [vmem:[%s563 + $0x10] sm:$0xf]
        %v569 = vld [vmem:[%s563 + $0x14] sm:$0xf]
        %v570 = vld [vmem:[%s563 + $0x18] sm:$0xf]
        %v571 = vld [vmem:[%s563 + $0x1c] sm:$0xf]
        %v572 = vld [vmem:[%s563 + $0x20] sm:$0xf]
        %v573 = vld [vmem:[%s563 + $0x24] sm:$0xf]
        %v574 = vld [vmem:[%s563 + $0x28] sm:$0xf]
        %v575 = vld [vmem:[%s563 + $0x2c] sm:$0xf]
        %v577 = vunpack.c.l.b16 %v562
        %v578 = vpack.c.b16 %v498, %v577
        %v579 = vrot.slane %v578, 1
        %v592 = vunpack.c.l.b16 %v564
        %v593 = vunpack.c.l.b16 %v565
        %v594 = vunpack.c.l.b16 %v566
        %v595 = vunpack.c.l.b16 %v567
        %v596 = vunpack.c.l.b16 %v568
        %v597 = vunpack.c.l.b16 %v569
        %v598 = vunpack.c.l.b16 %v570
        %v599 = vunpack.c.l.b16 %v571
        %v600 = vunpack.c.l.b16 %v572
        %v601 = vunpack.c.l.b16 %v573
        %v602 = vunpack.c.l.b16 %v574
        %v603 = vunpack.c.l.b16 %v575
        %v604 = vpack.c.b16 %v593, %v592
        %v605 = vpack.c.b16 %v595, %v594
        %v606 = vpack.c.b16 %v597, %v596
        %v607 = vpack.c.b16 %v599, %v598
        %v608 = vpack.c.b16 %v601, %v600
        %v609 = vpack.c.b16 %v603, %v602
        %v617 = vsel %vm257, %v579, 0
        %619 = vmatpush.bf16.msra.mxu0 0
        %620 = vmatpush.bf16.msra.mxu0 0
        %621 = vmatpush.bf16.msra.mxu0 %v609
        %622 = vmatpush.bf16.msra.mxu0 %v608
        %623 = vmatpush.bf16.msra.mxu0 %v607
        %624 = vmatpush.bf16.msra.mxu0 %v606
        %625 = vmatpush.bf16.msra.mxu0 %v605
        %626 = vmatpush.bf16.msra.mxu0 %v604
        %627 = vmatmul.bf16.gmra.mxu0 %v617
        %v628 = vpop.f32.mrf.mxu0
        %v629 = vadd.f32 0.0, %v628
        %v630 = vpop.f32.mrf.mxu0
        %v631 = vadd.f32 0.0, %v630
        %632 = vdwg.mxu0
        %v633 = vadd.f32 %v560, %v629
        %v634 = vadd.f32 %v561, %v631
        %s635 = sadd.s32 %s173, 2
        %s636 = smul.u32 %s635, 2
        %s637 = smul.addr %s636, 4
        %s638 = scalar_lea.vmem %s165, %s637
        %v639 = vld [vmem:[%s638] sm:$0xf]
        %v640 = vld [vmem:[%s638 + $0x4] sm:$0x1]
        %s641 = scalar_lea.vmem %s1, 288
        %v642 = vld [vmem:[%s641] sm:$0xf]
        %v643 = vld [vmem:[%s641 + $0x4] sm:$0xf]
        %v644 = vld [vmem:[%s641 + $0x8] sm:$0xf]
        %v645 = vld [vmem:[%s641 + $0xc] sm:$0xf]
        %v646 = vld [vmem:[%s641 + $0x10] sm:$0xf]
        %v647 = vld [vmem:[%s641 + $0x14] sm:$0xf]
        %v648 = vld [vmem:[%s641 + $0x18] sm:$0xf]
        %v649 = vld [vmem:[%s641 + $0x1c] sm:$0xf]
        %v650 = vld [vmem:[%s641 + $0x20] sm:$0xf]
        %v651 = vld [vmem:[%s641 + $0x24] sm:$0xf]
        %v652 = vld [vmem:[%s641 + $0x28] sm:$0xf]
        %v653 = vld [vmem:[%s641 + $0x2c] sm:$0xf]
        %v656 = vunpack.c.l.b16 %v639
        %v657 = vunpack.c.l.b16 %v640
        %v658 = vpack.c.b16 %v657, %v656
        %v671 = vunpack.c.l.b16 %v642
        %v672 = vunpack.c.l.b16 %v643
        %v673 = vunpack.c.l.b16 %v644
        %v674 = vunpack.c.l.b16 %v645
        %v675 = vunpack.c.l.b16 %v646
        %v676 = vunpack.c.l.b16 %v647
        %v677 = vunpack.c.l.b16 %v648
        %v678 = vunpack.c.l.b16 %v649
        %v679 = vunpack.c.l.b16 %v650
        %v680 = vunpack.c.l.b16 %v651
        %v681 = vunpack.c.l.b16 %v652
        %v682 = vunpack.c.l.b16 %v653
        %v683 = vpack.c.b16 %v672, %v671
        %v684 = vpack.c.b16 %v674, %v673
        %v685 = vpack.c.b16 %v676, %v675
        %v686 = vpack.c.b16 %v678, %v677
        %v687 = vpack.c.b16 %v680, %v679
        %v688 = vpack.c.b16 %v682, %v681
        %v696 = vsel %vm257, %v658, 0
        %698 = vmatpush.bf16.msra.mxu0 0
        %699 = vmatpush.bf16.msra.mxu0 0
        %700 = vmatpush.bf16.msra.mxu0 %v688
        %701 = vmatpush.bf16.msra.mxu0 %v687
        %702 = vmatpush.bf16.msra.mxu0 %v686
        %703 = vmatpush.bf16.msra.mxu0 %v685
        %704 = vmatpush.bf16.msra.mxu0 %v684
        %705 = vmatpush.bf16.msra.mxu0 %v683
        %706 = vmatmul.bf16.gmra.mxu0 %v696
        %v707 = vpop.f32.mrf.mxu0
        %v708 = vadd.f32 0.0, %v707
        %v709 = vpop.f32.mrf.mxu0
        %v710 = vadd.f32 0.0, %v709
        %711 = vdwg.mxu0
        %v712 = vadd.f32 %v633, %v708
        %v713 = vadd.f32 %v634, %v710
        %v714 = vld [vmem:[%s638 + $0x4] sm:$0x3]
        %s715 = scalar_lea.vmem %s1, 336
        %v716 = vld [vmem:[%s715] sm:$0xf]
        %v717 = vld [vmem:[%s715 + $0x4] sm:$0xf]
        %v718 = vld [vmem:[%s715 + $0x8] sm:$0xf]
        %v719 = vld [vmem:[%s715 + $0xc] sm:$0xf]
        %v720 = vld [vmem:[%s715 + $0x10] sm:$0xf]
        %v721 = vld [vmem:[%s715 + $0x14] sm:$0xf]
        %v722 = vld [vmem:[%s715 + $0x18] sm:$0xf]
        %v723 = vld [vmem:[%s715 + $0x1c] sm:$0xf]
        %v724 = vld [vmem:[%s715 + $0x20] sm:$0xf]
        %v725 = vld [vmem:[%s715 + $0x24] sm:$0xf]
        %v726 = vld [vmem:[%s715 + $0x28] sm:$0xf]
        %v727 = vld [vmem:[%s715 + $0x2c] sm:$0xf]
        %v729 = vunpack.c.l.b16 %v714
        %v730 = vpack.c.b16 %v729, %v656
        %v732 = vshrl.u32 %v730, 16
        %v734 = vshll.u32 %v730, 16
        %v736 = vrot.slane %v734, 1
        %v737 = vor.u32 %v732, %v736
        %v750 = vunpack.c.l.b16 %v716
        %v751 = vunpack.c.l.b16 %v717
        %v752 = vunpack.c.l.b16 %v718
        %v753 = vunpack.c.l.b16 %v719
        %v754 = vunpack.c.l.b16 %v720
        %v755 = vunpack.c.l.b16 %v721
        %v756 = vunpack.c.l.b16 %v722
        %v757 = vunpack.c.l.b16 %v723
        %v758 = vunpack.c.l.b16 %v724
        %v759 = vunpack.c.l.b16 %v725
        %v760 = vunpack.c.l.b16 %v726
        %v761 = vunpack.c.l.b16 %v727
        %v762 = vpack.c.b16 %v751, %v750
        %v763 = vpack.c.b16 %v753, %v752
        %v764 = vpack.c.b16 %v755, %v754
        %v765 = vpack.c.b16 %v757, %v756
        %v766 = vpack.c.b16 %v759, %v758
        %v767 = vpack.c.b16 %v761, %v760
        %v775 = vsel %vm257, %v737, 0
        %777 = vmatpush.bf16.msra.mxu0 0
        %778 = vmatpush.bf16.msra.mxu0 0
        %779 = vmatpush.bf16.msra.mxu0 %v767
        %780 = vmatpush.bf16.msra.mxu0 %v766
        %781 = vmatpush.bf16.msra.mxu0 %v765
        %782 = vmatpush.bf16.msra.mxu0 %v764
        %783 = vmatpush.bf16.msra.mxu0 %v763
        %784 = vmatpush.bf16.msra.mxu0 %v762
        %785 = vmatmul.bf16.gmra.mxu0 %v775
        %v786 = vpop.f32.mrf.mxu0
        %v787 = vadd.f32 0.0, %v786
        %v788 = vpop.f32.mrf.mxu0
        %v789 = vadd.f32 0.0, %v788
        %790 = vdwg.mxu0
        %v791 = vadd.f32 %v712, %v787
        %v792 = vadd.f32 %v713, %v789
        %v793 = vld [vmem:[%s638] sm:$0xe]
        %s794 = scalar_lea.vmem %s1, 384
        %v795 = vld [vmem:[%s794] sm:$0xf]
        %v796 = vld [vmem:[%s794 + $0x4] sm:$0xf]
        %v797 = vld [vmem:[%s794 + $0x8] sm:$0xf]
        %v798 = vld [vmem:[%s794 + $0xc] sm:$0xf]
        %v799 = vld [vmem:[%s794 + $0x10] sm:$0xf]
        %v800 = vld [vmem:[%s794 + $0x14] sm:$0xf]
        %v801 = vld [vmem:[%s794 + $0x18] sm:$0xf]
        %v802 = vld [vmem:[%s794 + $0x1c] sm:$0xf]
        %v803 = vld [vmem:[%s794 + $0x20] sm:$0xf]
        %v804 = vld [vmem:[%s794 + $0x24] sm:$0xf]
        %v805 = vld [vmem:[%s794 + $0x28] sm:$0xf]
        %v806 = vld [vmem:[%s794 + $0x2c] sm:$0xf]
        %v808 = vunpack.c.l.b16 %v793
        %v809 = vpack.c.b16 %v729, %v808
        %v810 = vrot.slane %v809, 1
        %v823 = vunpack.c.l.b16 %v795
        %v824 = vunpack.c.l.b16 %v796
        %v825 = vunpack.c.l.b16 %v797
        %v826 = vunpack.c.l.b16 %v798
        %v827 = vunpack.c.l.b16 %v799
        %v828 = vunpack.c.l.b16 %v800
        %v829 = vunpack.c.l.b16 %v801
        %v830 = vunpack.c.l.b16 %v802
        %v831 = vunpack.c.l.b16 %v803
        %v832 = vunpack.c.l.b16 %v804
        %v833 = vunpack.c.l.b16 %v805
        %v834 = vunpack.c.l.b16 %v806
        %v835 = vpack.c.b16 %v824, %v823
        %v836 = vpack.c.b16 %v826, %v825
        %v837 = vpack.c.b16 %v828, %v827
        %v838 = vpack.c.b16 %v830, %v829
        %v839 = vpack.c.b16 %v832, %v831
        %v840 = vpack.c.b16 %v834, %v833
        %v848 = vsel %vm257, %v810, 0
        %850 = vmatpush.bf16.msra.mxu0 0
        %851 = vmatpush.bf16.msra.mxu0 0
        %852 = vmatpush.bf16.msra.mxu0 %v840
        %853 = vmatpush.bf16.msra.mxu0 %v839
        %854 = vmatpush.bf16.msra.mxu0 %v838
        %855 = vmatpush.bf16.msra.mxu0 %v837
        %856 = vmatpush.bf16.msra.mxu0 %v836
        %857 = vmatpush.bf16.msra.mxu0 %v835
        %858 = vmatmul.bf16.gmra.mxu0 %v848
        %v859 = vpop.f32.mrf.mxu0
        %v860 = vadd.f32 0.0, %v859
        %v861 = vpop.f32.mrf.mxu0
        %v862 = vadd.f32 0.0, %v861
        %863 = vdwg.mxu0
        %v864 = vadd.f32 %v791, %v860
        %v865 = vadd.f32 %v792, %v862
        %v866 = vld [vmem:[%s2] sm:$0x1]
        %v868 = vperm.slane %v866, 0
        %v870 = vadd.f32 %v864, %v868
        %v871 = vadd.f32 %v865, %v868
        %v872 = vmax.f32 %v870, 0.0
        %v873 = vmax.f32 %v871, 0.0
        %v874 = vpack.c.bf16 %v872, %v872
        %v875 = vpack.c.bf16 %v873, %v873
        %s876 = smul.addr %s178, 4
        %s877 = scalar_lea.vmem %s170, %s876
        %vm878 = vcmask 125952
        %879 = vst.msk [vmem:[%s877] sm:$0xf] %vm878, %v874
        %vm880 = vcmask 122880
        %881 = vst.msk [vmem:[%s877 + $0x4] sm:$0x1] %vm880, %v875
      $region37: #{boundary_head_forward.6} parent=31 // loop_footer
        %s177 = sadd.s32 1, %s173
      $region38: #{boundary_head_forward.6} parent=31 // loop_footer_branch
        %172 = sbr.rel target = $region34
      $region39: #{boundary_head_forward.6} parent=31 // loop_exit
        _
      %p882 = scmp.lt.s32.totalorder %s14, 1
      %s883 = scalar_select %p882, %s14, 1
      %s884 = smul.addr %s883, 20
      %s885 = smul.addr %s884, 4
      %s886 = scalar_lea.vmem %s3, %s885
      // Predicated region
      $region40: #{boundary_head_forward.6} parent=31 // pred_check
        %p887 = pneg %p100
      $region41: #{boundary_head_forward.6} parent=31 // pred_check_branch
        %889 = sbr.rel (%p887) target = $region43
      $region42: #{boundary_head_forward.6} parent=31 // pred_region
        _
      $region43: #{boundary_head_forward.6} parent=31 // pred_fallthru
        _
    $region32: #{boundary_head_forward.6} parent=5 // pred_fallthru
      _
    %p890 = scmp.le.s32.totalorder 2, %s9
    // Predicated region
    $region44: #{boundary_head_forward.6} parent=5 // pred_check
      %p891 = pneg %p890
    $region45: #{boundary_head_forward.6} parent=5 // pred_check_branch
      %893 = sbr.rel (%p891) target = $region47
    $region46: #{boundary_head_forward.6} parent=5 // pred_region
      %s894 = ssub.s32 %s9, 2
      // Predicated region
      $region48: #{boundary_head_forward.6} parent=46 // pred_check
        %p895 = pneg %p106
      $region49: #{boundary_head_forward.6} parent=46 // pred_check_branch
        %897 = sbr.rel (%p895) target = $region51
      $region50: #{boundary_head_forward.6} parent=46 // pred_region
        %p898 = scmp.lt.s32.totalorder %s15, 1
        %s899 = scalar_select %p898, %s15, 1
        %s900 = smul.addr %s899, 20
        %s901 = smul.addr %s900, 4
        %s902 = scalar_lea.vmem %s3, %s901
      $region51: #{boundary_head_forward.6} parent=46 // pred_fallthru
        _
    $region47: #{boundary_head_forward.6} parent=5 // pred_fallthru
      _
  $region6: #{boundary_head_forward.6} parent=0 // loop_footer
    %s13 = sadd.s32 1, %s9
  $region7: #{boundary_head_forward.6} parent=0 // loop_footer_branch
    %8 = sbr.rel target = $region3
  $region8: #{boundary_head_forward.6} parent=0 // loop_exit
    _

// kernel: boundary_head_forward.7
$region0: #{boundary_head_forward.7}
  #allocation0 [shape = 'u32[]', space=smem, size = 0x4, offset = 0x4, fixed_abs, tag = 'smem constant byte address 0x4 - core index']
  #allocation1 [shape = 'u32[72,128]{1,0:T(1,128)}', space=vmem, size = 0x9000, scoped, tag = 'internal scratch']
  %s0 = inlined_call_operand.vmem [shape: bf16[2,10,10,192], index: 0, kind: input, shape index: {}]
  %s1 = inlined_call_operand.vmem [shape: bf16[9,192,16], index: 1, kind: input, shape index: {}]
  %s2 = inlined_call_operand.vmem [shape: f32[1,16], index: 2, kind: input, shape index: {}]
  %s3 = inlined_call_operand.vmem [shape: bf16[2,8,8,16], index: 3, kind: output, shape index: {}]
  %s4 = sld [smem:[#allocation0]]
  $region52: #{boundary_head_forward.7} parent=0
    _
  %s6 = ssub.s32 1, %s4
  %s7 = scalar_select 0, %s6, %s4
  loop: start=0, step=1, limit=4
  $region2: #{boundary_head_forward.7} parent=0 // loop_pre_header
    _
  $region3: #{boundary_head_forward.7} parent=0 // loop_header
    %s9 = sphi 0, %s13
    %p10 = scmp.ge.s32.totalorder %s9, 4
    %s19 = sphi 0, %s21
    %s22 = sphi 0, %s19
    %s23 = sphi 0, %s22
    %s39 = sphi 0, %s23
    %s43 = sphi 0, %s43
    %s45 = sphi 0, %s43
    %s46 = sphi 0, %s45
    %s60 = sphi 0, %s46
    %s64 = sphi 0, %s64
    %s66 = sphi 0, %s64
    %s67 = sphi 0, %s66
    %s81 = sphi 0, %s67
    %s87 = sphi 0, %s89
    %s90 = sphi 0, %s87
    %s91 = sphi 0, %s90
    %s107 = sphi 0, %s91
  $region4: #{boundary_head_forward.7} parent=0 // loop_header_branch
    %12 = sbr.rel (%p10) target = $region8
  $region5: #{boundary_head_forward.7} parent=0 // loop_body
    %s14 = ssub.s32 %s9, 1
    %s15 = ssub.s32 %s9, 2
    %s16 = sadd.s32 %s9, 1
    %s17 = ssub.s32 %s9, %s16
    %p18 = scmp.eq.s32.totalorder %s17, 0
    %s20 = sadd.s32 %s19, 1
    %s21 = scalar_select %p18, %s19, %s20
    %p24 = pneg %p18
    %p25 = scmp.eq.s32.totalorder %s9, 1
    %p26 = por %p24, %p25
    %p27 = scmp.ne.s32.totalorder %s19, %s22
    %p28 = scmp.eq.s32.totalorder %s9, 0
    %p29 = por %p27, %p28
    %p30 = scmp.ne.s32.totalorder %s19, %s22
    %p31 = scmp.eq.s32.totalorder %s14, 1
    %p32 = por %p30, %p31
    %p33 = scmp.ne.s32.totalorder %s22, %s23
    %p34 = scmp.eq.s32.totalorder %s14, 0
    %p35 = por %p33, %p34
    %p36 = scmp.ne.s32.totalorder %s22, %s23
    %p37 = scmp.eq.s32.totalorder %s15, 1
    %p38 = por %p36, %p37
    %p40 = scmp.ne.s32.totalorder %s23, %s39
    %p41 = scmp.eq.s32.totalorder %s15, 0
    %p42 = por %p40, %p41
    %s44 = sadd.s32 %s43, 1
    %p47 = scmp.eq.s32.totalorder %s9, 1
    %p48 = scmp.ne.s32.totalorder %s43, %s45
    %p49 = scmp.eq.s32.totalorder %s9, 0
    %p50 = por %p48, %p49
    %p51 = scmp.ne.s32.totalorder %s43, %s45
    %p52 = scmp.eq.s32.totalorder %s14, 1
    %p53 = por %p51, %p52
    %p54 = scmp.ne.s32.totalorder %s45, %s46
    %p55 = scmp.eq.s32.totalorder %s14, 0
    %p56 = por %p54, %p55
    %p57 = scmp.ne.s32.totalorder %s45, %s46
    %p58 = scmp.eq.s32.totalorder %s15, 1
    %p59 = por %p57, %p58
    %p61 = scmp.ne.s32.totalorder %s46, %s60
    %p62 = scmp.eq.s32.totalorder %s15, 0
    %p63 = por %p61, %p62
    %s65 = sadd.s32 %s64, 1
    %p68 = scmp.eq.s32.totalorder %s9, 1
    %p69 = scmp.ne.s32.totalorder %s64, %s66
    %p70 = scmp.eq.s32.totalorder %s9, 0
    %p71 = por %p69, %p70
    %p72 = scmp.ne.s32.totalorder %s64, %s66
    %p73 = scmp.eq.s32.totalorder %s14, 1
    %p74 = por %p72, %p73
    %p75 = scmp.ne.s32.totalorder %s66, %s67
    %p76 = scmp.eq.s32.totalorder %s14, 0
    %p77 = por %p75, %p76
    %p78 = scmp.ne.s32.totalorder %s66, %s67
    %p79 = scmp.eq.s32.totalorder %s15, 1
    %p80 = por %p78, %p79
    %p82 = scmp.ne.s32.totalorder %s67, %s81
    %p83 = scmp.eq.s32.totalorder %s15, 0
    %p84 = por %p82, %p83
    %s85 = ssub.s32 %s9, %s16
    %p86 = scmp.eq.s32.totalorder %s85, 0
    %s88 = sadd.s32 %s87, 1
    %s89 = scalar_select %p86, %s87, %s88
    %p92 = pneg %p86
    %p93 = scmp.eq.s32.totalorder %s9, 1
    %p94 = por %p92, %p93
    %p95 = scmp.ne.s32.totalorder %s87, %s90
    %p96 = scmp.eq.s32.totalorder %s9, 0
    %p97 = por %p95, %p96
    %p98 = scmp.ne.s32.totalorder %s87, %s90
    %p99 = scmp.eq.s32.totalorder %s14, 1
    %p100 = por %p98, %p99
    %p101 = scmp.ne.s32.totalorder %s90, %s91
    %p102 = scmp.eq.s32.totalorder %s14, 0
    %p103 = por %p101, %p102
    %p104 = scmp.ne.s32.totalorder %s90, %s91
    %p105 = scmp.eq.s32.totalorder %s15, 1
    %p106 = por %p104, %p105
    %p108 = scmp.ne.s32.totalorder %s91, %s107
    %p109 = scmp.eq.s32.totalorder %s15, 0
    %p110 = por %p108, %p109
    %p111 = scmp.le.s32.totalorder 1, %s9
    %p112 = scmp.lt.s32.totalorder %s9, 3
    %p113 = pnand %p111, %p112
    %p114 = pneg %p113
    // Predicated region
    $region9: #{boundary_head_forward.7} parent=5 // pred_check
      _
    $region10: #{boundary_head_forward.7} parent=5 // pred_check_branch
      %116 = sbr.rel (%p113) target = $region12
    $region11: #{boundary_head_forward.7} parent=5 // pred_region
      %s117 = ssub.s32 %s9, 1
      // Predicated region
      $region13: #{boundary_head_forward.7} parent=11 // pred_check
        %p118 = pneg %p56
      $region14: #{boundary_head_forward.7} parent=11 // pred_check_branch
        %120 = sbr.rel (%p118) target = $region16
      $region15: #{boundary_head_forward.7} parent=11 // pred_region
        _
      $region16: #{boundary_head_forward.7} parent=11 // pred_fallthru
        _
      // Predicated region
      $region17: #{boundary_head_forward.7} parent=11 // pred_check
        %p121 = pneg %p77
      $region18: #{boundary_head_forward.7} parent=11 // pred_check_branch
        %123 = sbr.rel (%p121) target = $region20
      $region19: #{boundary_head_forward.7} parent=11 // pred_region
        _
      $region20: #{boundary_head_forward.7} parent=11 // pred_fallthru
        _
    $region12: #{boundary_head_forward.7} parent=5 // pred_fallthru
      _
    %p124 = scmp.lt.s32.totalorder %s9, 2
    // Predicated region
    $region21: #{boundary_head_forward.7} parent=5 // pred_check
      %p125 = pneg %p124
    $region22: #{boundary_head_forward.7} parent=5 // pred_check_branch
      %127 = sbr.rel (%p125) target = $region24
    $region23: #{boundary_head_forward.7} parent=5 // pred_region
      // Predicated region
      $region25: #{boundary_head_forward.7} parent=23 // pred_check
        %p128 = pneg %p29
      $region26: #{boundary_head_forward.7} parent=23 // pred_check_branch
        %130 = sbr.rel (%p128) target = $region28
      $region27: #{boundary_head_forward.7} parent=23 // pred_region
        %p131 = scmp.lt.s32.totalorder %s9, 1
        %s132 = scalar_select %p131, %s9, 1
        %s133 = smul.addr %s132, 40
        %s134 = smul.addr %s133, 4
        %s135 = scalar_lea.vmem %s0, %s134
      $region28: #{boundary_head_forward.7} parent=23 // pred_fallthru
        _
    $region24: #{boundary_head_forward.7} parent=5 // pred_fallthru
      _
    %p136 = scmp.le.s32.totalorder 1, %s9
    %p137 = scmp.lt.s32.totalorder %s9, 3
    %p138 = pnand %p136, %p137
    %p139 = pneg %p138
    // Predicated region
    $region29: #{boundary_head_forward.7} parent=5 // pred_check
      _
    $region30: #{boundary_head_forward.7} parent=5 // pred_check_branch
      %141 = sbr.rel (%p138) target = $region32
    $region31: #{boundary_head_forward.7} parent=5 // pred_region
      %s142 = ssub.s32 %s9, 1
      %p143 = scmp.lt.s32.totalorder %s14, 1
      %s144 = scalar_select %p143, %s14, 1
      %s145 = smul.addr %s144, 40
      %s146 = smul.addr %s145, 4
      %s147 = scalar_lea.vmem %s0, %s146
      %p148 = pneg %p35
      %p149 = pneg %p32
      %p150 = pneg %p56
      %p151 = pneg %p53
      %p152 = pneg %p77
      %p153 = pneg %p74
      %p154 = pneg %p103
      %p155 = pneg %p100
      %p156 = scmp.lt.s32.totalorder %s14, 1
      %s157 = scalar_select %p156, %s14, 1
      %s158 = smul.addr %s157, 8
      %s159 = smul.addr %s158, 4
      %s160 = scalar_lea.vmem %s3, %s159
      %p161 = scmp.lt.s32.totalorder %s14, 1
      %s162 = scalar_select %p161, %s14, 1
      %s163 = smul.addr %s162, 40
      %s164 = smul.addr %s163, 4
      %s165 = scalar_lea.vmem %s0, %s164
      %p166 = scmp.lt.s32.totalorder %s14, 1
      %s167 = scalar_select %p166, %s14, 1
      %s168 = smul.addr %s167, 8
      %s169 = smul.addr %s168, 4
      %s170 = scalar_lea.vmem %s3, %s169
      loop: start=0, step=1, limit=8
      $region33: #{boundary_head_forward.7} parent=31 // loop_pre_header
        _
      $region34: #{boundary_head_forward.7} parent=31 // loop_header
        %s173 = sphi 0, %s177
        %p174 = scmp.ge.s32.totalorder %s173, 8
      $region35: #{boundary_head_forward.7} parent=31 // loop_header_branch
        %176 = sbr.rel (%p174) target = $region39
      $region36: #{boundary_head_forward.7} parent=31 // loop_body
        %s178 = smul.u32 %s173, 4
        %s179 = smul.addr %s178, 4
        %s180 = scalar_lea.vmem %s165, %s179
        %v181 = vld [vmem:[%s180] sm:$0xff]
        %v182 = vld [vmem:[%s1] sm:$0xf]
        %v183 = vld [vmem:[%s1 + $0x4] sm:$0xf]
        %v184 = vld [vmem:[%s1 + $0x8] sm:$0xf]
        %v185 = vld [vmem:[%s1 + $0xc] sm:$0xf]
        %v186 = vld [vmem:[%s1 + $0x10] sm:$0xf]
        %v187 = vld [vmem:[%s1 + $0x14] sm:$0xf]
        %v188 = vld [vmem:[%s1 + $0x18] sm:$0xf]
        %v189 = vld [vmem:[%s1 + $0x1c] sm:$0xf]
        %v190 = vld [vmem:[%s1 + $0x20] sm:$0xf]
        %v191 = vld [vmem:[%s1 + $0x24] sm:$0xf]
        %v192 = vld [vmem:[%s1 + $0x28] sm:$0xf]
        %v193 = vld [vmem:[%s1 + $0x2c] sm:$0xf]
        %v194 = vld [vmem:[%s1 + $0x30] sm:$0xf]
        %v195 = vld [vmem:[%s1 + $0x34] sm:$0xf]
        %v196 = vld [vmem:[%s1 + $0x38] sm:$0xf]
        %v197 = vld [vmem:[%s1 + $0x3c] sm:$0xf]
        %v198 = vld [vmem:[%s1 + $0x40] sm:$0xf]
        %v199 = vld [vmem:[%s1 + $0x44] sm:$0xf]
        %v200 = vld [vmem:[%s1 + $0x48] sm:$0xf]
        %v201 = vld [vmem:[%s1 + $0x4c] sm:$0xf]
        %v202 = vld [vmem:[%s1 + $0x50] sm:$0xf]
        %v203 = vld [vmem:[%s1 + $0x54] sm:$0xf]
        %v204 = vld [vmem:[%s1 + $0x58] sm:$0xf]
        %v205 = vld [vmem:[%s1 + $0x5c] sm:$0xf]
        %v206 = vld [vmem:[%s180 + $0x8] sm:$0x11]
        %s207 = scalar_lea.vmem %s1, 96
        %v208 = vld [vmem:[%s207] sm:$0xf]
        %v209 = vld [vmem:[%s207 + $0x4] sm:$0xf]
        %v210 = vld [vmem:[%s207 + $0x8] sm:$0xf]
        %v211 = vld [vmem:[%s207 + $0xc] sm:$0xf]
        %v212 = vld [vmem:[%s207 + $0x10] sm:$0xf]
        %v213 = vld [vmem:[%s207 + $0x14] sm:$0xf]
        %v214 = vld [vmem:[%s207 + $0x18] sm:$0xf]
        %v215 = vld [vmem:[%s207 + $0x1c] sm:$0xf]
        %v216 = vld [vmem:[%s207 + $0x20] sm:$0xf]
        %v217 = vld [vmem:[%s207 + $0x24] sm:$0xf]
        %v218 = vld [vmem:[%s207 + $0x28] sm:$0xf]
        %v219 = vld [vmem:[%s207 + $0x2c] sm:$0xf]
        %v220 = vld [vmem:[%s207 + $0x30] sm:$0xf]
        %v221 = vld [vmem:[%s207 + $0x34] sm:$0xf]
        %v222 = vld [vmem:[%s207 + $0x38] sm:$0xf]
        %v223 = vld [vmem:[%s207 + $0x3c] sm:$0xf]
        %v224 = vld [vmem:[%s207 + $0x40] sm:$0xf]
        %v225 = vld [vmem:[%s207 + $0x44] sm:$0xf]
        %v226 = vld [vmem:[%s207 + $0x48] sm:$0xf]
        %v227 = vld [vmem:[%s207 + $0x4c] sm:$0xf]
        %v228 = vld [vmem:[%s207 + $0x50] sm:$0xf]
        %v229 = vld [vmem:[%s207 + $0x54] sm:$0xf]
        %v230 = vld [vmem:[%s207 + $0x58] sm:$0xf]
        %v231 = vld [vmem:[%s207 + $0x5c] sm:$0xf]
        %v234 = vunpack.c.l.b16 %v181
        %v235 = vunpack.c.h.b16 %v181
        %v236 = vunpack.c.l.b16 %v206
        %v237 = vunpack.c.h.b16 %v206
        %v238 = vpack.c.b16 %v236, %v234
        %v239 = vpack.c.b16 %v237, %v235
        %v241 = vshrl.u32 %v238, 16
        %v243 = vshll.u32 %v238, 16
        %v245 = vrot.slane %v243, 1
        %v246 = vor.u32 %v241, %v245
        %v248 = vshrl.u32 %v239, 16
        %v250 = vshll.u32 %v239, 16
        %v252 = vrot.slane %v250, 1
        %v253 = vor.u32 %v248, %v252
        %v279 = vunpack.c.l.b16 %v208
        %v280 = vunpack.c.l.b16 %v209
        %v281 = vunpack.c.l.b16 %v210
        %v282 = vunpack.c.l.b16 %v211
        %v283 = vunpack.c.l.b16 %v212
        %v284 = vunpack.c.l.b16 %v213
        %v285 = vunpack.c.l.b16 %v214
        %v286 = vunpack.c.l.b16 %v215
        %v287 = vunpack.c.l.b16 %v216
        %v288 = vunpack.c.l.b16 %v217
        %v289 = vunpack.c.l.b16 %v218
        %v290 = vunpack.c.l.b16 %v219
        %v291 = vunpack.c.l.b16 %v220
        %v292 = vunpack.c.l.b16 %v221
        %v293 = vunpack.c.l.b16 %v222
        %v294 = vunpack.c.l.b16 %v223
        %v295 = vunpack.c.l.b16 %v224
        %v296 = vunpack.c.l.b16 %v225
        %v297 = vunpack.c.l.b16 %v226
        %v298 = vunpack.c.l.b16 %v227
        %v299 = vunpack.c.l.b16 %v228
        %v300 = vunpack.c.l.b16 %v229
        %v301 = vunpack.c.l.b16 %v230
        %v302 = vunpack.c.l.b16 %v231
        %v303 = vpack.c.b16 %v280, %v279
        %v304 = vpack.c.b16 %v282, %v281
        %v305 = vpack.c.b16 %v284, %v283
        %v306 = vpack.c.b16 %v286, %v285
        %v307 = vpack.c.b16 %v288, %v287
        %v308 = vpack.c.b16 %v290, %v289
        %v309 = vpack.c.b16 %v292, %v291
        %v310 = vpack.c.b16 %v294, %v293
        %v311 = vpack.c.b16 %v296, %v295
        %v312 = vpack.c.b16 %v298, %v297
        %v313 = vpack.c.b16 %v300, %v299
        %v314 = vpack.c.b16 %v302, %v301
        %vm327 = vcmask 523264
        %v329 = vsel %vm327, %v253, 0
        %331 = vmatpush.bf16.msra.mxu0 %v310
        %332 = vmatpush.bf16.msra.mxu0 %v309
        %333 = vmatpush.bf16.msra.mxu0 %v308
        %334 = vmatpush.bf16.msra.mxu0 %v307
        %335 = vmatpush.bf16.msra.mxu0 %v306
        %336 = vmatpush.bf16.msra.mxu0 %v305
        %337 = vmatpush.bf16.msra.mxu0 %v304
        %338 = vmatpush.bf16.msra.mxu0 %v303
        %339 = vmatmul.bf16.gmra.mxu0 %v246
        %v340 = vpop.f32.mrf.mxu0
        %v341 = vadd.f32 0.0, %v340
        %v342 = vpop.f32.mrf.mxu0
        %343 = vdwg.mxu0
        %344 = vmatpush.bf16.msra.mxu0 0
        %345 = vmatpush.bf16.msra.mxu0 0
        %346 = vmatpush.bf16.msra.mxu0 0
        %347 = vmatpush.bf16.msra.mxu0 0
        %348 = vmatpush.bf16.msra.mxu0 %v314
        %349 = vmatpush.bf16.msra.mxu0 %v313
        %350 = vmatpush.bf16.msra.mxu0 %v312
        %351 = vmatpush.bf16.msra.mxu0 %v311
        %352 = vmatmul.bf16.gmra.mxu0 %v329
        %v353 = vpop.f32.mrf.mxu0
        %v354 = vadd.f32 %v341, %v353
        %v355 = vpop.f32.mrf.mxu0
        %356 = vdwg.mxu0
        %v357 = vpack.c.b16 %v234, %v234
        %v358 = vpack.c.b16 %v235, %v235
        %v384 = vunpack.c.l.b16 %v182
        %v385 = vunpack.c.l.b16 %v183
        %v386 = vunpack.c.l.b16 %v184
        %v387 = vunpack.c.l.b16 %v185
        %v388 = vunpack.c.l.b16 %v186
        %v389 = vunpack.c.l.b16 %v187
        %v390 = vunpack.c.l.b16 %v188
        %v391 = vunpack.c.l.b16 %v189
        %v392 = vunpack.c.l.b16 %v190
        %v393 = vunpack.c.l.b16 %v191
        %v394 = vunpack.c.l.b16 %v192
        %v395 = vunpack.c.l.b16 %v193
        %v396 = vunpack.c.l.b16 %v194
        %v397 = vunpack.c.l.b16 %v195
        %v398 = vunpack.c.l.b16 %v196
        %v399 = vunpack.c.l.b16 %v197
        %v400 = vunpack.c.l.b16 %v198
        %v401 = vunpack.c.l.b16 %v199
        %v402 = vunpack.c.l.b16 %v200
        %v403 = vunpack.c.l.b16 %v201
        %v404 = vunpack.c.l.b16 %v202
        %v405 = vunpack.c.l.b16 %v203
        %v406 = vunpack.c.l.b16 %v204
        %v407 = vunpack.c.l.b16 %v205
        %v408 = vpack.c.b16 %v385, %v384
        %v409 = vpack.c.b16 %v387, %v386
        %v410 = vpack.c.b16 %v389, %v388
        %v411 = vpack.c.b16 %v391, %v390
        %v412 = vpack.c.b16 %v393, %v392
        %v413 = vpack.c.b16 %v395, %v394
        %v414 = vpack.c.b16 %v397, %v396
        %v415 = vpack.c.b16 %v399, %v398
        %v416 = vpack.c.b16 %v401, %v400
        %v417 = vpack.c.b16 %v403, %v402
        %v418 = vpack.c.b16 %v405, %v404
        %v419 = vpack.c.b16 %v407, %v406
        %v433 = vsel %vm327, %v358, 0
        %435 = vmatpush.bf16.msra.mxu0 %v415
        %436 = vmatpush.bf16.msra.mxu0 %v414
        %437 = vmatpush.bf16.msra.mxu0 %v413
        %438 = vmatpush.bf16.msra.mxu0 %v412
        %439 = vmatpush.bf16.msra.mxu0 %v411
        %440 = vmatpush.bf16.msra.mxu0 %v410
        %441 = vmatpush.bf16.msra.mxu0 %v409
        %442 = vmatpush.bf16.msra.mxu0 %v408
        %443 = vmatmul.bf16.gmra.mxu0 %v357
        %v444 = vpop.f32.mrf.mxu0
        %v445 = vadd.f32 %v354, %v444
        %v446 = vpop.f32.mrf.mxu0
        %447 = vdwg.mxu0
        %448 = vmatpush.bf16.msra.mxu0 0
        %449 = vmatpush.bf16.msra.mxu0 0
        %450 = vmatpush.bf16.msra.mxu0 0
        %451 = vmatpush.bf16.msra.mxu0 0
        %452 = vmatpush.bf16.msra.mxu0 %v419
        %453 = vmatpush.bf16.msra.mxu0 %v418
        %454 = vmatpush.bf16.msra.mxu0 %v417
        %455 = vmatpush.bf16.msra.mxu0 %v416
        %456 = vmatmul.bf16.gmra.mxu0 %v433
        %v457 = vpop.f32.mrf.mxu0
        %v458 = vadd.f32 %v445, %v457
        %v459 = vpop.f32.mrf.mxu0
        %460 = vdwg.mxu0
        %v461 = vld [vmem:[%s180] sm:$0xee]
        %s462 = scalar_lea.vmem %s1, 192
        %v463 = vld [vmem:[%s462] sm:$0xf]
        %v464 = vld [vmem:[%s462 + $0x4] sm:$0xf]
        %v465 = vld [vmem:[%s462 + $0x8] sm:$0xf]
        %v466 = vld [vmem:[%s462 + $0xc] sm:$0xf]
        %v467 = vld [vmem:[%s462 + $0x10] sm:$0xf]
        %v468 = vld [vmem:[%s462 + $0x14] sm:$0xf]
        %v469 = vld [vmem:[%s462 + $0x18] sm:$0xf]
        %v470 = vld [vmem:[%s462 + $0x1c] sm:$0xf]
        %v471 = vld [vmem:[%s462 + $0x20] sm:$0xf]
        %v472 = vld [vmem:[%s462 + $0x24] sm:$0xf]
        %v473 = vld [vmem:[%s462 + $0x28] sm:$0xf]
        %v474 = vld [vmem:[%s462 + $0x2c] sm:$0xf]
        %v475 = vld [vmem:[%s462 + $0x30] sm:$0xf]
        %v476 = vld [vmem:[%s462 + $0x34] sm:$0xf]
        %v477 = vld [vmem:[%s462 + $0x38] sm:$0xf]
        %v478 = vld [vmem:[%s462 + $0x3c] sm:$0xf]
        %v479 = vld [vmem:[%s462 + $0x40] sm:$0xf]
        %v480 = vld [vmem:[%s462 + $0x44] sm:$0xf]
        %v481 = vld [vmem:[%s462 + $0x48] sm:$0xf]
        %v482 = vld [vmem:[%s462 + $0x4c] sm:$0xf]
        %v483 = vld [vmem:[%s462 + $0x50] sm:$0xf]
        %v484 = vld [vmem:[%s462 + $0x54] sm:$0xf]
        %v485 = vld [vmem:[%s462 + $0x58] sm:$0xf]
        %v486 = vld [vmem:[%s462 + $0x5c] sm:$0xf]
        %v488 = vunpack.c.l.b16 %v461
        %v489 = vunpack.c.h.b16 %v461
        %v490 = vpack.c.b16 %v236, %v488
        %v491 = vpack.c.b16 %v237, %v489
        %v492 = vrot.slane %v490, 1
        %v493 = vrot.slane %v491, 1
        %v519 = vunpack.c.l.b16 %v463
        %v520 = vunpack.c.l.b16 %v464
        %v521 = vunpack.c.l.b16 %v465
        %v522 = vunpack.c.l.b16 %v466
        %v523 = vunpack.c.l.b16 %v467
        %v524 = vunpack.c.l.b16 %v468
        %v525 = vunpack.c.l.b16 %v469
        %v526 = vunpack.c.l.b16 %v470
        %v527 = vunpack.c.l.b16 %v471
        %v528 = vunpack.c.l.b16 %v472
        %v529 = vunpack.c.l.b16 %v473
        %v530 = vunpack.c.l.b16 %v474
        %v531 = vunpack.c.l.b16 %v475
        %v532 = vunpack.c.l.b16 %v476
        %v533 = vunpack.c.l.b16 %v477
        %v534 = vunpack.c.l.b16 %v478
        %v535 = vunpack.c.l.b16 %v479
        %v536 = vunpack.c.l.b16 %v480
        %v537 = vunpack.c.l.b16 %v481
        %v538 = vunpack.c.l.b16 %v482
        %v539 = vunpack.c.l.b16 %v483
        %v540 = vunpack.c.l.b16 %v484
        %v541 = vunpack.c.l.b16 %v485
        %v542 = vunpack.c.l.b16 %v486
        %v543 = vpack.c.b16 %v520, %v519
        %v544 = vpack.c.b16 %v522, %v521
        %v545 = vpack.c.b16 %v524, %v523
        %v546 = vpack.c.b16 %v526, %v525
        %v547 = vpack.c.b16 %v528, %v527
        %v548 = vpack.c.b16 %v530, %v529
        %v549 = vpack.c.b16 %v532, %v531
        %v550 = vpack.c.b16 %v534, %v533
        %v551 = vpack.c.b16 %v536, %v535
        %v552 = vpack.c.b16 %v538, %v537
        %v553 = vpack.c.b16 %v540, %v539
        %v554 = vpack.c.b16 %v542, %v541
        %v568 = vsel %vm327, %v493, 0
        %570 = vmatpush.bf16.msra.mxu0 %v550
        %571 = vmatpush.bf16.msra.mxu0 %v549
        %572 = vmatpush.bf16.msra.mxu0 %v548
        %573 = vmatpush.bf16.msra.mxu0 %v547
        %574 = vmatpush.bf16.msra.mxu0 %v546
        %575 = vmatpush.bf16.msra.mxu0 %v545
        %576 = vmatpush.bf16.msra.mxu0 %v544
        %577 = vmatpush.bf16.msra.mxu0 %v543
        %578 = vmatmul.bf16.gmra.mxu0 %v492
        %v579 = vpop.f32.mrf.mxu0
        %v580 = vadd.f32 0.0, %v579
        %v581 = vpop.f32.mrf.mxu0
        %582 = vdwg.mxu0
        %583 = vmatpush.bf16.msra.mxu0 0
        %584 = vmatpush.bf16.msra.mxu0 0
        %585 = vmatpush.bf16.msra.mxu0 0
        %586 = vmatpush.bf16.msra.mxu0 0
        %587 = vmatpush.bf16.msra.mxu0 %v554
        %588 = vmatpush.bf16.msra.mxu0 %v553
        %589 = vmatpush.bf16.msra.mxu0 %v552
        %590 = vmatpush.bf16.msra.mxu0 %v551
        %591 = vmatmul.bf16.gmra.mxu0 %v568
        %v592 = vpop.f32.mrf.mxu0
        %v593 = vadd.f32 %v580, %v592
        %v594 = vpop.f32.mrf.mxu0
        %595 = vdwg.mxu0
        %v596 = vadd.f32 %v458, %v593
        %s597 = sadd.s32 %s173, 1
        %s598 = smul.u32 %s597, 4
        %s599 = smul.addr %s598, 4
        %s600 = scalar_lea.vmem %s165, %s599
        %v601 = vld [vmem:[%s600] sm:$0xff]
        %s602 = scalar_lea.vmem %s1, 288
        %v603 = vld [vmem:[%s602] sm:$0xf]
        %v604 = vld [vmem:[%s602 + $0x4] sm:$0xf]
        %v605 = vld [vmem:[%s602 + $0x8] sm:$0xf]
        %v606 = vld [vmem:[%s602 + $0xc] sm:$0xf]
        %v607 = vld [vmem:[%s602 + $0x10] sm:$0xf]
        %v608 = vld [vmem:[%s602 + $0x14] sm:$0xf]
        %v609 = vld [vmem:[%s602 + $0x18] sm:$0xf]
        %v610 = vld [vmem:[%s602 + $0x1c] sm:$0xf]
        %v611 = vld [vmem:[%s602 + $0x20] sm:$0xf]
        %v612 = vld [vmem:[%s602 + $0x24] sm:$0xf]
        %v613 = vld [vmem:[%s602 + $0x28] sm:$0xf]
        %v614 = vld [vmem:[%s602 + $0x2c] sm:$0xf]
        %v615 = vld [vmem:[%s602 + $0x30] sm:$0xf]
        %v616 = vld [vmem:[%s602 + $0x34] sm:$0xf]
        %v617 = vld [vmem:[%s602 + $0x38] sm:$0xf]
        %v618 = vld [vmem:[%s602 + $0x3c] sm:$0xf]
        %v619 = vld [vmem:[%s602 + $0x40] sm:$0xf]
        %v620 = vld [vmem:[%s602 + $0x44] sm:$0xf]
        %v621 = vld [vmem:[%s602 + $0x48] sm:$0xf]
        %v622 = vld [vmem:[%s602 + $0x4c] sm:$0xf]
        %v623 = vld [vmem:[%s602 + $0x50] sm:$0xf]
        %v624 = vld [vmem:[%s602 + $0x54] sm:$0xf]
        %v625 = vld [vmem:[%s602 + $0x58] sm:$0xf]
        %v626 = vld [vmem:[%s602 + $0x5c] sm:$0xf]
        %v628 = vunpack.c.l.b16 %v601
        %v629 = vunpack.c.h.b16 %v601
        %v630 = vpack.c.b16 %v628, %v628
        %v631 = vpack.c.b16 %v629, %v629
        %v657 = vunpack.c.l.b16 %v603
        %v658 = vunpack.c.l.b16 %v604
        %v659 = vunpack.c.l.b16 %v605
        %v660 = vunpack.c.l.b16 %v606
        %v661 = vunpack.c.l.b16 %v607
        %v662 = vunpack.c.l.b16 %v608
        %v663 = vunpack.c.l.b16 %v609
        %v664 = vunpack.c.l.b16 %v610
        %v665 = vunpack.c.l.b16 %v611
        %v666 = vunpack.c.l.b16 %v612
        %v667 = vunpack.c.l.b16 %v613
        %v668 = vunpack.c.l.b16 %v614
        %v669 = vunpack.c.l.b16 %v615
        %v670 = vunpack.c.l.b16 %v616
        %v671 = vunpack.c.l.b16 %v617
        %v672 = vunpack.c.l.b16 %v618
        %v673 = vunpack.c.l.b16 %v619
        %v674 = vunpack.c.l.b16 %v620
        %v675 = vunpack.c.l.b16 %v621
        %v676 = vunpack.c.l.b16 %v622
        %v677 = vunpack.c.l.b16 %v623
        %v678 = vunpack.c.l.b16 %v624
        %v679 = vunpack.c.l.b16 %v625
        %v680 = vunpack.c.l.b16 %v626
        %v681 = vpack.c.b16 %v658, %v657
        %v682 = vpack.c.b16 %v660, %v659
        %v683 = vpack.c.b16 %v662, %v661
        %v684 = vpack.c.b16 %v664, %v663
        %v685 = vpack.c.b16 %v666, %v665
        %v686 = vpack.c.b16 %v668, %v667
        %v687 = vpack.c.b16 %v670, %v669
        %v688 = vpack.c.b16 %v672, %v671
        %v689 = vpack.c.b16 %v674, %v673
        %v690 = vpack.c.b16 %v676, %v675
        %v691 = vpack.c.b16 %v678, %v677
        %v692 = vpack.c.b16 %v680, %v679
        %v706 = vsel %vm327, %v631, 0
        %708 = vmatpush.bf16.msra.mxu0 %v688
        %709 = vmatpush.bf16.msra.mxu0 %v687
        %710 = vmatpush.bf16.msra.mxu0 %v686
        %711 = vmatpush.bf16.msra.mxu0 %v685
        %712 = vmatpush.bf16.msra.mxu0 %v684
        %713 = vmatpush.bf16.msra.mxu0 %v683
        %714 = vmatpush.bf16.msra.mxu0 %v682
        %715 = vmatpush.bf16.msra.mxu0 %v681
        %716 = vmatmul.bf16.gmra.mxu0 %v630
        %v717 = vpop.f32.mrf.mxu0
        %v718 = vadd.f32 0.0, %v717
        %v719 = vpop.f32.mrf.mxu0
        %720 = vdwg.mxu0
        %721 = vmatpush.bf16.msra.mxu0 0
        %722 = vmatpush.bf16.msra.mxu0 0
        %723 = vmatpush.bf16.msra.mxu0 0
        %724 = vmatpush.bf16.msra.mxu0 0
        %725 = vmatpush.bf16.msra.mxu0 %v692
        %726 = vmatpush.bf16.msra.mxu0 %v691
        %727 = vmatpush.bf16.msra.mxu0 %v690
        %728 = vmatpush.bf16.msra.mxu0 %v689
        %729 = vmatmul.bf16.gmra.mxu0 %v706
        %v730 = vpop.f32.mrf.mxu0
        %v731 = vadd.f32 %v718, %v730
        %v732 = vpop.f32.mrf.mxu0
        %733 = vdwg.mxu0
        %v734 = vadd.f32 %v596, %v731
        %v735 = vld [vmem:[%s600] sm:$0xff]
        %v736 = vld [vmem:[%s600 + $0x8] sm:$0x11]
        %s737 = scalar_lea.vmem %s1, 384
        %v738 = vld [vmem:[%s737] sm:$0xf]
        %v739 = vld [vmem:[%s737 + $0x4] sm:$0xf]
        %v740 = vld [vmem:[%s737 + $0x8] sm:$0xf]
        %v741 = vld [vmem:[%s737 + $0xc] sm:$0xf]
        %v742 = vld [vmem:[%s737 + $0x10] sm:$0xf]
        %v743 = vld [vmem:[%s737 + $0x14] sm:$0xf]
        %v744 = vld [vmem:[%s737 + $0x18] sm:$0xf]
        %v745 = vld [vmem:[%s737 + $0x1c] sm:$0xf]
        %v746 = vld [vmem:[%s737 + $0x20] sm:$0xf]
        %v747 = vld [vmem:[%s737 + $0x24] sm:$0xf]
        %v748 = vld [vmem:[%s737 + $0x28] sm:$0xf]
        %v749 = vld [vmem:[%s737 + $0x2c] sm:$0xf]
        %v750 = vld [vmem:[%s737 + $0x30] sm:$0xf]
        %v751 = vld [vmem:[%s737 + $0x34] sm:$0xf]
        %v752 = vld [vmem:[%s737 + $0x38] sm:$0xf]
        %v753 = vld [vmem:[%s737 + $0x3c] sm:$0xf]
        %v754 = vld [vmem:[%s737 + $0x40] sm:$0xf]
        %v755 = vld [vmem:[%s737 + $0x44] sm:$0xf]
        %v756 = vld [vmem:[%s737 + $0x48] sm:$0xf]
        %v757 = vld [vmem:[%s737 + $0x4c] sm:$0xf]
        %v758 = vld [vmem:[%s737 + $0x50] sm:$0xf]
        %v759 = vld [vmem:[%s737 + $0x54] sm:$0xf]
        %v760 = vld [vmem:[%s737 + $0x58] sm:$0xf]
        %v761 = vld [vmem:[%s737 + $0x5c] sm:$0xf]
        %v764 = vunpack.c.l.b16 %v735
        %v765 = vunpack.c.h.b16 %v735
        %v766 = vunpack.c.l.b16 %v736
        %v767 = vunpack.c.h.b16 %v736
        %v768 = vpack.c.b16 %v766, %v764
        %v769 = vpack.c.b16 %v767, %v765
        %v771 = vshrl.u32 %v768, 16
        %v773 = vshll.u32 %v768, 16
        %v775 = vrot.slane %v773, 1
        %v776 = vor.u32 %v771, %v775
        %v778 = vshrl.u32 %v769, 16
        %v780 = vshll.u32 %v769, 16
        %v782 = vrot.slane %v780, 1
        %v783 = vor.u32 %v778, %v782
        %v809 = vunpack.c.l.b16 %v738
        %v810 = vunpack.c.l.b16 %v739
        %v811 = vunpack.c.l.b16 %v740
        %v812 = vunpack.c.l.b16 %v741
        %v813 = vunpack.c.l.b16 %v742
        %v814 = vunpack.c.l.b16 %v743
        %v815 = vunpack.c.l.b16 %v744
        %v816 = vunpack.c.l.b16 %v745
        %v817 = vunpack.c.l.b16 %v746
        %v818 = vunpack.c.l.b16 %v747
        %v819 = vunpack.c.l.b16 %v748
        %v820 = vunpack.c.l.b16 %v749
        %v821 = vunpack.c.l.b16 %v750
        %v822 = vunpack.c.l.b16 %v751
        %v823 = vunpack.c.l.b16 %v752
        %v824 = vunpack.c.l.b16 %v753
        %v825 = vunpack.c.l.b16 %v754
        %v826 = vunpack.c.l.b16 %v755
        %v827 = vunpack.c.l.b16 %v756
        %v828 = vunpack.c.l.b16 %v757
        %v829 = vunpack.c.l.b16 %v758
        %v830 = vunpack.c.l.b16 %v759
        %v831 = vunpack.c.l.b16 %v760
        %v832 = vunpack.c.l.b16 %v761
        %v833 = vpack.c.b16 %v810, %v809
        %v834 = vpack.c.b16 %v812, %v811
        %v835 = vpack.c.b16 %v814, %v813
        %v836 = vpack.c.b16 %v816, %v815
        %v837 = vpack.c.b16 %v818, %v817
        %v838 = vpack.c.b16 %v820, %v819
        %v839 = vpack.c.b16 %v822, %v821
        %v840 = vpack.c.b16 %v824, %v823
        %v841 = vpack.c.b16 %v826, %v825
        %v842 = vpack.c.b16 %v828, %v827
        %v843 = vpack.c.b16 %v830, %v829
        %v844 = vpack.c.b16 %v832, %v831
        %v858 = vsel %vm327, %v783, 0
        %860 = vmatpush.bf16.msra.mxu0 %v840
        %861 = vmatpush.bf16.msra.mxu0 %v839
        %862 = vmatpush.bf16.msra.mxu0 %v838
        %863 = vmatpush.bf16.msra.mxu0 %v837
        %864 = vmatpush.bf16.msra.mxu0 %v836
        %865 = vmatpush.bf16.msra.mxu0 %v835
        %866 = vmatpush.bf16.msra.mxu0 %v834
        %867 = vmatpush.bf16.msra.mxu0 %v833
        %868 = vmatmul.bf16.gmra.mxu0 %v776
        %v869 = vpop.f32.mrf.mxu0
        %v870 = vadd.f32 0.0, %v869
        %v871 = vpop.f32.mrf.mxu0
        %872 = vdwg.mxu0
        %873 = vmatpush.bf16.msra.mxu0 0
        %874 = vmatpush.bf16.msra.mxu0 0
        %875 = vmatpush.bf16.msra.mxu0 0
        %876 = vmatpush.bf16.msra.mxu0 0
        %877 = vmatpush.bf16.msra.mxu0 %v844
        %878 = vmatpush.bf16.msra.mxu0 %v843
        %879 = vmatpush.bf16.msra.mxu0 %v842
        %880 = vmatpush.bf16.msra.mxu0 %v841
        %881 = vmatmul.bf16.gmra.mxu0 %v858
        %v882 = vpop.f32.mrf.mxu0
        %v883 = vadd.f32 %v870, %v882
        %v884 = vpop.f32.mrf.mxu0
        %885 = vdwg.mxu0
        %v886 = vadd.f32 %v734, %v883
        %v887 = vld [vmem:[%s600] sm:$0xee]
        %s888 = scalar_lea.vmem %s1, 480
        %v889 = vld [vmem:[%s888] sm:$0xf]
        %v890 = vld [vmem:[%s888 + $0x4] sm:$0xf]
        %v891 = vld [vmem:[%s888 + $0x8] sm:$0xf]
        %v892 = vld [vmem:[%s888 + $0xc] sm:$0xf]
        %v893 = vld [vmem:[%s888 + $0x10] sm:$0xf]
        %v894 = vld [vmem:[%s888 + $0x14] sm:$0xf]
        %v895 = vld [vmem:[%s888 + $0x18] sm:$0xf]
        %v896 = vld [vmem:[%s888 + $0x1c] sm:$0xf]
        %v897 = vld [vmem:[%s888 + $0x20] sm:$0xf]
        %v898 = vld [vmem:[%s888 + $0x24] sm:$0xf]
        %v899 = vld [vmem:[%s888 + $0x28] sm:$0xf]
        %v900 = vld [vmem:[%s888 + $0x2c] sm:$0xf]
        %v901 = vld [vmem:[%s888 + $0x30] sm:$0xf]
        %v902 = vld [vmem:[%s888 + $0x34] sm:$0xf]
        %v903 = vld [vmem:[%s888 + $0x38] sm:$0xf]
        %v904 = vld [vmem:[%s888 + $0x3c] sm:$0xf]
        %v905 = vld [vmem:[%s888 + $0x40] sm:$0xf]
        %v906 = vld [vmem:[%s888 + $0x44] sm:$0xf]
        %v907 = vld [vmem:[%s888 + $0x48] sm:$0xf]
        %v908 = vld [vmem:[%s888 + $0x4c] sm:$0xf]
        %v909 = vld [vmem:[%s888 + $0x50] sm:$0xf]
        %v910 = vld [vmem:[%s888 + $0x54] sm:$0xf]
        %v911 = vld [vmem:[%s888 + $0x58] sm:$0xf]
        %v912 = vld [vmem:[%s888 + $0x5c] sm:$0xf]
        %v914 = vunpack.c.l.b16 %v887
        %v915 = vunpack.c.h.b16 %v887
        %v916 = vpack.c.b16 %v766, %v914
        %v917 = vpack.c.b16 %v767, %v915
        %v918 = vrot.slane %v916, 1
        %v919 = vrot.slane %v917, 1
        %v945 = vunpack.c.l.b16 %v889
        %v946 = vunpack.c.l.b16 %v890
        %v947 = vunpack.c.l.b16 %v891
        %v948 = vunpack.c.l.b16 %v892
        %v949 = vunpack.c.l.b16 %v893
        %v950 = vunpack.c.l.b16 %v894
        %v951 = vunpack.c.l.b16 %v895
        %v952 = vunpack.c.l.b16 %v896
        %v953 = vunpack.c.l.b16 %v897
        %v954 = vunpack.c.l.b16 %v898
        %v955 = vunpack.c.l.b16 %v899
        %v956 = vunpack.c.l.b16 %v900
        %v957 = vunpack.c.l.b16 %v901
        %v958 = vunpack.c.l.b16 %v902
        %v959 = vunpack.c.l.b16 %v903
        %v960 = vunpack.c.l.b16 %v904
        %v961 = vunpack.c.l.b16 %v905
        %v962 = vunpack.c.l.b16 %v906
        %v963 = vunpack.c.l.b16 %v907
        %v964 = vunpack.c.l.b16 %v908
        %v965 = vunpack.c.l.b16 %v909
        %v966 = vunpack.c.l.b16 %v910
        %v967 = vunpack.c.l.b16 %v911
        %v968 = vunpack.c.l.b16 %v912
        %v969 = vpack.c.b16 %v946, %v945
        %v970 = vpack.c.b16 %v948, %v947
        %v971 = vpack.c.b16 %v950, %v949
        %v972 = vpack.c.b16 %v952, %v951
        %v973 = vpack.c.b16 %v954, %v953
        %v974 = vpack.c.b16 %v956, %v955
        %v975 = vpack.c.b16 %v958, %v957
        %v976 = vpack.c.b16 %v960, %v959
        %v977 = vpack.c.b16 %v962, %v961
        %v978 = vpack.c.b16 %v964, %v963
        %v979 = vpack.c.b16 %v966, %v965
        %v980 = vpack.c.b16 %v968, %v967
        %v994 = vsel %vm327, %v919, 0
        %996 = vmatpush.bf16.msra.mxu0 %v976
        %997 = vmatpush.bf16.msra.mxu0 %v975
        %998 = vmatpush.bf16.msra.mxu0 %v974
        %999 = vmatpush.bf16.msra.mxu0 %v973
        %1000 = vmatpush.bf16.msra.mxu0 %v972
        %1001 = vmatpush.bf16.msra.mxu0 %v971
        %1002 = vmatpush.bf16.msra.mxu0 %v970
        %1003 = vmatpush.bf16.msra.mxu0 %v969
        %1004 = vmatmul.bf16.gmra.mxu0 %v918
        %v1005 = vpop.f32.mrf.mxu0
        %v1006 = vadd.f32 0.0, %v1005
        %v1007 = vpop.f32.mrf.mxu0
        %1008 = vdwg.mxu0
        %1009 = vmatpush.bf16.msra.mxu0 0
        %1010 = vmatpush.bf16.msra.mxu0 0
        %1011 = vmatpush.bf16.msra.mxu0 0
        %1012 = vmatpush.bf16.msra.mxu0 0
        %1013 = vmatpush.bf16.msra.mxu0 %v980
        %1014 = vmatpush.bf16.msra.mxu0 %v979
        %1015 = vmatpush.bf16.msra.mxu0 %v978
        %1016 = vmatpush.bf16.msra.mxu0 %v977
        %1017 = vmatmul.bf16.gmra.mxu0 %v994
        %v1018 = vpop.f32.mrf.mxu0
        %v1019 = vadd.f32 %v1006, %v1018
        %v1020 = vpop.f32.mrf.mxu0
        %1021 = vdwg.mxu0
        %v1022 = vadd.f32 %v886, %v1019
        %s1023 = sadd.s32 %s173, 2
        %s1024 = smul.u32 %s1023, 4
        %s1025 = smul.addr %s1024, 4
        %s1026 = scalar_lea.vmem %s165, %s1025
        %v1027 = vld [vmem:[%s1026] sm:$0xff]
        %s1028 = scalar_lea.vmem %s1, 576
        %v1029 = vld [vmem:[%s1028] sm:$0xf]
        %v1030 = vld [vmem:[%s1028 + $0x4] sm:$0xf]
        %v1031 = vld [vmem:[%s1028 + $0x8] sm:$0xf]
        %v1032 = vld [vmem:[%s1028 + $0xc] sm:$0xf]
        %v1033 = vld [vmem:[%s1028 + $0x10] sm:$0xf]
        %v1034 = vld [vmem:[%s1028 + $0x14] sm:$0xf]
        %v1035 = vld [vmem:[%s1028 + $0x18] sm:$0xf]
        %v1036 = vld [vmem:[%s1028 + $0x1c] sm:$0xf]
        %v1037 = vld [vmem:[%s1028 + $0x20] sm:$0xf]
        %v1038 = vld [vmem:[%s1028 + $0x24] sm:$0xf]
        %v1039 = vld [vmem:[%s1028 + $0x28] sm:$0xf]
        %v1040 = vld [vmem:[%s1028 + $0x2c] sm:$0xf]
        %v1041 = vld [vmem:[%s1028 + $0x30] sm:$0xf]
        %v1042 = vld [vmem:[%s1028 + $0x34] sm:$0xf]
        %v1043 = vld [vmem:[%s1028 + $0x38] sm:$0xf]
        %v1044 = vld [vmem:[%s1028 + $0x3c] sm:$0xf]
        %v1045 = vld [vmem:[%s1028 + $0x40] sm:$0xf]
        %v1046 = vld [vmem:[%s1028 + $0x44] sm:$0xf]
        %v1047 = vld [vmem:[%s1028 + $0x48] sm:$0xf]
        %v1048 = vld [vmem:[%s1028 + $0x4c] sm:$0xf]
        %v1049 = vld [vmem:[%s1028 + $0x50] sm:$0xf]
        %v1050 = vld [vmem:[%s1028 + $0x54] sm:$0xf]
        %v1051 = vld [vmem:[%s1028 + $0x58] sm:$0xf]
        %v1052 = vld [vmem:[%s1028 + $0x5c] sm:$0xf]
        %v1054 = vunpack.c.l.b16 %v1027
        %v1055 = vunpack.c.h.b16 %v1027
        %v1056 = vpack.c.b16 %v1054, %v1054
        %v1057 = vpack.c.b16 %v1055, %v1055
        %v1083 = vunpack.c.l.b16 %v1029
        %v1084 = vunpack.c.l.b16 %v1030
        %v1085 = vunpack.c.l.b16 %v1031
        %v1086 = vunpack.c.l.b16 %v1032
        %v1087 = vunpack.c.l.b16 %v1033
        %v1088 = vunpack.c.l.b16 %v1034
        %v1089 = vunpack.c.l.b16 %v1035
        %v1090 = vunpack.c.l.b16 %v1036
        %v1091 = vunpack.c.l.b16 %v1037
        %v1092 = vunpack.c.l.b16 %v1038
        %v1093 = vunpack.c.l.b16 %v1039
        %v1094 = vunpack.c.l.b16 %v1040
        %v1095 = vunpack.c.l.b16 %v1041
        %v1096 = vunpack.c.l.b16 %v1042
        %v1097 = vunpack.c.l.b16 %v1043
        %v1098 = vunpack.c.l.b16 %v1044
        %v1099 = vunpack.c.l.b16 %v1045
        %v1100 = vunpack.c.l.b16 %v1046
        %v1101 = vunpack.c.l.b16 %v1047
        %v1102 = vunpack.c.l.b16 %v1048
        %v1103 = vunpack.c.l.b16 %v1049
        %v1104 = vunpack.c.l.b16 %v1050
        %v1105 = vunpack.c.l.b16 %v1051
        %v1106 = vunpack.c.l.b16 %v1052
        %v1107 = vpack.c.b16 %v1084, %v1083
        %v1108 = vpack.c.b16 %v1086, %v1085
        %v1109 = vpack.c.b16 %v1088, %v1087
        %v1110 = vpack.c.b16 %v1090, %v1089
        %v1111 = vpack.c.b16 %v1092, %v1091
        %v1112 = vpack.c.b16 %v1094, %v1093
        %v1113 = vpack.c.b16 %v1096, %v1095
        %v1114 = vpack.c.b16 %v1098, %v1097
        %v1115 = vpack.c.b16 %v1100, %v1099
        %v1116 = vpack.c.b16 %v1102, %v1101
        %v1117 = vpack.c.b16 %v1104, %v1103
        %v1118 = vpack.c.b16 %v1106, %v1105
        %v1132 = vsel %vm327, %v1057, 0
        %1134 = vmatpush.bf16.msra.mxu0 %v1114
        %1135 = vmatpush.bf16.msra.mxu0 %v1113
        %1136 = vmatpush.bf16.msra.mxu0 %v1112
        %1137 = vmatpush.bf16.msra.mxu0 %v1111
        %1138 = vmatpush.bf16.msra.mxu0 %v1110
        %1139 = vmatpush.bf16.msra.mxu0 %v1109
        %1140 = vmatpush.bf16.msra.mxu0 %v1108
        %1141 = vmatpush.bf16.msra.mxu0 %v1107
        %1142 = vmatmul.bf16.gmra.mxu0 %v1056
        %v1143 = vpop.f32.mrf.mxu0
        %v1144 = vadd.f32 0.0, %v1143
        %v1145 = vpop.f32.mrf.mxu0
        %1146 = vdwg.mxu0
        %1147 = vmatpush.bf16.msra.mxu0 0
        %1148 = vmatpush.bf16.msra.mxu0 0
        %1149 = vmatpush.bf16.msra.mxu0 0
        %1150 = vmatpush.bf16.msra.mxu0 0
        %1151 = vmatpush.bf16.msra.mxu0 %v1118
        %1152 = vmatpush.bf16.msra.mxu0 %v1117
        %1153 = vmatpush.bf16.msra.mxu0 %v1116
        %1154 = vmatpush.bf16.msra.mxu0 %v1115
        %1155 = vmatmul.bf16.gmra.mxu0 %v1132
        %v1156 = vpop.f32.mrf.mxu0
        %v1157 = vadd.f32 %v1144, %v1156
        %v1158 = vpop.f32.mrf.mxu0
        %1159 = vdwg.mxu0
        %v1160 = vadd.f32 %v1022, %v1157
        %v1161 = vld [vmem:[%s1026] sm:$0xff]
        %v1162 = vld [vmem:[%s1026 + $0x8] sm:$0x11]
        %s1163 = scalar_lea.vmem %s1, 672
        %v1164 = vld [vmem:[%s1163] sm:$0xf]
        %v1165 = vld [vmem:[%s1163 + $0x4] sm:$0xf]
        %v1166 = vld [vmem:[%s1163 + $0x8] sm:$0xf]
        %v1167 = vld [vmem:[%s1163 + $0xc] sm:$0xf]
        %v1168 = vld [vmem:[%s1163 + $0x10] sm:$0xf]
        %v1169 = vld [vmem:[%s1163 + $0x14] sm:$0xf]
        %v1170 = vld [vmem:[%s1163 + $0x18] sm:$0xf]
        %v1171 = vld [vmem:[%s1163 + $0x1c] sm:$0xf]
        %v1172 = vld [vmem:[%s1163 + $0x20] sm:$0xf]
        %v1173 = vld [vmem:[%s1163 + $0x24] sm:$0xf]
        %v1174 = vld [vmem:[%s1163 + $0x28] sm:$0xf]
        %v1175 = vld [vmem:[%s1163 + $0x2c] sm:$0xf]
        %v1176 = vld [vmem:[%s1163 + $0x30] sm:$0xf]
        %v1177 = vld [vmem:[%s1163 + $0x34] sm:$0xf]
        %v1178 = vld [vmem:[%s1163 + $0x38] sm:$0xf]
        %v1179 = vld [vmem:[%s1163 + $0x3c] sm:$0xf]
        %v1180 = vld [vmem:[%s1163 + $0x40] sm:$0xf]
        %v1181 = vld [vmem:[%s1163 + $0x44] sm:$0xf]
        %v1182 = vld [vmem:[%s1163 + $0x48] sm:$0xf]
        %v1183 = vld [vmem:[%s1163 + $0x4c] sm:$0xf]
        %v1184 = vld [vmem:[%s1163 + $0x50] sm:$0xf]
        %v1185 = vld [vmem:[%s1163 + $0x54] sm:$0xf]
        %v1186 = vld [vmem:[%s1163 + $0x58] sm:$0xf]
        %v1187 = vld [vmem:[%s1163 + $0x5c] sm:$0xf]
        %v1190 = vunpack.c.l.b16 %v1161
        %v1191 = vunpack.c.h.b16 %v1161
        %v1192 = vunpack.c.l.b16 %v1162
        %v1193 = vunpack.c.h.b16 %v1162
        %v1194 = vpack.c.b16 %v1192, %v1190
        %v1195 = vpack.c.b16 %v1193, %v1191
        %v1197 = vshrl.u32 %v1194, 16
        %v1199 = vshll.u32 %v1194, 16
        %v1201 = vrot.slane %v1199, 1
        %v1202 = vor.u32 %v1197, %v1201
        %v1204 = vshrl.u32 %v1195, 16
        %v1206 = vshll.u32 %v1195, 16
        %v1208 = vrot.slane %v1206, 1
        %v1209 = vor.u32 %v1204, %v1208
        %v1235 = vunpack.c.l.b16 %v1164
        %v1236 = vunpack.c.l.b16 %v1165
        %v1237 = vunpack.c.l.b16 %v1166
        %v1238 = vunpack.c.l.b16 %v1167
        %v1239 = vunpack.c.l.b16 %v1168
        %v1240 = vunpack.c.l.b16 %v1169
        %v1241 = vunpack.c.l.b16 %v1170
        %v1242 = vunpack.c.l.b16 %v1171
        %v1243 = vunpack.c.l.b16 %v1172
        %v1244 = vunpack.c.l.b16 %v1173
        %v1245 = vunpack.c.l.b16 %v1174
        %v1246 = vunpack.c.l.b16 %v1175
        %v1247 = vunpack.c.l.b16 %v1176
        %v1248 = vunpack.c.l.b16 %v1177
        %v1249 = vunpack.c.l.b16 %v1178
        %v1250 = vunpack.c.l.b16 %v1179
        %v1251 = vunpack.c.l.b16 %v1180
        %v1252 = vunpack.c.l.b16 %v1181
        %v1253 = vunpack.c.l.b16 %v1182
        %v1254 = vunpack.c.l.b16 %v1183
        %v1255 = vunpack.c.l.b16 %v1184
        %v1256 = vunpack.c.l.b16 %v1185
        %v1257 = vunpack.c.l.b16 %v1186
        %v1258 = vunpack.c.l.b16 %v1187
        %v1259 = vpack.c.b16 %v1236, %v1235
        %v1260 = vpack.c.b16 %v1238, %v1237
        %v1261 = vpack.c.b16 %v1240, %v1239
        %v1262 = vpack.c.b16 %v1242, %v1241
        %v1263 = vpack.c.b16 %v1244, %v1243
        %v1264 = vpack.c.b16 %v1246, %v1245
        %v1265 = vpack.c.b16 %v1248, %v1247
        %v1266 = vpack.c.b16 %v1250, %v1249
        %v1267 = vpack.c.b16 %v1252, %v1251
        %v1268 = vpack.c.b16 %v1254, %v1253
        %v1269 = vpack.c.b16 %v1256, %v1255
        %v1270 = vpack.c.b16 %v1258, %v1257
        %v1284 = vsel %vm327, %v1209, 0
        %1286 = vmatpush.bf16.msra.mxu0 %v1266
        %1287 = vmatpush.bf16.msra.mxu0 %v1265
        %1288 = vmatpush.bf16.msra.mxu0 %v1264
        %1289 = vmatpush.bf16.msra.mxu0 %v1263
        %1290 = vmatpush.bf16.msra.mxu0 %v1262
        %1291 = vmatpush.bf16.msra.mxu0 %v1261
        %1292 = vmatpush.bf16.msra.mxu0 %v1260
        %1293 = vmatpush.bf16.msra.mxu0 %v1259
        %1294 = vmatmul.bf16.gmra.mxu0 %v1202
        %v1295 = vpop.f32.mrf.mxu0
        %v1296 = vadd.f32 0.0, %v1295
        %v1297 = vpop.f32.mrf.mxu0
        %1298 = vdwg.mxu0
        %1299 = vmatpush.bf16.msra.mxu0 0
        %1300 = vmatpush.bf16.msra.mxu0 0
        %1301 = vmatpush.bf16.msra.mxu0 0
        %1302 = vmatpush.bf16.msra.mxu0 0
        %1303 = vmatpush.bf16.msra.mxu0 %v1270
        %1304 = vmatpush.bf16.msra.mxu0 %v1269
        %1305 = vmatpush.bf16.msra.mxu0 %v1268
        %1306 = vmatpush.bf16.msra.mxu0 %v1267
        %1307 = vmatmul.bf16.gmra.mxu0 %v1284
        %v1308 = vpop.f32.mrf.mxu0
        %v1309 = vadd.f32 %v1296, %v1308
        %v1310 = vpop.f32.mrf.mxu0
        %1311 = vdwg.mxu0
        %v1312 = vadd.f32 %v1160, %v1309
        %v1313 = vld [vmem:[%s1026] sm:$0xee]
        %s1314 = scalar_lea.vmem %s1, 768
        %v1315 = vld [vmem:[%s1314] sm:$0xf]
        %v1316 = vld [vmem:[%s1314 + $0x4] sm:$0xf]
        %v1317 = vld [vmem:[%s1314 + $0x8] sm:$0xf]
        %v1318 = vld [vmem:[%s1314 + $0xc] sm:$0xf]
        %v1319 = vld [vmem:[%s1314 + $0x10] sm:$0xf]
        %v1320 = vld [vmem:[%s1314 + $0x14] sm:$0xf]
        %v1321 = vld [vmem:[%s1314 + $0x18] sm:$0xf]
        %v1322 = vld [vmem:[%s1314 + $0x1c] sm:$0xf]
        %v1323 = vld [vmem:[%s1314 + $0x20] sm:$0xf]
        %v1324 = vld [vmem:[%s1314 + $0x24] sm:$0xf]
        %v1325 = vld [vmem:[%s1314 + $0x28] sm:$0xf]
        %v1326 = vld [vmem:[%s1314 + $0x2c] sm:$0xf]
        %v1327 = vld [vmem:[%s1314 + $0x30] sm:$0xf]
        %v1328 = vld [vmem:[%s1314 + $0x34] sm:$0xf]
        %v1329 = vld [vmem:[%s1314 + $0x38] sm:$0xf]
        %v1330 = vld [vmem:[%s1314 + $0x3c] sm:$0xf]
        %v1331 = vld [vmem:[%s1314 + $0x40] sm:$0xf]
        %v1332 = vld [vmem:[%s1314 + $0x44] sm:$0xf]
        %v1333 = vld [vmem:[%s1314 + $0x48] sm:$0xf]
        %v1334 = vld [vmem:[%s1314 + $0x4c] sm:$0xf]
        %v1335 = vld [vmem:[%s1314 + $0x50] sm:$0xf]
        %v1336 = vld [vmem:[%s1314 + $0x54] sm:$0xf]
        %v1337 = vld [vmem:[%s1314 + $0x58] sm:$0xf]
        %v1338 = vld [vmem:[%s1314 + $0x5c] sm:$0xf]
        %v1340 = vunpack.c.l.b16 %v1313
        %v1341 = vunpack.c.h.b16 %v1313
        %v1342 = vpack.c.b16 %v1192, %v1340
        %v1343 = vpack.c.b16 %v1193, %v1341
        %v1344 = vrot.slane %v1342, 1
        %v1345 = vrot.slane %v1343, 1
        %v1371 = vunpack.c.l.b16 %v1315
        %v1372 = vunpack.c.l.b16 %v1316
        %v1373 = vunpack.c.l.b16 %v1317
        %v1374 = vunpack.c.l.b16 %v1318
        %v1375 = vunpack.c.l.b16 %v1319
        %v1376 = vunpack.c.l.b16 %v1320
        %v1377 = vunpack.c.l.b16 %v1321
        %v1378 = vunpack.c.l.b16 %v1322
        %v1379 = vunpack.c.l.b16 %v1323
        %v1380 = vunpack.c.l.b16 %v1324
        %v1381 = vunpack.c.l.b16 %v1325
        %v1382 = vunpack.c.l.b16 %v1326
        %v1383 = vunpack.c.l.b16 %v1327
        %v1384 = vunpack.c.l.b16 %v1328
        %v1385 = vunpack.c.l.b16 %v1329
        %v1386 = vunpack.c.l.b16 %v1330
        %v1387 = vunpack.c.l.b16 %v1331
        %v1388 = vunpack.c.l.b16 %v1332
        %v1389 = vunpack.c.l.b16 %v1333
        %v1390 = vunpack.c.l.b16 %v1334
        %v1391 = vunpack.c.l.b16 %v1335
        %v1392 = vunpack.c.l.b16 %v1336
        %v1393 = vunpack.c.l.b16 %v1337
        %v1394 = vunpack.c.l.b16 %v1338
        %v1395 = vpack.c.b16 %v1372, %v1371
        %v1396 = vpack.c.b16 %v1374, %v1373
        %v1397 = vpack.c.b16 %v1376, %v1375
        %v1398 = vpack.c.b16 %v1378, %v1377
        %v1399 = vpack.c.b16 %v1380, %v1379
        %v1400 = vpack.c.b16 %v1382, %v1381
        %v1401 = vpack.c.b16 %v1384, %v1383
        %v1402 = vpack.c.b16 %v1386, %v1385
        %v1403 = vpack.c.b16 %v1388, %v1387
        %v1404 = vpack.c.b16 %v1390, %v1389
        %v1405 = vpack.c.b16 %v1392, %v1391
        %v1406 = vpack.c.b16 %v1394, %v1393
        %v1420 = vsel %vm327, %v1345, 0
        %1422 = vmatpush.bf16.msra.mxu0 %v1402
        %1423 = vmatpush.bf16.msra.mxu0 %v1401
        %1424 = vmatpush.bf16.msra.mxu0 %v1400
        %1425 = vmatpush.bf16.msra.mxu0 %v1399
        %1426 = vmatpush.bf16.msra.mxu0 %v1398
        %1427 = vmatpush.bf16.msra.mxu0 %v1397
        %1428 = vmatpush.bf16.msra.mxu0 %v1396
        %1429 = vmatpush.bf16.msra.mxu0 %v1395
        %1430 = vmatmul.bf16.gmra.mxu0 %v1344
        %v1431 = vpop.f32.mrf.mxu0
        %v1432 = vadd.f32 0.0, %v1431
        %v1433 = vpop.f32.mrf.mxu0
        %1434 = vdwg.mxu0
        %1435 = vmatpush.bf16.msra.mxu0 0
        %1436 = vmatpush.bf16.msra.mxu0 0
        %1437 = vmatpush.bf16.msra.mxu0 0
        %1438 = vmatpush.bf16.msra.mxu0 0
        %1439 = vmatpush.bf16.msra.mxu0 %v1406
        %1440 = vmatpush.bf16.msra.mxu0 %v1405
        %1441 = vmatpush.bf16.msra.mxu0 %v1404
        %1442 = vmatpush.bf16.msra.mxu0 %v1403
        %1443 = vmatmul.bf16.gmra.mxu0 %v1420
        %v1444 = vpop.f32.mrf.mxu0
        %v1445 = vadd.f32 %v1432, %v1444
        %v1446 = vpop.f32.mrf.mxu0
        %1447 = vdwg.mxu0
        %v1448 = vadd.f32 %v1312, %v1445
        %v1449 = vld [vmem:[%s2] sm:$0x1]
        %v1451 = vperm.slane %v1449, 0
        %v1453 = vadd.f32 %v1448, %v1451
        %v1454 = vmax.f32 %v1453, 0.0
        %v1455 = vpack.c.bf16 %v1454, %v1454
        %s1456 = smul.addr %s173, 4
        %s1457 = scalar_lea.vmem %s170, %s1456
        %vm1458 = vcmask 125952
        %1459 = vst.msk [vmem:[%s1457] sm:$0xf] %vm1458, %v1455
      $region37: #{boundary_head_forward.7} parent=31 // loop_footer
        %s177 = sadd.s32 1, %s173
      $region38: #{boundary_head_forward.7} parent=31 // loop_footer_branch
        %172 = sbr.rel target = $region34
      $region39: #{boundary_head_forward.7} parent=31 // loop_exit
        _
      %p1460 = scmp.lt.s32.totalorder %s14, 1
      %s1461 = scalar_select %p1460, %s14, 1
      %s1462 = smul.addr %s1461, 8
      %s1463 = smul.addr %s1462, 4
      %s1464 = scalar_lea.vmem %s3, %s1463
      // Predicated region
      $region40: #{boundary_head_forward.7} parent=31 // pred_check
        %p1465 = pneg %p100
      $region41: #{boundary_head_forward.7} parent=31 // pred_check_branch
        %1467 = sbr.rel (%p1465) target = $region43
      $region42: #{boundary_head_forward.7} parent=31 // pred_region
        _
      $region43: #{boundary_head_forward.7} parent=31 // pred_fallthru
        _
    $region32: #{boundary_head_forward.7} parent=5 // pred_fallthru
      _
    %p1468 = scmp.le.s32.totalorder 2, %s9
    // Predicated region
    $region44: #{boundary_head_forward.7} parent=5 // pred_check
      %p1469 = pneg %p1468
    $region45: #{boundary_head_forward.7} parent=5 // pred_check_branch
      %1471 = sbr.rel (%p1469) target = $region47
    $region46: #{boundary_head_forward.7} parent=5 // pred_region
      %s1472 = ssub.s32 %s9, 2
      // Predicated region
      $region48: #{boundary_head_forward.7} parent=46 // pred_check
        %p1473 = pneg %p106
      $region49: #{boundary_head_forward.7} parent=46 // pred_check_branch
        %1475 = sbr.rel (%p1473) target = $region51
      $region50: #{boundary_head_forward.7} parent=46 // pred_region
        %p1476 = scmp.lt.s32.totalorder %s15, 1
        %s1477 = scalar_select %p1476, %s15, 1
        %s1478 = smul.addr %s1477, 8
        %s1479 = smul.addr %s1478, 4
        %s1480 = scalar_lea.vmem %s3, %s1479
      $region51: #{boundary_head_forward.7} parent=46 // pred_fallthru
        _
    $region47: #{boundary_head_forward.7} parent=5 // pred_fallthru
      _
  $region6: #{boundary_head_forward.7} parent=0 // loop_footer
    %s13 = sadd.s32 1, %s9
  $region7: #{boundary_head_forward.7} parent=0 // loop_footer_branch
    %8 = sbr.rel target = $region3
  $region8: #{boundary_head_forward.7} parent=0 // loop_exit
    _

// kernel: boundary_head_forward.8
$region0: #{boundary_head_forward.8}
  #allocation0 [shape = 'u32[]', space=smem, size = 0x4, offset = 0x4, fixed_abs, tag = 'smem constant byte address 0x4 - core index']
  #allocation1 [shape = 'u32[72,128]{1,0:T(1,128)}', space=vmem, size = 0x9000, scoped, tag = 'internal scratch']
  %s0 = inlined_call_operand.vmem [shape: bf16[2,8,8,192], index: 0, kind: input, shape index: {}]
  %s1 = inlined_call_operand.vmem [shape: bf16[9,192,16], index: 1, kind: input, shape index: {}]
  %s2 = inlined_call_operand.vmem [shape: f32[1,16], index: 2, kind: input, shape index: {}]
  %s3 = inlined_call_operand.vmem [shape: bf16[2,6,6,16], index: 3, kind: output, shape index: {}]
  %s4 = sld [smem:[#allocation0]]
  $region52: #{boundary_head_forward.8} parent=0
    _
  %s6 = ssub.s32 1, %s4
  %s7 = scalar_select 0, %s6, %s4
  loop: start=0, step=1, limit=4
  $region2: #{boundary_head_forward.8} parent=0 // loop_pre_header
    _
  $region3: #{boundary_head_forward.8} parent=0 // loop_header
    %s9 = sphi 0, %s13
    %p10 = scmp.ge.s32.totalorder %s9, 4
    %s19 = sphi 0, %s21
    %s22 = sphi 0, %s19
    %s23 = sphi 0, %s22
    %s39 = sphi 0, %s23
    %s43 = sphi 0, %s43
    %s45 = sphi 0, %s43
    %s46 = sphi 0, %s45
    %s60 = sphi 0, %s46
    %s64 = sphi 0, %s64
    %s66 = sphi 0, %s64
    %s67 = sphi 0, %s66
    %s81 = sphi 0, %s67
    %s87 = sphi 0, %s89
    %s90 = sphi 0, %s87
    %s91 = sphi 0, %s90
    %s107 = sphi 0, %s91
  $region4: #{boundary_head_forward.8} parent=0 // loop_header_branch
    %12 = sbr.rel (%p10) target = $region8
  $region5: #{boundary_head_forward.8} parent=0 // loop_body
    %s14 = ssub.s32 %s9, 1
    %s15 = ssub.s32 %s9, 2
    %s16 = sadd.s32 %s9, 1
    %s17 = ssub.s32 %s9, %s16
    %p18 = scmp.eq.s32.totalorder %s17, 0
    %s20 = sadd.s32 %s19, 1
    %s21 = scalar_select %p18, %s19, %s20
    %p24 = pneg %p18
    %p25 = scmp.eq.s32.totalorder %s9, 1
    %p26 = por %p24, %p25
    %p27 = scmp.ne.s32.totalorder %s19, %s22
    %p28 = scmp.eq.s32.totalorder %s9, 0
    %p29 = por %p27, %p28
    %p30 = scmp.ne.s32.totalorder %s19, %s22
    %p31 = scmp.eq.s32.totalorder %s14, 1
    %p32 = por %p30, %p31
    %p33 = scmp.ne.s32.totalorder %s22, %s23
    %p34 = scmp.eq.s32.totalorder %s14, 0
    %p35 = por %p33, %p34
    %p36 = scmp.ne.s32.totalorder %s22, %s23
    %p37 = scmp.eq.s32.totalorder %s15, 1
    %p38 = por %p36, %p37
    %p40 = scmp.ne.s32.totalorder %s23, %s39
    %p41 = scmp.eq.s32.totalorder %s15, 0
    %p42 = por %p40, %p41
    %s44 = sadd.s32 %s43, 1
    %p47 = scmp.eq.s32.totalorder %s9, 1
    %p48 = scmp.ne.s32.totalorder %s43, %s45
    %p49 = scmp.eq.s32.totalorder %s9, 0
    %p50 = por %p48, %p49
    %p51 = scmp.ne.s32.totalorder %s43, %s45
    %p52 = scmp.eq.s32.totalorder %s14, 1
    %p53 = por %p51, %p52
    %p54 = scmp.ne.s32.totalorder %s45, %s46
    %p55 = scmp.eq.s32.totalorder %s14, 0
    %p56 = por %p54, %p55
    %p57 = scmp.ne.s32.totalorder %s45, %s46
    %p58 = scmp.eq.s32.totalorder %s15, 1
    %p59 = por %p57, %p58
    %p61 = scmp.ne.s32.totalorder %s46, %s60
    %p62 = scmp.eq.s32.totalorder %s15, 0
    %p63 = por %p61, %p62
    %s65 = sadd.s32 %s64, 1
    %p68 = scmp.eq.s32.totalorder %s9, 1
    %p69 = scmp.ne.s32.totalorder %s64, %s66
    %p70 = scmp.eq.s32.totalorder %s9, 0
    %p71 = por %p69, %p70
    %p72 = scmp.ne.s32.totalorder %s64, %s66
    %p73 = scmp.eq.s32.totalorder %s14, 1
    %p74 = por %p72, %p73
    %p75 = scmp.ne.s32.totalorder %s66, %s67
    %p76 = scmp.eq.s32.totalorder %s14, 0
    %p77 = por %p75, %p76
    %p78 = scmp.ne.s32.totalorder %s66, %s67
    %p79 = scmp.eq.s32.totalorder %s15, 1
    %p80 = por %p78, %p79
    %p82 = scmp.ne.s32.totalorder %s67, %s81
    %p83 = scmp.eq.s32.totalorder %s15, 0
    %p84 = por %p82, %p83
    %s85 = ssub.s32 %s9, %s16
    %p86 = scmp.eq.s32.totalorder %s85, 0
    %s88 = sadd.s32 %s87, 1
    %s89 = scalar_select %p86, %s87, %s88
    %p92 = pneg %p86
    %p93 = scmp.eq.s32.totalorder %s9, 1
    %p94 = por %p92, %p93
    %p95 = scmp.ne.s32.totalorder %s87, %s90
    %p96 = scmp.eq.s32.totalorder %s9, 0
    %p97 = por %p95, %p96
    %p98 = scmp.ne.s32.totalorder %s87, %s90
    %p99 = scmp.eq.s32.totalorder %s14, 1
    %p100 = por %p98, %p99
    %p101 = scmp.ne.s32.totalorder %s90, %s91
    %p102 = scmp.eq.s32.totalorder %s14, 0
    %p103 = por %p101, %p102
    %p104 = scmp.ne.s32.totalorder %s90, %s91
    %p105 = scmp.eq.s32.totalorder %s15, 1
    %p106 = por %p104, %p105
    %p108 = scmp.ne.s32.totalorder %s91, %s107
    %p109 = scmp.eq.s32.totalorder %s15, 0
    %p110 = por %p108, %p109
    %p111 = scmp.le.s32.totalorder 1, %s9
    %p112 = scmp.lt.s32.totalorder %s9, 3
    %p113 = pnand %p111, %p112
    %p114 = pneg %p113
    // Predicated region
    $region9: #{boundary_head_forward.8} parent=5 // pred_check
      _
    $region10: #{boundary_head_forward.8} parent=5 // pred_check_branch
      %116 = sbr.rel (%p113) target = $region12
    $region11: #{boundary_head_forward.8} parent=5 // pred_region
      %s117 = ssub.s32 %s9, 1
      // Predicated region
      $region13: #{boundary_head_forward.8} parent=11 // pred_check
        %p118 = pneg %p56
      $region14: #{boundary_head_forward.8} parent=11 // pred_check_branch
        %120 = sbr.rel (%p118) target = $region16
      $region15: #{boundary_head_forward.8} parent=11 // pred_region
        _
      $region16: #{boundary_head_forward.8} parent=11 // pred_fallthru
        _
      // Predicated region
      $region17: #{boundary_head_forward.8} parent=11 // pred_check
        %p121 = pneg %p77
      $region18: #{boundary_head_forward.8} parent=11 // pred_check_branch
        %123 = sbr.rel (%p121) target = $region20
      $region19: #{boundary_head_forward.8} parent=11 // pred_region
        _
      $region20: #{boundary_head_forward.8} parent=11 // pred_fallthru
        _
    $region12: #{boundary_head_forward.8} parent=5 // pred_fallthru
      _
    %p124 = scmp.lt.s32.totalorder %s9, 2
    // Predicated region
    $region21: #{boundary_head_forward.8} parent=5 // pred_check
      %p125 = pneg %p124
    $region22: #{boundary_head_forward.8} parent=5 // pred_check_branch
      %127 = sbr.rel (%p125) target = $region24
    $region23: #{boundary_head_forward.8} parent=5 // pred_region
      // Predicated region
      $region25: #{boundary_head_forward.8} parent=23 // pred_check
        %p128 = pneg %p29
      $region26: #{boundary_head_forward.8} parent=23 // pred_check_branch
        %130 = sbr.rel (%p128) target = $region28
      $region27: #{boundary_head_forward.8} parent=23 // pred_region
        %p131 = scmp.lt.s32.totalorder %s9, 1
        %s132 = scalar_select %p131, %s9, 1
        %s133 = smul.addr %s132, 16
        %s134 = smul.addr %s133, 4
        %s135 = scalar_lea.vmem %s0, %s134
      $region28: #{boundary_head_forward.8} parent=23 // pred_fallthru
        _
    $region24: #{boundary_head_forward.8} parent=5 // pred_fallthru
      _
    %p136 = scmp.le.s32.totalorder 1, %s9
    %p137 = scmp.lt.s32.totalorder %s9, 3
    %p138 = pnand %p136, %p137
    %p139 = pneg %p138
    // Predicated region
    $region29: #{boundary_head_forward.8} parent=5 // pred_check
      _
    $region30: #{boundary_head_forward.8} parent=5 // pred_check_branch
      %141 = sbr.rel (%p138) target = $region32
    $region31: #{boundary_head_forward.8} parent=5 // pred_region
      %s142 = ssub.s32 %s9, 1
      %p143 = scmp.lt.s32.totalorder %s14, 1
      %s144 = scalar_select %p143, %s14, 1
      %s145 = smul.addr %s144, 16
      %s146 = smul.addr %s145, 4
      %s147 = scalar_lea.vmem %s0, %s146
      %p148 = pneg %p35
      %p149 = pneg %p32
      %p150 = pneg %p56
      %p151 = pneg %p53
      %p152 = pneg %p77
      %p153 = pneg %p74
      %p154 = pneg %p103
      %p155 = pneg %p100
      %p156 = scmp.lt.s32.totalorder %s14, 1
      %s157 = scalar_select %p156, %s14, 1
      %s158 = smul.addr %s157, 6
      %s159 = smul.addr %s158, 4
      %s160 = scalar_lea.vmem %s3, %s159
      %p161 = scmp.lt.s32.totalorder %s14, 1
      %s162 = scalar_select %p161, %s14, 1
      %s163 = smul.addr %s162, 16
      %s164 = smul.addr %s163, 4
      %s165 = scalar_lea.vmem %s0, %s164
      %p166 = scmp.lt.s32.totalorder %s14, 1
      %s167 = scalar_select %p166, %s14, 1
      %s168 = smul.addr %s167, 6
      %s169 = smul.addr %s168, 4
      %s170 = scalar_lea.vmem %s3, %s169
      loop: start=0, step=1, limit=6
      $region33: #{boundary_head_forward.8} parent=31 // loop_pre_header
        _
      $region34: #{boundary_head_forward.8} parent=31 // loop_header
        %s173 = sphi 0, %s177
        %p174 = scmp.ge.s32.totalorder %s173, 6
      $region35: #{boundary_head_forward.8} parent=31 // loop_header_branch
        %176 = sbr.rel (%p174) target = $region39
      $region36: #{boundary_head_forward.8} parent=31 // loop_body
        %s178 = smul.u32 %s173, 2
        %s179 = smul.addr %s178, 4
        %s180 = scalar_lea.vmem %s165, %s179
        %v181 = vld [vmem:[%s180] sm:$0x77]
        %v182 = vld [vmem:[%s1] sm:$0xf]
        %v183 = vld [vmem:[%s1 + $0x4] sm:$0xf]
        %v184 = vld [vmem:[%s1 + $0x8] sm:$0xf]
        %v185 = vld [vmem:[%s1 + $0xc] sm:$0xf]
        %v186 = vld [vmem:[%s1 + $0x10] sm:$0xf]
        %v187 = vld [vmem:[%s1 + $0x14] sm:$0xf]
        %v188 = vld [vmem:[%s1 + $0x18] sm:$0xf]
        %v189 = vld [vmem:[%s1 + $0x1c] sm:$0xf]
        %v190 = vld [vmem:[%s1 + $0x20] sm:$0xf]
        %v191 = vld [vmem:[%s1 + $0x24] sm:$0xf]
        %v192 = vld [vmem:[%s1 + $0x28] sm:$0xf]
        %v193 = vld [vmem:[%s1 + $0x2c] sm:$0xf]
        %v194 = vld [vmem:[%s1 + $0x30] sm:$0xf]
        %v195 = vld [vmem:[%s1 + $0x34] sm:$0xf]
        %v196 = vld [vmem:[%s1 + $0x38] sm:$0xf]
        %v197 = vld [vmem:[%s1 + $0x3c] sm:$0xf]
        %v198 = vld [vmem:[%s1 + $0x40] sm:$0xf]
        %v199 = vld [vmem:[%s1 + $0x44] sm:$0xf]
        %v200 = vld [vmem:[%s1 + $0x48] sm:$0xf]
        %v201 = vld [vmem:[%s1 + $0x4c] sm:$0xf]
        %v202 = vld [vmem:[%s1 + $0x50] sm:$0xf]
        %v203 = vld [vmem:[%s1 + $0x54] sm:$0xf]
        %v204 = vld [vmem:[%s1 + $0x58] sm:$0xf]
        %v205 = vld [vmem:[%s1 + $0x5c] sm:$0xf]
        %v206 = vld [vmem:[%s180] sm:$0xff]
        %s207 = scalar_lea.vmem %s1, 96
        %v208 = vld [vmem:[%s207] sm:$0xf]
        %v209 = vld [vmem:[%s207 + $0x4] sm:$0xf]
        %v210 = vld [vmem:[%s207 + $0x8] sm:$0xf]
        %v211 = vld [vmem:[%s207 + $0xc] sm:$0xf]
        %v212 = vld [vmem:[%s207 + $0x10] sm:$0xf]
        %v213 = vld [vmem:[%s207 + $0x14] sm:$0xf]
        %v214 = vld [vmem:[%s207 + $0x18] sm:$0xf]
        %v215 = vld [vmem:[%s207 + $0x1c] sm:$0xf]
        %v216 = vld [vmem:[%s207 + $0x20] sm:$0xf]
        %v217 = vld [vmem:[%s207 + $0x24] sm:$0xf]
        %v218 = vld [vmem:[%s207 + $0x28] sm:$0xf]
        %v219 = vld [vmem:[%s207 + $0x2c] sm:$0xf]
        %v220 = vld [vmem:[%s207 + $0x30] sm:$0xf]
        %v221 = vld [vmem:[%s207 + $0x34] sm:$0xf]
        %v222 = vld [vmem:[%s207 + $0x38] sm:$0xf]
        %v223 = vld [vmem:[%s207 + $0x3c] sm:$0xf]
        %v224 = vld [vmem:[%s207 + $0x40] sm:$0xf]
        %v225 = vld [vmem:[%s207 + $0x44] sm:$0xf]
        %v226 = vld [vmem:[%s207 + $0x48] sm:$0xf]
        %v227 = vld [vmem:[%s207 + $0x4c] sm:$0xf]
        %v228 = vld [vmem:[%s207 + $0x50] sm:$0xf]
        %v229 = vld [vmem:[%s207 + $0x54] sm:$0xf]
        %v230 = vld [vmem:[%s207 + $0x58] sm:$0xf]
        %v231 = vld [vmem:[%s207 + $0x5c] sm:$0xf]
        %v233 = vunpack.c.l.b16 %v206
        %v234 = vunpack.c.h.b16 %v206
        %v235 = vpack.c.b16 %v233, %v233
        %v236 = vpack.c.b16 %v234, %v234
        %v238 = vshrl.u32 %v235, 16
        %v240 = vshll.u32 %v235, 16
        %v242 = vrot.slane %v240, 1
        %v243 = vor.u32 %v238, %v242
        %v245 = vshrl.u32 %v236, 16
        %v247 = vshll.u32 %v236, 16
        %v249 = vrot.slane %v247, 1
        %v250 = vor.u32 %v245, %v249
        %v276 = vunpack.c.l.b16 %v208
        %v277 = vunpack.c.l.b16 %v209
        %v278 = vunpack.c.l.b16 %v210
        %v279 = vunpack.c.l.b16 %v211
        %v280 = vunpack.c.l.b16 %v212
        %v281 = vunpack.c.l.b16 %v213
        %v282 = vunpack.c.l.b16 %v214
        %v283 = vunpack.c.l.b16 %v215
        %v284 = vunpack.c.l.b16 %v216
        %v285 = vunpack.c.l.b16 %v217
        %v286 = vunpack.c.l.b16 %v218
        %v287 = vunpack.c.l.b16 %v219
        %v288 = vunpack.c.l.b16 %v220
        %v289 = vunpack.c.l.b16 %v221
        %v290 = vunpack.c.l.b16 %v222
        %v291 = vunpack.c.l.b16 %v223
        %v292 = vunpack.c.l.b16 %v224
        %v293 = vunpack.c.l.b16 %v225
        %v294 = vunpack.c.l.b16 %v226
        %v295 = vunpack.c.l.b16 %v227
        %v296 = vunpack.c.l.b16 %v228
        %v297 = vunpack.c.l.b16 %v229
        %v298 = vunpack.c.l.b16 %v230
        %v299 = vunpack.c.l.b16 %v231
        %v300 = vpack.c.b16 %v277, %v276
        %v301 = vpack.c.b16 %v279, %v278
        %v302 = vpack.c.b16 %v281, %v280
        %v303 = vpack.c.b16 %v283, %v282
        %v304 = vpack.c.b16 %v285, %v284
        %v305 = vpack.c.b16 %v287, %v286
        %v306 = vpack.c.b16 %v289, %v288
        %v307 = vpack.c.b16 %v291, %v290
        %v308 = vpack.c.b16 %v293, %v292
        %v309 = vpack.c.b16 %v295, %v294
        %v310 = vpack.c.b16 %v297, %v296
        %v311 = vpack.c.b16 %v299, %v298
        %vm324 = vcmask 523264
        %v326 = vsel %vm324, %v250, 0
        %328 = vmatpush.bf16.msra.mxu0 %v307
        %329 = vmatpush.bf16.msra.mxu0 %v306
        %330 = vmatpush.bf16.msra.mxu0 %v305
        %331 = vmatpush.bf16.msra.mxu0 %v304
        %332 = vmatpush.bf16.msra.mxu0 %v303
        %333 = vmatpush.bf16.msra.mxu0 %v302
        %334 = vmatpush.bf16.msra.mxu0 %v301
        %335 = vmatpush.bf16.msra.mxu0 %v300
        %336 = vmatmul.bf16.gmra.mxu0 %v243
        %v337 = vpop.f32.mrf.mxu0
        %v338 = vadd.f32 0.0, %v337
        %v339 = vpop.f32.mrf.mxu0
        %340 = vdwg.mxu0
        %341 = vmatpush.bf16.msra.mxu0 0
        %342 = vmatpush.bf16.msra.mxu0 0
        %343 = vmatpush.bf16.msra.mxu0 0
        %344 = vmatpush.bf16.msra.mxu0 0
        %345 = vmatpush.bf16.msra.mxu0 %v311
        %346 = vmatpush.bf16.msra.mxu0 %v310
        %347 = vmatpush.bf16.msra.mxu0 %v309
        %348 = vmatpush.bf16.msra.mxu0 %v308
        %349 = vmatmul.bf16.gmra.mxu0 %v326
        %v350 = vpop.f32.mrf.mxu0
        %v351 = vadd.f32 %v338, %v350
        %v352 = vpop.f32.mrf.mxu0
        %353 = vdwg.mxu0
        %v355 = vunpack.c.l.b16 %v181
        %v356 = vunpack.c.h.b16 %v181
        %v357 = vpack.c.b16 %v355, %v355
        %v358 = vpack.c.b16 %v356, %v356
        %v384 = vunpack.c.l.b16 %v182
        %v385 = vunpack.c.l.b16 %v183
        %v386 = vunpack.c.l.b16 %v184
        %v387 = vunpack.c.l.b16 %v185
        %v388 = vunpack.c.l.b16 %v186
        %v389 = vunpack.c.l.b16 %v187
        %v390 = vunpack.c.l.b16 %v188
        %v391 = vunpack.c.l.b16 %v189
        %v392 = vunpack.c.l.b16 %v190
        %v393 = vunpack.c.l.b16 %v191
        %v394 = vunpack.c.l.b16 %v192
        %v395 = vunpack.c.l.b16 %v193
        %v396 = vunpack.c.l.b16 %v194
        %v397 = vunpack.c.l.b16 %v195
        %v398 = vunpack.c.l.b16 %v196
        %v399 = vunpack.c.l.b16 %v197
        %v400 = vunpack.c.l.b16 %v198
        %v401 = vunpack.c.l.b16 %v199
        %v402 = vunpack.c.l.b16 %v200
        %v403 = vunpack.c.l.b16 %v201
        %v404 = vunpack.c.l.b16 %v202
        %v405 = vunpack.c.l.b16 %v203
        %v406 = vunpack.c.l.b16 %v204
        %v407 = vunpack.c.l.b16 %v205
        %v408 = vpack.c.b16 %v385, %v384
        %v409 = vpack.c.b16 %v387, %v386
        %v410 = vpack.c.b16 %v389, %v388
        %v411 = vpack.c.b16 %v391, %v390
        %v412 = vpack.c.b16 %v393, %v392
        %v413 = vpack.c.b16 %v395, %v394
        %v414 = vpack.c.b16 %v397, %v396
        %v415 = vpack.c.b16 %v399, %v398
        %v416 = vpack.c.b16 %v401, %v400
        %v417 = vpack.c.b16 %v403, %v402
        %v418 = vpack.c.b16 %v405, %v404
        %v419 = vpack.c.b16 %v407, %v406
        %v433 = vsel %vm324, %v358, 0
        %435 = vmatpush.bf16.msra.mxu0 %v415
        %436 = vmatpush.bf16.msra.mxu0 %v414
        %437 = vmatpush.bf16.msra.mxu0 %v413
        %438 = vmatpush.bf16.msra.mxu0 %v412
        %439 = vmatpush.bf16.msra.mxu0 %v411
        %440 = vmatpush.bf16.msra.mxu0 %v410
        %441 = vmatpush.bf16.msra.mxu0 %v409
        %442 = vmatpush.bf16.msra.mxu0 %v408
        %443 = vmatmul.bf16.gmra.mxu0 %v357
        %v444 = vpop.f32.mrf.mxu0
        %v445 = vadd.f32 %v351, %v444
        %v446 = vpop.f32.mrf.mxu0
        %447 = vdwg.mxu0
        %448 = vmatpush.bf16.msra.mxu0 0
        %449 = vmatpush.bf16.msra.mxu0 0
        %450 = vmatpush.bf16.msra.mxu0 0
        %451 = vmatpush.bf16.msra.mxu0 0
        %452 = vmatpush.bf16.msra.mxu0 %v419
        %453 = vmatpush.bf16.msra.mxu0 %v418
        %454 = vmatpush.bf16.msra.mxu0 %v417
        %455 = vmatpush.bf16.msra.mxu0 %v416
        %456 = vmatmul.bf16.gmra.mxu0 %v433
        %v457 = vpop.f32.mrf.mxu0
        %v458 = vadd.f32 %v445, %v457
        %v459 = vpop.f32.mrf.mxu0
        %460 = vdwg.mxu0
        %v461 = vld [vmem:[%s180] sm:$0xee]
        %s462 = scalar_lea.vmem %s1, 192
        %v463 = vld [vmem:[%s462] sm:$0xf]
        %v464 = vld [vmem:[%s462 + $0x4] sm:$0xf]
        %v465 = vld [vmem:[%s462 + $0x8] sm:$0xf]
        %v466 = vld [vmem:[%s462 + $0xc] sm:$0xf]
        %v467 = vld [vmem:[%s462 + $0x10] sm:$0xf]
        %v468 = vld [vmem:[%s462 + $0x14] sm:$0xf]
        %v469 = vld [vmem:[%s462 + $0x18] sm:$0xf]
        %v470 = vld [vmem:[%s462 + $0x1c] sm:$0xf]
        %v471 = vld [vmem:[%s462 + $0x20] sm:$0xf]
        %v472 = vld [vmem:[%s462 + $0x24] sm:$0xf]
        %v473 = vld [vmem:[%s462 + $0x28] sm:$0xf]
        %v474 = vld [vmem:[%s462 + $0x2c] sm:$0xf]
        %v475 = vld [vmem:[%s462 + $0x30] sm:$0xf]
        %v476 = vld [vmem:[%s462 + $0x34] sm:$0xf]
        %v477 = vld [vmem:[%s462 + $0x38] sm:$0xf]
        %v478 = vld [vmem:[%s462 + $0x3c] sm:$0xf]
        %v479 = vld [vmem:[%s462 + $0x40] sm:$0xf]
        %v480 = vld [vmem:[%s462 + $0x44] sm:$0xf]
        %v481 = vld [vmem:[%s462 + $0x48] sm:$0xf]
        %v482 = vld [vmem:[%s462 + $0x4c] sm:$0xf]
        %v483 = vld [vmem:[%s462 + $0x50] sm:$0xf]
        %v484 = vld [vmem:[%s462 + $0x54] sm:$0xf]
        %v485 = vld [vmem:[%s462 + $0x58] sm:$0xf]
        %v486 = vld [vmem:[%s462 + $0x5c] sm:$0xf]
        %v488 = vunpack.c.l.b16 %v461
        %v489 = vunpack.c.h.b16 %v461
        %v490 = vpack.c.b16 %v488, %v488
        %v491 = vpack.c.b16 %v489, %v489
        %v492 = vrot.slane %v490, 1
        %v493 = vrot.slane %v491, 1
        %v519 = vunpack.c.l.b16 %v463
        %v520 = vunpack.c.l.b16 %v464
        %v521 = vunpack.c.l.b16 %v465
        %v522 = vunpack.c.l.b16 %v466
        %v523 = vunpack.c.l.b16 %v467
        %v524 = vunpack.c.l.b16 %v468
        %v525 = vunpack.c.l.b16 %v469
        %v526 = vunpack.c.l.b16 %v470
        %v527 = vunpack.c.l.b16 %v471
        %v528 = vunpack.c.l.b16 %v472
        %v529 = vunpack.c.l.b16 %v473
        %v530 = vunpack.c.l.b16 %v474
        %v531 = vunpack.c.l.b16 %v475
        %v532 = vunpack.c.l.b16 %v476
        %v533 = vunpack.c.l.b16 %v477
        %v534 = vunpack.c.l.b16 %v478
        %v535 = vunpack.c.l.b16 %v479
        %v536 = vunpack.c.l.b16 %v480
        %v537 = vunpack.c.l.b16 %v481
        %v538 = vunpack.c.l.b16 %v482
        %v539 = vunpack.c.l.b16 %v483
        %v540 = vunpack.c.l.b16 %v484
        %v541 = vunpack.c.l.b16 %v485
        %v542 = vunpack.c.l.b16 %v486
        %v543 = vpack.c.b16 %v520, %v519
        %v544 = vpack.c.b16 %v522, %v521
        %v545 = vpack.c.b16 %v524, %v523
        %v546 = vpack.c.b16 %v526, %v525
        %v547 = vpack.c.b16 %v528, %v527
        %v548 = vpack.c.b16 %v530, %v529
        %v549 = vpack.c.b16 %v532, %v531
        %v550 = vpack.c.b16 %v534, %v533
        %v551 = vpack.c.b16 %v536, %v535
        %v552 = vpack.c.b16 %v538, %v537
        %v553 = vpack.c.b16 %v540, %v539
        %v554 = vpack.c.b16 %v542, %v541
        %v568 = vsel %vm324, %v493, 0
        %570 = vmatpush.bf16.msra.mxu0 %v550
        %571 = vmatpush.bf16.msra.mxu0 %v549
        %572 = vmatpush.bf16.msra.mxu0 %v548
        %573 = vmatpush.bf16.msra.mxu0 %v547
        %574 = vmatpush.bf16.msra.mxu0 %v546
        %575 = vmatpush.bf16.msra.mxu0 %v545
        %576 = vmatpush.bf16.msra.mxu0 %v544
        %577 = vmatpush.bf16.msra.mxu0 %v543
        %578 = vmatmul.bf16.gmra.mxu0 %v492
        %v579 = vpop.f32.mrf.mxu0
        %v580 = vadd.f32 0.0, %v579
        %v581 = vpop.f32.mrf.mxu0
        %582 = vdwg.mxu0
        %583 = vmatpush.bf16.msra.mxu0 0
        %584 = vmatpush.bf16.msra.mxu0 0
        %585 = vmatpush.bf16.msra.mxu0 0
        %586 = vmatpush.bf16.msra.mxu0 0
        %587 = vmatpush.bf16.msra.mxu0 %v554
        %588 = vmatpush.bf16.msra.mxu0 %v553
        %589 = vmatpush.bf16.msra.mxu0 %v552
        %590 = vmatpush.bf16.msra.mxu0 %v551
        %591 = vmatmul.bf16.gmra.mxu0 %v568
        %v592 = vpop.f32.mrf.mxu0
        %v593 = vadd.f32 %v580, %v592
        %v594 = vpop.f32.mrf.mxu0
        %595 = vdwg.mxu0
        %v596 = vadd.f32 %v458, %v593
        %s597 = sadd.s32 %s173, 1
        %s598 = smul.u32 %s597, 2
        %s599 = smul.addr %s598, 4
        %s600 = scalar_lea.vmem %s165, %s599
        %v601 = vld [vmem:[%s600] sm:$0x77]
        %s602 = scalar_lea.vmem %s1, 288
        %v603 = vld [vmem:[%s602] sm:$0xf]
        %v604 = vld [vmem:[%s602 + $0x4] sm:$0xf]
        %v605 = vld [vmem:[%s602 + $0x8] sm:$0xf]
        %v606 = vld [vmem:[%s602 + $0xc] sm:$0xf]
        %v607 = vld [vmem:[%s602 + $0x10] sm:$0xf]
        %v608 = vld [vmem:[%s602 + $0x14] sm:$0xf]
        %v609 = vld [vmem:[%s602 + $0x18] sm:$0xf]
        %v610 = vld [vmem:[%s602 + $0x1c] sm:$0xf]
        %v611 = vld [vmem:[%s602 + $0x20] sm:$0xf]
        %v612 = vld [vmem:[%s602 + $0x24] sm:$0xf]
        %v613 = vld [vmem:[%s602 + $0x28] sm:$0xf]
        %v614 = vld [vmem:[%s602 + $0x2c] sm:$0xf]
        %v615 = vld [vmem:[%s602 + $0x30] sm:$0xf]
        %v616 = vld [vmem:[%s602 + $0x34] sm:$0xf]
        %v617 = vld [vmem:[%s602 + $0x38] sm:$0xf]
        %v618 = vld [vmem:[%s602 + $0x3c] sm:$0xf]
        %v619 = vld [vmem:[%s602 + $0x40] sm:$0xf]
        %v620 = vld [vmem:[%s602 + $0x44] sm:$0xf]
        %v621 = vld [vmem:[%s602 + $0x48] sm:$0xf]
        %v622 = vld [vmem:[%s602 + $0x4c] sm:$0xf]
        %v623 = vld [vmem:[%s602 + $0x50] sm:$0xf]
        %v624 = vld [vmem:[%s602 + $0x54] sm:$0xf]
        %v625 = vld [vmem:[%s602 + $0x58] sm:$0xf]
        %v626 = vld [vmem:[%s602 + $0x5c] sm:$0xf]
        %v628 = vunpack.c.l.b16 %v601
        %v629 = vunpack.c.h.b16 %v601
        %v630 = vpack.c.b16 %v628, %v628
        %v631 = vpack.c.b16 %v629, %v629
        %v657 = vunpack.c.l.b16 %v603
        %v658 = vunpack.c.l.b16 %v604
        %v659 = vunpack.c.l.b16 %v605
        %v660 = vunpack.c.l.b16 %v606
        %v661 = vunpack.c.l.b16 %v607
        %v662 = vunpack.c.l.b16 %v608
        %v663 = vunpack.c.l.b16 %v609
        %v664 = vunpack.c.l.b16 %v610
        %v665 = vunpack.c.l.b16 %v611
        %v666 = vunpack.c.l.b16 %v612
        %v667 = vunpack.c.l.b16 %v613
        %v668 = vunpack.c.l.b16 %v614
        %v669 = vunpack.c.l.b16 %v615
        %v670 = vunpack.c.l.b16 %v616
        %v671 = vunpack.c.l.b16 %v617
        %v672 = vunpack.c.l.b16 %v618
        %v673 = vunpack.c.l.b16 %v619
        %v674 = vunpack.c.l.b16 %v620
        %v675 = vunpack.c.l.b16 %v621
        %v676 = vunpack.c.l.b16 %v622
        %v677 = vunpack.c.l.b16 %v623
        %v678 = vunpack.c.l.b16 %v624
        %v679 = vunpack.c.l.b16 %v625
        %v680 = vunpack.c.l.b16 %v626
        %v681 = vpack.c.b16 %v658, %v657
        %v682 = vpack.c.b16 %v660, %v659
        %v683 = vpack.c.b16 %v662, %v661
        %v684 = vpack.c.b16 %v664, %v663
        %v685 = vpack.c.b16 %v666, %v665
        %v686 = vpack.c.b16 %v668, %v667
        %v687 = vpack.c.b16 %v670, %v669
        %v688 = vpack.c.b16 %v672, %v671
        %v689 = vpack.c.b16 %v674, %v673
        %v690 = vpack.c.b16 %v676, %v675
        %v691 = vpack.c.b16 %v678, %v677
        %v692 = vpack.c.b16 %v680, %v679
        %v706 = vsel %vm324, %v631, 0
        %708 = vmatpush.bf16.msra.mxu0 %v688
        %709 = vmatpush.bf16.msra.mxu0 %v687
        %710 = vmatpush.bf16.msra.mxu0 %v686
        %711 = vmatpush.bf16.msra.mxu0 %v685
        %712 = vmatpush.bf16.msra.mxu0 %v684
        %713 = vmatpush.bf16.msra.mxu0 %v683
        %714 = vmatpush.bf16.msra.mxu0 %v682
        %715 = vmatpush.bf16.msra.mxu0 %v681
        %716 = vmatmul.bf16.gmra.mxu0 %v630
        %v717 = vpop.f32.mrf.mxu0
        %v718 = vadd.f32 0.0, %v717
        %v719 = vpop.f32.mrf.mxu0
        %720 = vdwg.mxu0
        %721 = vmatpush.bf16.msra.mxu0 0
        %722 = vmatpush.bf16.msra.mxu0 0
        %723 = vmatpush.bf16.msra.mxu0 0
        %724 = vmatpush.bf16.msra.mxu0 0
        %725 = vmatpush.bf16.msra.mxu0 %v692
        %726 = vmatpush.bf16.msra.mxu0 %v691
        %727 = vmatpush.bf16.msra.mxu0 %v690
        %728 = vmatpush.bf16.msra.mxu0 %v689
        %729 = vmatmul.bf16.gmra.mxu0 %v706
        %v730 = vpop.f32.mrf.mxu0
        %v731 = vadd.f32 %v718, %v730
        %v732 = vpop.f32.mrf.mxu0
        %733 = vdwg.mxu0
        %v734 = vadd.f32 %v596, %v731
        %v735 = vld [vmem:[%s600] sm:$0xff]
        %s736 = scalar_lea.vmem %s1, 384
        %v737 = vld [vmem:[%s736] sm:$0xf]
        %v738 = vld [vmem:[%s736 + $0x4] sm:$0xf]
        %v739 = vld [vmem:[%s736 + $0x8] sm:$0xf]
        %v740 = vld [vmem:[%s736 + $0xc] sm:$0xf]
        %v741 = vld [vmem:[%s736 + $0x10] sm:$0xf]
        %v742 = vld [vmem:[%s736 + $0x14] sm:$0xf]
        %v743 = vld [vmem:[%s736 + $0x18] sm:$0xf]
        %v744 = vld [vmem:[%s736 + $0x1c] sm:$0xf]
        %v745 = vld [vmem:[%s736 + $0x20] sm:$0xf]
        %v746 = vld [vmem:[%s736 + $0x24] sm:$0xf]
        %v747 = vld [vmem:[%s736 + $0x28] sm:$0xf]
        %v748 = vld [vmem:[%s736 + $0x2c] sm:$0xf]
        %v749 = vld [vmem:[%s736 + $0x30] sm:$0xf]
        %v750 = vld [vmem:[%s736 + $0x34] sm:$0xf]
        %v751 = vld [vmem:[%s736 + $0x38] sm:$0xf]
        %v752 = vld [vmem:[%s736 + $0x3c] sm:$0xf]
        %v753 = vld [vmem:[%s736 + $0x40] sm:$0xf]
        %v754 = vld [vmem:[%s736 + $0x44] sm:$0xf]
        %v755 = vld [vmem:[%s736 + $0x48] sm:$0xf]
        %v756 = vld [vmem:[%s736 + $0x4c] sm:$0xf]
        %v757 = vld [vmem:[%s736 + $0x50] sm:$0xf]
        %v758 = vld [vmem:[%s736 + $0x54] sm:$0xf]
        %v759 = vld [vmem:[%s736 + $0x58] sm:$0xf]
        %v760 = vld [vmem:[%s736 + $0x5c] sm:$0xf]
        %v762 = vunpack.c.l.b16 %v735
        %v763 = vunpack.c.h.b16 %v735
        %v764 = vpack.c.b16 %v762, %v762
        %v765 = vpack.c.b16 %v763, %v763
        %v767 = vshrl.u32 %v764, 16
        %v769 = vshll.u32 %v764, 16
        %v771 = vrot.slane %v769, 1
        %v772 = vor.u32 %v767, %v771
        %v774 = vshrl.u32 %v765, 16
        %v776 = vshll.u32 %v765, 16
        %v778 = vrot.slane %v776, 1
        %v779 = vor.u32 %v774, %v778
        %v805 = vunpack.c.l.b16 %v737
        %v806 = vunpack.c.l.b16 %v738
        %v807 = vunpack.c.l.b16 %v739
        %v808 = vunpack.c.l.b16 %v740
        %v809 = vunpack.c.l.b16 %v741
        %v810 = vunpack.c.l.b16 %v742
        %v811 = vunpack.c.l.b16 %v743
        %v812 = vunpack.c.l.b16 %v744
        %v813 = vunpack.c.l.b16 %v745
        %v814 = vunpack.c.l.b16 %v746
        %v815 = vunpack.c.l.b16 %v747
        %v816 = vunpack.c.l.b16 %v748
        %v817 = vunpack.c.l.b16 %v749
        %v818 = vunpack.c.l.b16 %v750
        %v819 = vunpack.c.l.b16 %v751
        %v820 = vunpack.c.l.b16 %v752
        %v821 = vunpack.c.l.b16 %v753
        %v822 = vunpack.c.l.b16 %v754
        %v823 = vunpack.c.l.b16 %v755
        %v824 = vunpack.c.l.b16 %v756
        %v825 = vunpack.c.l.b16 %v757
        %v826 = vunpack.c.l.b16 %v758
        %v827 = vunpack.c.l.b16 %v759
        %v828 = vunpack.c.l.b16 %v760
        %v829 = vpack.c.b16 %v806, %v805
        %v830 = vpack.c.b16 %v808, %v807
        %v831 = vpack.c.b16 %v810, %v809
        %v832 = vpack.c.b16 %v812, %v811
        %v833 = vpack.c.b16 %v814, %v813
        %v834 = vpack.c.b16 %v816, %v815
        %v835 = vpack.c.b16 %v818, %v817
        %v836 = vpack.c.b16 %v820, %v819
        %v837 = vpack.c.b16 %v822, %v821
        %v838 = vpack.c.b16 %v824, %v823
        %v839 = vpack.c.b16 %v826, %v825
        %v840 = vpack.c.b16 %v828, %v827
        %v854 = vsel %vm324, %v779, 0
        %856 = vmatpush.bf16.msra.mxu0 %v836
        %857 = vmatpush.bf16.msra.mxu0 %v835
        %858 = vmatpush.bf16.msra.mxu0 %v834
        %859 = vmatpush.bf16.msra.mxu0 %v833
        %860 = vmatpush.bf16.msra.mxu0 %v832
        %861 = vmatpush.bf16.msra.mxu0 %v831
        %862 = vmatpush.bf16.msra.mxu0 %v830
        %863 = vmatpush.bf16.msra.mxu0 %v829
        %864 = vmatmul.bf16.gmra.mxu0 %v772
        %v865 = vpop.f32.mrf.mxu0
        %v866 = vadd.f32 0.0, %v865
        %v867 = vpop.f32.mrf.mxu0
        %868 = vdwg.mxu0
        %869 = vmatpush.bf16.msra.mxu0 0
        %870 = vmatpush.bf16.msra.mxu0 0
        %871 = vmatpush.bf16.msra.mxu0 0
        %872 = vmatpush.bf16.msra.mxu0 0
        %873 = vmatpush.bf16.msra.mxu0 %v840
        %874 = vmatpush.bf16.msra.mxu0 %v839
        %875 = vmatpush.bf16.msra.mxu0 %v838
        %876 = vmatpush.bf16.msra.mxu0 %v837
        %877 = vmatmul.bf16.gmra.mxu0 %v854
        %v878 = vpop.f32.mrf.mxu0
        %v879 = vadd.f32 %v866, %v878
        %v880 = vpop.f32.mrf.mxu0
        %881 = vdwg.mxu0
        %v882 = vadd.f32 %v734, %v879
        %v883 = vld [vmem:[%s600] sm:$0xee]
        %s884 = scalar_lea.vmem %s1, 480
        %v885 = vld [vmem:[%s884] sm:$0xf]
        %v886 = vld [vmem:[%s884 + $0x4] sm:$0xf]
        %v887 = vld [vmem:[%s884 + $0x8] sm:$0xf]
        %v888 = vld [vmem:[%s884 + $0xc] sm:$0xf]
        %v889 = vld [vmem:[%s884 + $0x10] sm:$0xf]
        %v890 = vld [vmem:[%s884 + $0x14] sm:$0xf]
        %v891 = vld [vmem:[%s884 + $0x18] sm:$0xf]
        %v892 = vld [vmem:[%s884 + $0x1c] sm:$0xf]
        %v893 = vld [vmem:[%s884 + $0x20] sm:$0xf]
        %v894 = vld [vmem:[%s884 + $0x24] sm:$0xf]
        %v895 = vld [vmem:[%s884 + $0x28] sm:$0xf]
        %v896 = vld [vmem:[%s884 + $0x2c] sm:$0xf]
        %v897 = vld [vmem:[%s884 + $0x30] sm:$0xf]
        %v898 = vld [vmem:[%s884 + $0x34] sm:$0xf]
        %v899 = vld [vmem:[%s884 + $0x38] sm:$0xf]
        %v900 = vld [vmem:[%s884 + $0x3c] sm:$0xf]
        %v901 = vld [vmem:[%s884 + $0x40] sm:$0xf]
        %v902 = vld [vmem:[%s884 + $0x44] sm:$0xf]
        %v903 = vld [vmem:[%s884 + $0x48] sm:$0xf]
        %v904 = vld [vmem:[%s884 + $0x4c] sm:$0xf]
        %v905 = vld [vmem:[%s884 + $0x50] sm:$0xf]
        %v906 = vld [vmem:[%s884 + $0x54] sm:$0xf]
        %v907 = vld [vmem:[%s884 + $0x58] sm:$0xf]
        %v908 = vld [vmem:[%s884 + $0x5c] sm:$0xf]
        %v910 = vunpack.c.l.b16 %v883
        %v911 = vunpack.c.h.b16 %v883
        %v912 = vpack.c.b16 %v910, %v910
        %v913 = vpack.c.b16 %v911, %v911
        %v914 = vrot.slane %v912, 1
        %v915 = vrot.slane %v913, 1
        %v941 = vunpack.c.l.b16 %v885
        %v942 = vunpack.c.l.b16 %v886
        %v943 = vunpack.c.l.b16 %v887
        %v944 = vunpack.c.l.b16 %v888
        %v945 = vunpack.c.l.b16 %v889
        %v946 = vunpack.c.l.b16 %v890
        %v947 = vunpack.c.l.b16 %v891
        %v948 = vunpack.c.l.b16 %v892
        %v949 = vunpack.c.l.b16 %v893
        %v950 = vunpack.c.l.b16 %v894
        %v951 = vunpack.c.l.b16 %v895
        %v952 = vunpack.c.l.b16 %v896
        %v953 = vunpack.c.l.b16 %v897
        %v954 = vunpack.c.l.b16 %v898
        %v955 = vunpack.c.l.b16 %v899
        %v956 = vunpack.c.l.b16 %v900
        %v957 = vunpack.c.l.b16 %v901
        %v958 = vunpack.c.l.b16 %v902
        %v959 = vunpack.c.l.b16 %v903
        %v960 = vunpack.c.l.b16 %v904
        %v961 = vunpack.c.l.b16 %v905
        %v962 = vunpack.c.l.b16 %v906
        %v963 = vunpack.c.l.b16 %v907
        %v964 = vunpack.c.l.b16 %v908
        %v965 = vpack.c.b16 %v942, %v941
        %v966 = vpack.c.b16 %v944, %v943
        %v967 = vpack.c.b16 %v946, %v945
        %v968 = vpack.c.b16 %v948, %v947
        %v969 = vpack.c.b16 %v950, %v949
        %v970 = vpack.c.b16 %v952, %v951
        %v971 = vpack.c.b16 %v954, %v953
        %v972 = vpack.c.b16 %v956, %v955
        %v973 = vpack.c.b16 %v958, %v957
        %v974 = vpack.c.b16 %v960, %v959
        %v975 = vpack.c.b16 %v962, %v961
        %v976 = vpack.c.b16 %v964, %v963
        %v990 = vsel %vm324, %v915, 0
        %992 = vmatpush.bf16.msra.mxu0 %v972
        %993 = vmatpush.bf16.msra.mxu0 %v971
        %994 = vmatpush.bf16.msra.mxu0 %v970
        %995 = vmatpush.bf16.msra.mxu0 %v969
        %996 = vmatpush.bf16.msra.mxu0 %v968
        %997 = vmatpush.bf16.msra.mxu0 %v967
        %998 = vmatpush.bf16.msra.mxu0 %v966
        %999 = vmatpush.bf16.msra.mxu0 %v965
        %1000 = vmatmul.bf16.gmra.mxu0 %v914
        %v1001 = vpop.f32.mrf.mxu0
        %v1002 = vadd.f32 0.0, %v1001
        %v1003 = vpop.f32.mrf.mxu0
        %1004 = vdwg.mxu0
        %1005 = vmatpush.bf16.msra.mxu0 0
        %1006 = vmatpush.bf16.msra.mxu0 0
        %1007 = vmatpush.bf16.msra.mxu0 0
        %1008 = vmatpush.bf16.msra.mxu0 0
        %1009 = vmatpush.bf16.msra.mxu0 %v976
        %1010 = vmatpush.bf16.msra.mxu0 %v975
        %1011 = vmatpush.bf16.msra.mxu0 %v974
        %1012 = vmatpush.bf16.msra.mxu0 %v973
        %1013 = vmatmul.bf16.gmra.mxu0 %v990
        %v1014 = vpop.f32.mrf.mxu0
        %v1015 = vadd.f32 %v1002, %v1014
        %v1016 = vpop.f32.mrf.mxu0
        %1017 = vdwg.mxu0
        %v1018 = vadd.f32 %v882, %v1015
        %s1019 = sadd.s32 %s173, 2
        %s1020 = smul.u32 %s1019, 2
        %s1021 = smul.addr %s1020, 4
        %s1022 = scalar_lea.vmem %s165, %s1021
        %v1023 = vld [vmem:[%s1022] sm:$0x77]
        %s1024 = scalar_lea.vmem %s1, 576
        %v1025 = vld [vmem:[%s1024] sm:$0xf]
        %v1026 = vld [vmem:[%s1024 + $0x4] sm:$0xf]
        %v1027 = vld [vmem:[%s1024 + $0x8] sm:$0xf]
        %v1028 = vld [vmem:[%s1024 + $0xc] sm:$0xf]
        %v1029 = vld [vmem:[%s1024 + $0x10] sm:$0xf]
        %v1030 = vld [vmem:[%s1024 + $0x14] sm:$0xf]
        %v1031 = vld [vmem:[%s1024 + $0x18] sm:$0xf]
        %v1032 = vld [vmem:[%s1024 + $0x1c] sm:$0xf]
        %v1033 = vld [vmem:[%s1024 + $0x20] sm:$0xf]
        %v1034 = vld [vmem:[%s1024 + $0x24] sm:$0xf]
        %v1035 = vld [vmem:[%s1024 + $0x28] sm:$0xf]
        %v1036 = vld [vmem:[%s1024 + $0x2c] sm:$0xf]
        %v1037 = vld [vmem:[%s1024 + $0x30] sm:$0xf]
        %v1038 = vld [vmem:[%s1024 + $0x34] sm:$0xf]
        %v1039 = vld [vmem:[%s1024 + $0x38] sm:$0xf]
        %v1040 = vld [vmem:[%s1024 + $0x3c] sm:$0xf]
        %v1041 = vld [vmem:[%s1024 + $0x40] sm:$0xf]
        %v1042 = vld [vmem:[%s1024 + $0x44] sm:$0xf]
        %v1043 = vld [vmem:[%s1024 + $0x48] sm:$0xf]
        %v1044 = vld [vmem:[%s1024 + $0x4c] sm:$0xf]
        %v1045 = vld [vmem:[%s1024 + $0x50] sm:$0xf]
        %v1046 = vld [vmem:[%s1024 + $0x54] sm:$0xf]
        %v1047 = vld [vmem:[%s1024 + $0x58] sm:$0xf]
        %v1048 = vld [vmem:[%s1024 + $0x5c] sm:$0xf]
        %v1050 = vunpack.c.l.b16 %v1023
        %v1051 = vunpack.c.h.b16 %v1023
        %v1052 = vpack.c.b16 %v1050, %v1050
        %v1053 = vpack.c.b16 %v1051, %v1051
        %v1079 = vunpack.c.l.b16 %v1025
        %v1080 = vunpack.c.l.b16 %v1026
        %v1081 = vunpack.c.l.b16 %v1027
        %v1082 = vunpack.c.l.b16 %v1028
        %v1083 = vunpack.c.l.b16 %v1029
        %v1084 = vunpack.c.l.b16 %v1030
        %v1085 = vunpack.c.l.b16 %v1031
        %v1086 = vunpack.c.l.b16 %v1032
        %v1087 = vunpack.c.l.b16 %v1033
        %v1088 = vunpack.c.l.b16 %v1034
        %v1089 = vunpack.c.l.b16 %v1035
        %v1090 = vunpack.c.l.b16 %v1036
        %v1091 = vunpack.c.l.b16 %v1037
        %v1092 = vunpack.c.l.b16 %v1038
        %v1093 = vunpack.c.l.b16 %v1039
        %v1094 = vunpack.c.l.b16 %v1040
        %v1095 = vunpack.c.l.b16 %v1041
        %v1096 = vunpack.c.l.b16 %v1042
        %v1097 = vunpack.c.l.b16 %v1043
        %v1098 = vunpack.c.l.b16 %v1044
        %v1099 = vunpack.c.l.b16 %v1045
        %v1100 = vunpack.c.l.b16 %v1046
        %v1101 = vunpack.c.l.b16 %v1047
        %v1102 = vunpack.c.l.b16 %v1048
        %v1103 = vpack.c.b16 %v1080, %v1079
        %v1104 = vpack.c.b16 %v1082, %v1081
        %v1105 = vpack.c.b16 %v1084, %v1083
        %v1106 = vpack.c.b16 %v1086, %v1085
        %v1107 = vpack.c.b16 %v1088, %v1087
        %v1108 = vpack.c.b16 %v1090, %v1089
        %v1109 = vpack.c.b16 %v1092, %v1091
        %v1110 = vpack.c.b16 %v1094, %v1093
        %v1111 = vpack.c.b16 %v1096, %v1095
        %v1112 = vpack.c.b16 %v1098, %v1097
        %v1113 = vpack.c.b16 %v1100, %v1099
        %v1114 = vpack.c.b16 %v1102, %v1101
        %v1128 = vsel %vm324, %v1053, 0
        %1130 = vmatpush.bf16.msra.mxu0 %v1110
        %1131 = vmatpush.bf16.msra.mxu0 %v1109
        %1132 = vmatpush.bf16.msra.mxu0 %v1108
        %1133 = vmatpush.bf16.msra.mxu0 %v1107
        %1134 = vmatpush.bf16.msra.mxu0 %v1106
        %1135 = vmatpush.bf16.msra.mxu0 %v1105
        %1136 = vmatpush.bf16.msra.mxu0 %v1104
        %1137 = vmatpush.bf16.msra.mxu0 %v1103
        %1138 = vmatmul.bf16.gmra.mxu0 %v1052
        %v1139 = vpop.f32.mrf.mxu0
        %v1140 = vadd.f32 0.0, %v1139
        %v1141 = vpop.f32.mrf.mxu0
        %1142 = vdwg.mxu0
        %1143 = vmatpush.bf16.msra.mxu0 0
        %1144 = vmatpush.bf16.msra.mxu0 0
        %1145 = vmatpush.bf16.msra.mxu0 0
        %1146 = vmatpush.bf16.msra.mxu0 0
        %1147 = vmatpush.bf16.msra.mxu0 %v1114
        %1148 = vmatpush.bf16.msra.mxu0 %v1113
        %1149 = vmatpush.bf16.msra.mxu0 %v1112
        %1150 = vmatpush.bf16.msra.mxu0 %v1111
        %1151 = vmatmul.bf16.gmra.mxu0 %v1128
        %v1152 = vpop.f32.mrf.mxu0
        %v1153 = vadd.f32 %v1140, %v1152
        %v1154 = vpop.f32.mrf.mxu0
        %1155 = vdwg.mxu0
        %v1156 = vadd.f32 %v1018, %v1153
        %v1157 = vld [vmem:[%s1022] sm:$0xff]
        %s1158 = scalar_lea.vmem %s1, 672
        %v1159 = vld [vmem:[%s1158] sm:$0xf]
        %v1160 = vld [vmem:[%s1158 + $0x4] sm:$0xf]
        %v1161 = vld [vmem:[%s1158 + $0x8] sm:$0xf]
        %v1162 = vld [vmem:[%s1158 + $0xc] sm:$0xf]
        %v1163 = vld [vmem:[%s1158 + $0x10] sm:$0xf]
        %v1164 = vld [vmem:[%s1158 + $0x14] sm:$0xf]
        %v1165 = vld [vmem:[%s1158 + $0x18] sm:$0xf]
        %v1166 = vld [vmem:[%s1158 + $0x1c] sm:$0xf]
        %v1167 = vld [vmem:[%s1158 + $0x20] sm:$0xf]
        %v1168 = vld [vmem:[%s1158 + $0x24] sm:$0xf]
        %v1169 = vld [vmem:[%s1158 + $0x28] sm:$0xf]
        %v1170 = vld [vmem:[%s1158 + $0x2c] sm:$0xf]
        %v1171 = vld [vmem:[%s1158 + $0x30] sm:$0xf]
        %v1172 = vld [vmem:[%s1158 + $0x34] sm:$0xf]
        %v1173 = vld [vmem:[%s1158 + $0x38] sm:$0xf]
        %v1174 = vld [vmem:[%s1158 + $0x3c] sm:$0xf]
        %v1175 = vld [vmem:[%s1158 + $0x40] sm:$0xf]
        %v1176 = vld [vmem:[%s1158 + $0x44] sm:$0xf]
        %v1177 = vld [vmem:[%s1158 + $0x48] sm:$0xf]
        %v1178 = vld [vmem:[%s1158 + $0x4c] sm:$0xf]
        %v1179 = vld [vmem:[%s1158 + $0x50] sm:$0xf]
        %v1180 = vld [vmem:[%s1158 + $0x54] sm:$0xf]
        %v1181 = vld [vmem:[%s1158 + $0x58] sm:$0xf]
        %v1182 = vld [vmem:[%s1158 + $0x5c] sm:$0xf]
        %v1184 = vunpack.c.l.b16 %v1157
        %v1185 = vunpack.c.h.b16 %v1157
        %v1186 = vpack.c.b16 %v1184, %v1184
        %v1187 = vpack.c.b16 %v1185, %v1185
        %v1189 = vshrl.u32 %v1186, 16
        %v1191 = vshll.u32 %v1186, 16
        %v1193 = vrot.slane %v1191, 1
        %v1194 = vor.u32 %v1189, %v1193
        %v1196 = vshrl.u32 %v1187, 16
        %v1198 = vshll.u32 %v1187, 16
        %v1200 = vrot.slane %v1198, 1
        %v1201 = vor.u32 %v1196, %v1200
        %v1227 = vunpack.c.l.b16 %v1159
        %v1228 = vunpack.c.l.b16 %v1160
        %v1229 = vunpack.c.l.b16 %v1161
        %v1230 = vunpack.c.l.b16 %v1162
        %v1231 = vunpack.c.l.b16 %v1163
        %v1232 = vunpack.c.l.b16 %v1164
        %v1233 = vunpack.c.l.b16 %v1165
        %v1234 = vunpack.c.l.b16 %v1166
        %v1235 = vunpack.c.l.b16 %v1167
        %v1236 = vunpack.c.l.b16 %v1168
        %v1237 = vunpack.c.l.b16 %v1169
        %v1238 = vunpack.c.l.b16 %v1170
        %v1239 = vunpack.c.l.b16 %v1171
        %v1240 = vunpack.c.l.b16 %v1172
        %v1241 = vunpack.c.l.b16 %v1173
        %v1242 = vunpack.c.l.b16 %v1174
        %v1243 = vunpack.c.l.b16 %v1175
        %v1244 = vunpack.c.l.b16 %v1176
        %v1245 = vunpack.c.l.b16 %v1177
        %v1246 = vunpack.c.l.b16 %v1178
        %v1247 = vunpack.c.l.b16 %v1179
        %v1248 = vunpack.c.l.b16 %v1180
        %v1249 = vunpack.c.l.b16 %v1181
        %v1250 = vunpack.c.l.b16 %v1182
        %v1251 = vpack.c.b16 %v1228, %v1227
        %v1252 = vpack.c.b16 %v1230, %v1229
        %v1253 = vpack.c.b16 %v1232, %v1231
        %v1254 = vpack.c.b16 %v1234, %v1233
        %v1255 = vpack.c.b16 %v1236, %v1235
        %v1256 = vpack.c.b16 %v1238, %v1237
        %v1257 = vpack.c.b16 %v1240, %v1239
        %v1258 = vpack.c.b16 %v1242, %v1241
        %v1259 = vpack.c.b16 %v1244, %v1243
        %v1260 = vpack.c.b16 %v1246, %v1245
        %v1261 = vpack.c.b16 %v1248, %v1247
        %v1262 = vpack.c.b16 %v1250, %v1249
        %v1276 = vsel %vm324, %v1201, 0
        %1278 = vmatpush.bf16.msra.mxu0 %v1258
        %1279 = vmatpush.bf16.msra.mxu0 %v1257
        %1280 = vmatpush.bf16.msra.mxu0 %v1256
        %1281 = vmatpush.bf16.msra.mxu0 %v1255
        %1282 = vmatpush.bf16.msra.mxu0 %v1254
        %1283 = vmatpush.bf16.msra.mxu0 %v1253
        %1284 = vmatpush.bf16.msra.mxu0 %v1252
        %1285 = vmatpush.bf16.msra.mxu0 %v1251
        %1286 = vmatmul.bf16.gmra.mxu0 %v1194
        %v1287 = vpop.f32.mrf.mxu0
        %v1288 = vadd.f32 0.0, %v1287
        %v1289 = vpop.f32.mrf.mxu0
        %1290 = vdwg.mxu0
        %1291 = vmatpush.bf16.msra.mxu0 0
        %1292 = vmatpush.bf16.msra.mxu0 0
        %1293 = vmatpush.bf16.msra.mxu0 0
        %1294 = vmatpush.bf16.msra.mxu0 0
        %1295 = vmatpush.bf16.msra.mxu0 %v1262
        %1296 = vmatpush.bf16.msra.mxu0 %v1261
        %1297 = vmatpush.bf16.msra.mxu0 %v1260
        %1298 = vmatpush.bf16.msra.mxu0 %v1259
        %1299 = vmatmul.bf16.gmra.mxu0 %v1276
        %v1300 = vpop.f32.mrf.mxu0
        %v1301 = vadd.f32 %v1288, %v1300
        %v1302 = vpop.f32.mrf.mxu0
        %1303 = vdwg.mxu0
        %v1304 = vadd.f32 %v1156, %v1301
        %v1305 = vld [vmem:[%s1022] sm:$0xee]
        %s1306 = scalar_lea.vmem %s1, 768
        %v1307 = vld [vmem:[%s1306] sm:$0xf]
        %v1308 = vld [vmem:[%s1306 + $0x4] sm:$0xf]
        %v1309 = vld [vmem:[%s1306 + $0x8] sm:$0xf]
        %v1310 = vld [vmem:[%s1306 + $0xc] sm:$0xf]
        %v1311 = vld [vmem:[%s1306 + $0x10] sm:$0xf]
        %v1312 = vld [vmem:[%s1306 + $0x14] sm:$0xf]
        %v1313 = vld [vmem:[%s1306 + $0x18] sm:$0xf]
        %v1314 = vld [vmem:[%s1306 + $0x1c] sm:$0xf]
        %v1315 = vld [vmem:[%s1306 + $0x20] sm:$0xf]
        %v1316 = vld [vmem:[%s1306 + $0x24] sm:$0xf]
        %v1317 = vld [vmem:[%s1306 + $0x28] sm:$0xf]
        %v1318 = vld [vmem:[%s1306 + $0x2c] sm:$0xf]
        %v1319 = vld [vmem:[%s1306 + $0x30] sm:$0xf]
        %v1320 = vld [vmem:[%s1306 + $0x34] sm:$0xf]
        %v1321 = vld [vmem:[%s1306 + $0x38] sm:$0xf]
        %v1322 = vld [vmem:[%s1306 + $0x3c] sm:$0xf]
        %v1323 = vld [vmem:[%s1306 + $0x40] sm:$0xf]
        %v1324 = vld [vmem:[%s1306 + $0x44] sm:$0xf]
        %v1325 = vld [vmem:[%s1306 + $0x48] sm:$0xf]
        %v1326 = vld [vmem:[%s1306 + $0x4c] sm:$0xf]
        %v1327 = vld [vmem:[%s1306 + $0x50] sm:$0xf]
        %v1328 = vld [vmem:[%s1306 + $0x54] sm:$0xf]
        %v1329 = vld [vmem:[%s1306 + $0x58] sm:$0xf]
        %v1330 = vld [vmem:[%s1306 + $0x5c] sm:$0xf]
        %v1332 = vunpack.c.l.b16 %v1305
        %v1333 = vunpack.c.h.b16 %v1305
        %v1334 = vpack.c.b16 %v1332, %v1332
        %v1335 = vpack.c.b16 %v1333, %v1333
        %v1336 = vrot.slane %v1334, 1
        %v1337 = vrot.slane %v1335, 1
        %v1363 = vunpack.c.l.b16 %v1307
        %v1364 = vunpack.c.l.b16 %v1308
        %v1365 = vunpack.c.l.b16 %v1309
        %v1366 = vunpack.c.l.b16 %v1310
        %v1367 = vunpack.c.l.b16 %v1311
        %v1368 = vunpack.c.l.b16 %v1312
        %v1369 = vunpack.c.l.b16 %v1313
        %v1370 = vunpack.c.l.b16 %v1314
        %v1371 = vunpack.c.l.b16 %v1315
        %v1372 = vunpack.c.l.b16 %v1316
        %v1373 = vunpack.c.l.b16 %v1317
        %v1374 = vunpack.c.l.b16 %v1318
        %v1375 = vunpack.c.l.b16 %v1319
        %v1376 = vunpack.c.l.b16 %v1320
        %v1377 = vunpack.c.l.b16 %v1321
        %v1378 = vunpack.c.l.b16 %v1322
        %v1379 = vunpack.c.l.b16 %v1323
        %v1380 = vunpack.c.l.b16 %v1324
        %v1381 = vunpack.c.l.b16 %v1325
        %v1382 = vunpack.c.l.b16 %v1326
        %v1383 = vunpack.c.l.b16 %v1327
        %v1384 = vunpack.c.l.b16 %v1328
        %v1385 = vunpack.c.l.b16 %v1329
        %v1386 = vunpack.c.l.b16 %v1330
        %v1387 = vpack.c.b16 %v1364, %v1363
        %v1388 = vpack.c.b16 %v1366, %v1365
        %v1389 = vpack.c.b16 %v1368, %v1367
        %v1390 = vpack.c.b16 %v1370, %v1369
        %v1391 = vpack.c.b16 %v1372, %v1371
        %v1392 = vpack.c.b16 %v1374, %v1373
        %v1393 = vpack.c.b16 %v1376, %v1375
        %v1394 = vpack.c.b16 %v1378, %v1377
        %v1395 = vpack.c.b16 %v1380, %v1379
        %v1396 = vpack.c.b16 %v1382, %v1381
        %v1397 = vpack.c.b16 %v1384, %v1383
        %v1398 = vpack.c.b16 %v1386, %v1385
        %v1412 = vsel %vm324, %v1337, 0
        %1414 = vmatpush.bf16.msra.mxu0 %v1394
        %1415 = vmatpush.bf16.msra.mxu0 %v1393
        %1416 = vmatpush.bf16.msra.mxu0 %v1392
        %1417 = vmatpush.bf16.msra.mxu0 %v1391
        %1418 = vmatpush.bf16.msra.mxu0 %v1390
        %1419 = vmatpush.bf16.msra.mxu0 %v1389
        %1420 = vmatpush.bf16.msra.mxu0 %v1388
        %1421 = vmatpush.bf16.msra.mxu0 %v1387
        %1422 = vmatmul.bf16.gmra.mxu0 %v1336
        %v1423 = vpop.f32.mrf.mxu0
        %v1424 = vadd.f32 0.0, %v1423
        %v1425 = vpop.f32.mrf.mxu0
        %1426 = vdwg.mxu0
        %1427 = vmatpush.bf16.msra.mxu0 0
        %1428 = vmatpush.bf16.msra.mxu0 0
        %1429 = vmatpush.bf16.msra.mxu0 0
        %1430 = vmatpush.bf16.msra.mxu0 0
        %1431 = vmatpush.bf16.msra.mxu0 %v1398
        %1432 = vmatpush.bf16.msra.mxu0 %v1397
        %1433 = vmatpush.bf16.msra.mxu0 %v1396
        %1434 = vmatpush.bf16.msra.mxu0 %v1395
        %1435 = vmatmul.bf16.gmra.mxu0 %v1412
        %v1436 = vpop.f32.mrf.mxu0
        %v1437 = vadd.f32 %v1424, %v1436
        %v1438 = vpop.f32.mrf.mxu0
        %1439 = vdwg.mxu0
        %v1440 = vadd.f32 %v1304, %v1437
        %v1441 = vld [vmem:[%s2] sm:$0x1]
        %v1443 = vperm.slane %v1441, 0
        %v1445 = vadd.f32 %v1440, %v1443
        %v1446 = vmax.f32 %v1445, 0.0
        %v1447 = vpack.c.bf16 %v1446, %v1446
        %s1448 = smul.addr %s173, 4
        %s1449 = scalar_lea.vmem %s170, %s1448
        %vm1450 = vcmask 124928
        %1451 = vst.msk [vmem:[%s1449] sm:$0x7] %vm1450, %v1447
      $region37: #{boundary_head_forward.8} parent=31 // loop_footer
        %s177 = sadd.s32 1, %s173
      $region38: #{boundary_head_forward.8} parent=31 // loop_footer_branch
        %172 = sbr.rel target = $region34
      $region39: #{boundary_head_forward.8} parent=31 // loop_exit
        _
      %p1452 = scmp.lt.s32.totalorder %s14, 1
      %s1453 = scalar_select %p1452, %s14, 1
      %s1454 = smul.addr %s1453, 6
      %s1455 = smul.addr %s1454, 4
      %s1456 = scalar_lea.vmem %s3, %s1455
      // Predicated region
      $region40: #{boundary_head_forward.8} parent=31 // pred_check
        %p1457 = pneg %p100
      $region41: #{boundary_head_forward.8} parent=31 // pred_check_branch
        %1459 = sbr.rel (%p1457) target = $region43
      $region42: #{boundary_head_forward.8} parent=31 // pred_region
        _
      $region43: #{boundary_head_forward.8} parent=31 // pred_fallthru
        _
    $region32: #{boundary_head_forward.8} parent=5 // pred_fallthru
      _
    %p1460 = scmp.le.s32.totalorder 2, %s9
    // Predicated region
    $region44: #{boundary_head_forward.8} parent=5 // pred_check
      %p1461 = pneg %p1460
    $region45: #{boundary_head_forward.8} parent=5 // pred_check_branch
      %1463 = sbr.rel (%p1461) target = $region47
    $region46: #{boundary_head_forward.8} parent=5 // pred_region
      %s1464 = ssub.s32 %s9, 2
      // Predicated region
      $region48: #{boundary_head_forward.8} parent=46 // pred_check
        %p1465 = pneg %p106
      $region49: #{boundary_head_forward.8} parent=46 // pred_check_branch
        %1467 = sbr.rel (%p1465) target = $region51
      $region50: #{boundary_head_forward.8} parent=46 // pred_region
        %p1468 = scmp.lt.s32.totalorder %s15, 1
        %s1469 = scalar_select %p1468, %s15, 1
        %s1470 = smul.addr %s1469, 6
        %s1471 = smul.addr %s1470, 4
        %s1472 = scalar_lea.vmem %s3, %s1471
      $region51: #{boundary_head_forward.8} parent=46 // pred_fallthru
        _
    $region47: #{boundary_head_forward.8} parent=5 // pred_fallthru
      _
  $region6: #{boundary_head_forward.8} parent=0 // loop_footer
    %s13 = sadd.s32 1, %s9
  $region7: #{boundary_head_forward.8} parent=0 // loop_footer_branch
    %8 = sbr.rel target = $region3
  $region8: #{boundary_head_forward.8} parent=0 // loop_exit
    _

// kernel: boundary_head_forward.9
$region0: #{boundary_head_forward.9}
  #allocation0 [shape = 'u32[]', space=smem, size = 0x4, offset = 0x4, fixed_abs, tag = 'smem constant byte address 0x4 - core index']
  #allocation1 [shape = 'u32[72,128]{1,0:T(1,128)}', space=vmem, size = 0x9000, scoped, tag = 'internal scratch']
  %s0 = inlined_call_operand.vmem [shape: bf16[2,18,18,64], index: 0, kind: input, shape index: {}]
  %s1 = inlined_call_operand.vmem [shape: bf16[9,64,16], index: 1, kind: input, shape index: {}]
  %s2 = inlined_call_operand.vmem [shape: f32[1,16], index: 2, kind: input, shape index: {}]
  %s3 = inlined_call_operand.vmem [shape: bf16[64,4], index: 3, kind: input, shape index: {}]
  %s4 = inlined_call_operand.vmem [shape: f32[1,4], index: 4, kind: input, shape index: {}]
  %s5 = inlined_call_operand.hbm [shape: bf16[2,16,16,16], index: 5, kind: output, shape index: {0}]
  %s6 = inlined_call_operand.vmem [shape: f32[2,16,16,1], index: 6, kind: output, shape index: {1}]
  %7 = xla_tuple %s5, %s6
  %s8 = sld [smem:[#allocation0]]
  $region68: #{boundary_head_forward.9} parent=0
    _
  %s10 = ssub.s32 1, %s8
  %s11 = scalar_select 0, %s10, %s8
  $region1: #{boundary_head_forward.9} parent=0
    #allocation2 [shape = 'u8[131072]{0}', space=vmem, size = 0x20000, scoped, tag = 'output window, operand 0']
    #allocation3 [shape = 's32[2]{0}', space=sflag, size = 0x8, scoped, tag = 'scoped memory for boundary_head_forward.9']
    %12 = vsyncpa [#allocation3], 0
    %s13 = scalar_lea.sflag [#allocation3], 1
    %14 = vsyncpa %s13, 0
    loop: start=0, step=1, limit=4
    $region2: #{boundary_head_forward.9} parent=1 // loop_pre_header
      _
    $region3: #{boundary_head_forward.9} parent=1 // loop_header
      %s16 = sphi 0, %s20
      %p17 = scmp.ge.s32.totalorder %s16, 4
      %s26 = sphi 0, %s28
      %s29 = sphi 0, %s26
      %s30 = sphi 0, %s29
      %s46 = sphi 0, %s30
      %s50 = sphi 0, %s50
      %s52 = sphi 0, %s50
      %s53 = sphi 0, %s52
      %s67 = sphi 0, %s53
      %s71 = sphi 0, %s71
      %s73 = sphi 0, %s71
      %s74 = sphi 0, %s73
      %s88 = sphi 0, %s74
      %s92 = sphi 0, %s92
      %s94 = sphi 0, %s92
      %s95 = sphi 0, %s94
      %s109 = sphi 0, %s95
      %s113 = sphi 0, %s113
      %s115 = sphi 0, %s113
      %s116 = sphi 0, %s115
      %s130 = sphi 0, %s116
      %s136 = sphi 0, %s138
      %s139 = sphi 0, %s136
      %s140 = sphi 0, %s139
      %s156 = sphi 0, %s140
      %s162 = sphi 0, %s164
      %s165 = sphi 0, %s162
      %s166 = sphi 0, %s165
      %s182 = sphi 0, %s166
    $region4: #{boundary_head_forward.9} parent=1 // loop_header_branch
      %19 = sbr.rel (%p17) target = $region8
    $region5: #{boundary_head_forward.9} parent=1 // loop_body
      %s21 = ssub.s32 %s16, 1
      %s22 = ssub.s32 %s16, 2
      %s23 = sadd.s32 %s16, 1
      %s24 = ssub.s32 %s16, %s23
      %p25 = scmp.eq.s32.totalorder %s24, 0
      %s27 = sadd.s32 %s26, 1
      %s28 = scalar_select %p25, %s26, %s27
      %p31 = pneg %p25
      %p32 = scmp.eq.s32.totalorder %s16, 1
      %p33 = por %p31, %p32
      %p34 = scmp.ne.s32.totalorder %s26, %s29
      %p35 = scmp.eq.s32.totalorder %s16, 0
      %p36 = por %p34, %p35
      %p37 = scmp.ne.s32.totalorder %s26, %s29
      %p38 = scmp.eq.s32.totalorder %s21, 1
      %p39 = por %p37, %p38
      %p40 = scmp.ne.s32.totalorder %s29, %s30
      %p41 = scmp.eq.s32.totalorder %s21, 0
      %p42 = por %p40, %p41
      %p43 = scmp.ne.s32.totalorder %s29, %s30
      %p44 = scmp.eq.s32.totalorder %s22, 1
      %p45 = por %p43, %p44
      %p47 = scmp.ne.s32.totalorder %s30, %s46
      %p48 = scmp.eq.s32.totalorder %s22, 0
      %p49 = por %p47, %p48
      %s51 = sadd.s32 %s50, 1
      %p54 = scmp.eq.s32.totalorder %s16, 1
      %p55 = scmp.ne.s32.totalorder %s50, %s52
      %p56 = scmp.eq.s32.totalorder %s16, 0
      %p57 = por %p55, %p56
      %p58 = scmp.ne.s32.totalorder %s50, %s52
      %p59 = scmp.eq.s32.totalorder %s21, 1
      %p60 = por %p58, %p59
      %p61 = scmp.ne.s32.totalorder %s52, %s53
      %p62 = scmp.eq.s32.totalorder %s21, 0
      %p63 = por %p61, %p62
      %p64 = scmp.ne.s32.totalorder %s52, %s53
      %p65 = scmp.eq.s32.totalorder %s22, 1
      %p66 = por %p64, %p65
      %p68 = scmp.ne.s32.totalorder %s53, %s67
      %p69 = scmp.eq.s32.totalorder %s22, 0
      %p70 = por %p68, %p69
      %s72 = sadd.s32 %s71, 1
      %p75 = scmp.eq.s32.totalorder %s16, 1
      %p76 = scmp.ne.s32.totalorder %s71, %s73
      %p77 = scmp.eq.s32.totalorder %s16, 0
      %p78 = por %p76, %p77
      %p79 = scmp.ne.s32.totalorder %s71, %s73
      %p80 = scmp.eq.s32.totalorder %s21, 1
      %p81 = por %p79, %p80
      %p82 = scmp.ne.s32.totalorder %s73, %s74
      %p83 = scmp.eq.s32.totalorder %s21, 0
      %p84 = por %p82, %p83
      %p85 = scmp.ne.s32.totalorder %s73, %s74
      %p86 = scmp.eq.s32.totalorder %s22, 1
      %p87 = por %p85, %p86
      %p89 = scmp.ne.s32.totalorder %s74, %s88
      %p90 = scmp.eq.s32.totalorder %s22, 0
      %p91 = por %p89, %p90
      %s93 = sadd.s32 %s92, 1
      %p96 = scmp.eq.s32.totalorder %s16, 1
      %p97 = scmp.ne.s32.totalorder %s92, %s94
      %p98 = scmp.eq.s32.totalorder %s16, 0
      %p99 = por %p97, %p98
      %p100 = scmp.ne.s32.totalorder %s92, %s94
      %p101 = scmp.eq.s32.totalorder %s21, 1
      %p102 = por %p100, %p101
      %p103 = scmp.ne.s32.totalorder %s94, %s95
      %p104 = scmp.eq.s32.totalorder %s21, 0
      %p105 = por %p103, %p104
      %p106 = scmp.ne.s32.totalorder %s94, %s95
      %p107 = scmp.eq.s32.totalorder %s22, 1
      %p108 = por %p106, %p107
      %p110 = scmp.ne.s32.totalorder %s95, %s109
      %p111 = scmp.eq.s32.totalorder %s22, 0
      %p112 = por %p110, %p111
      %s114 = sadd.s32 %s113, 1
      %p117 = scmp.eq.s32.totalorder %s16, 1
      %p118 = scmp.ne.s32.totalorder %s113, %s115
      %p119 = scmp.eq.s32.totalorder %s16, 0
      %p120 = por %p118, %p119
      %p121 = scmp.ne.s32.totalorder %s113, %s115
      %p122 = scmp.eq.s32.totalorder %s21, 1
      %p123 = por %p121, %p122
      %p124 = scmp.ne.s32.totalorder %s115, %s116
      %p125 = scmp.eq.s32.totalorder %s21, 0
      %p126 = por %p124, %p125
      %p127 = scmp.ne.s32.totalorder %s115, %s116
      %p128 = scmp.eq.s32.totalorder %s22, 1
      %p129 = por %p127, %p128
      %p131 = scmp.ne.s32.totalorder %s116, %s130
      %p132 = scmp.eq.s32.totalorder %s22, 0
      %p133 = por %p131, %p132
      %s134 = ssub.s32 %s16, %s23
      %p135 = scmp.eq.s32.totalorder %s134, 0
      %s137 = sadd.s32 %s136, 1
      %s138 = scalar_select %p135, %s136, %s137
      %p141 = pneg %p135
      %p142 = scmp.eq.s32.totalorder %s16, 1
      %p143 = por %p141, %p142
      %p144 = scmp.ne.s32.totalorder %s136, %s139
      %p145 = scmp.eq.s32.totalorder %s16, 0
      %p146 = por %p144, %p145
      %p147 = scmp.ne.s32.totalorder %s136, %s139
      %p148 = scmp.eq.s32.totalorder %s21, 1
      %p149 = por %p147, %p148
      %p150 = scmp.ne.s32.totalorder %s139, %s140
      %p151 = scmp.eq.s32.totalorder %s21, 0
      %p152 = por %p150, %p151
      %p153 = scmp.ne.s32.totalorder %s139, %s140
      %p154 = scmp.eq.s32.totalorder %s22, 1
      %p155 = por %p153, %p154
      %p157 = scmp.ne.s32.totalorder %s140, %s156
      %p158 = scmp.eq.s32.totalorder %s22, 0
      %p159 = por %p157, %p158
      %s160 = ssub.s32 %s16, %s23
      %p161 = scmp.eq.s32.totalorder %s160, 0
      %s163 = sadd.s32 %s162, 1
      %s164 = scalar_select %p161, %s162, %s163
      %p167 = pneg %p161
      %p168 = scmp.eq.s32.totalorder %s16, 1
      %p169 = por %p167, %p168
      %p170 = scmp.ne.s32.totalorder %s162, %s165
      %p171 = scmp.eq.s32.totalorder %s16, 0
      %p172 = por %p170, %p171
      %p173 = scmp.ne.s32.totalorder %s162, %s165
      %p174 = scmp.eq.s32.totalorder %s21, 1
      %p175 = por %p173, %p174
      %p176 = scmp.ne.s32.totalorder %s165, %s166
      %p177 = scmp.eq.s32.totalorder %s21, 0
      %p178 = por %p176, %p177
      %p179 = scmp.ne.s32.totalorder %s165, %s166
      %p180 = scmp.eq.s32.totalorder %s22, 1
      %p181 = por %p179, %p180
      %p183 = scmp.ne.s32.totalorder %s166, %s182
      %p184 = scmp.eq.s32.totalorder %s22, 0
      %p185 = por %p183, %p184
      %p186 = scmp.le.s32.totalorder 1, %s16
      %p187 = scmp.lt.s32.totalorder %s16, 3
      %p188 = pnand %p186, %p187
      %p189 = pneg %p188
      // Predicated region
      $region9: #{boundary_head_forward.9} parent=5 // pred_check
        _
      $region10: #{boundary_head_forward.9} parent=5 // pred_check_branch
        %191 = sbr.rel (%p188) target = $region12
      $region11: #{boundary_head_forward.9} parent=5 // pred_region
        %s192 = ssub.s32 %s16, 1
        // Predicated region
        $region13: #{boundary_head_forward.9} parent=11 // pred_check
          %p193 = pneg %p63
        $region14: #{boundary_head_forward.9} parent=11 // pred_check_branch
          %195 = sbr.rel (%p193) target = $region16
        $region15: #{boundary_head_forward.9} parent=11 // pred_region
          _
        $region16: #{boundary_head_forward.9} parent=11 // pred_fallthru
          _
        // Predicated region
        $region17: #{boundary_head_forward.9} parent=11 // pred_check
          %p196 = pneg %p84
        $region18: #{boundary_head_forward.9} parent=11 // pred_check_branch
          %198 = sbr.rel (%p196) target = $region20
        $region19: #{boundary_head_forward.9} parent=11 // pred_region
          _
        $region20: #{boundary_head_forward.9} parent=11 // pred_fallthru
          _
        // Predicated region
        $region21: #{boundary_head_forward.9} parent=11 // pred_check
          %p199 = pneg %p105
        $region22: #{boundary_head_forward.9} parent=11 // pred_check_branch
          %201 = sbr.rel (%p199) target = $region24
        $region23: #{boundary_head_forward.9} parent=11 // pred_region
          _
        $region24: #{boundary_head_forward.9} parent=11 // pred_fallthru
          _
        // Predicated region
        $region25: #{boundary_head_forward.9} parent=11 // pred_check
          %p202 = pneg %p126
        $region26: #{boundary_head_forward.9} parent=11 // pred_check_branch
          %204 = sbr.rel (%p202) target = $region28
        $region27: #{boundary_head_forward.9} parent=11 // pred_region
          _
        $region28: #{boundary_head_forward.9} parent=11 // pred_fallthru
          _
      $region12: #{boundary_head_forward.9} parent=5 // pred_fallthru
        _
      %p205 = scmp.lt.s32.totalorder %s16, 2
      // Predicated region
      $region29: #{boundary_head_forward.9} parent=5 // pred_check
        %p206 = pneg %p205
      $region30: #{boundary_head_forward.9} parent=5 // pred_check_branch
        %208 = sbr.rel (%p206) target = $region32
      $region31: #{boundary_head_forward.9} parent=5 // pred_region
        // Predicated region
        $region33: #{boundary_head_forward.9} parent=31 // pred_check
          %p209 = pneg %p36
        $region34: #{boundary_head_forward.9} parent=31 // pred_check_branch
          %211 = sbr.rel (%p209) target = $region36
        $region35: #{boundary_head_forward.9} parent=31 // pred_region
          %p212 = scmp.lt.s32.totalorder %s16, 1
          %s213 = scalar_select %p212, %s16, 1
          %s214 = smul.addr %s213, 54
          %s215 = smul.addr %s214, 4
          %s216 = scalar_lea.vmem %s0, %s215
        $region36: #{boundary_head_forward.9} parent=31 // pred_fallthru
          _
      $region32: #{boundary_head_forward.9} parent=5 // pred_fallthru
        _
      %p217 = scmp.le.s32.totalorder 1, %s16
      %p218 = scmp.lt.s32.totalorder %s16, 3
      %p219 = pnand %p217, %p218
      %p220 = pneg %p219
      // Predicated region
      $region37: #{boundary_head_forward.9} parent=5 // pred_check
        _
      $region38: #{boundary_head_forward.9} parent=5 // pred_check_branch
        %222 = sbr.rel (%p219) target = $region40
      $region39: #{boundary_head_forward.9} parent=5 // pred_region
        %s223 = ssub.s32 %s16, 1
        %p224 = scmp.lt.s32.totalorder %s21, 1
        %s225 = scalar_select %p224, %s21, 1
        %s226 = smul.addr %s225, 54
        %s227 = smul.addr %s226, 4
        %s228 = scalar_lea.vmem %s0, %s227
        %p229 = pneg %p42
        %p230 = pneg %p39
        %p231 = pneg %p63
        %p232 = pneg %p60
        %p233 = pneg %p84
        %p234 = pneg %p81
        %p235 = pneg %p105
        %p236 = pneg %p102
        %p237 = pneg %p126
        %p238 = pneg %p123
        %p239 = pneg %p152
        %p240 = pneg %p149
        %s241 = sand.u32 %s139, 1
        %s242 = scalar_lea.sflag [#allocation3], %s241
        %s243 = sand.u32 %s139, 1
        %s244 = smul.addr %s243, 128
        %s245 = scalar_lea.vmem [#allocation2], %s244
        %p246 = pneg %p178
        %p247 = pneg %p175
        %p248 = scmp.lt.s32.totalorder %s21, 1
        %s249 = scalar_select %p248, %s21, 1
        %s250 = smul.addr %s249, 32
        %s251 = smul.addr %s250, 8
        %s252 = scalar_lea.vmem %s6, %s251
        %p253 = scmp.lt.s32.totalorder %s21, 1
        %s254 = scalar_select %p253, %s21, 1
        %s255 = smul.addr %s254, 54
        %s256 = smul.addr %s255, 4
        %s257 = scalar_lea.vmem %s0, %s256
        %p258 = scmp.lt.s32.totalorder %s21, 1
        %s259 = scalar_select %p258, %s21, 1
        %s260 = smul.addr %s259, 32
        %s261 = smul.addr %s260, 8
        %s262 = scalar_lea.vmem %s6, %s261
        loop: start=0, step=1, limit=16
        $region41: #{boundary_head_forward.9} parent=39 // loop_pre_header
          _
        $region42: #{boundary_head_forward.9} parent=39 // loop_header
          %s265 = sphi 0, %s269
          %p266 = scmp.ge.s32.totalorder %s265, 16
        $region43: #{boundary_head_forward.9} parent=39 // loop_header_branch
          %268 = sbr.rel (%p266) target = $region47
        $region44: #{boundary_head_forward.9} parent=39 // loop_body
          %s270 = smul.u32 %s265, 3
          %s271 = smul.addr %s270, 4
          %s272 = scalar_lea.vmem %s257, %s271
          %v273 = vld [vmem:[%s272] sm:$0xf]
          %v274 = vld [vmem:[%s272 + $0x4] sm:$0xf]
          %v275 = vld [vmem:[%s1] sm:$0xf]
          %v276 = vld [vmem:[%s1 + $0x4] sm:$0xf]
          %v277 = vld [vmem:[%s1 + $0x8] sm:$0xf]
          %v278 = vld [vmem:[%s1 + $0xc] sm:$0xf]
          %v279 = vld [vmem:[%s1 + $0x10] sm:$0xf]
          %v280 = vld [vmem:[%s1 + $0x14] sm:$0xf]
          %v281 = vld [vmem:[%s1 + $0x18] sm:$0xf]
          %v282 = vld [vmem:[%s1 + $0x1c] sm:$0xf]
          %v283 = vld [vmem:[%s272 + $0x8] sm:$0x1]
          %s284 = scalar_lea.vmem %s1, 32
          %v285 = vld [vmem:[%s284] sm:$0xf]
          %v286 = vld [vmem:[%s284 + $0x4] sm:$0xf]
          %v287 = vld [vmem:[%s284 + $0x8] sm:$0xf]
          %v288 = vld [vmem:[%s284 + $0xc] sm:$0xf]
          %v289 = vld [vmem:[%s284 + $0x10] sm:$0xf]
          %v290 = vld [vmem:[%s284 + $0x14] sm:$0xf]
          %v291 = vld [vmem:[%s284 + $0x18] sm:$0xf]
          %v292 = vld [vmem:[%s284 + $0x1c] sm:$0xf]
          %v296 = vunpack.c.l.b16 %v273
          %v297 = vunpack.c.l.b16 %v274
          %v298 = vunpack.c.l.b16 %v283
          %v299 = vpack.c.b16 %v297, %v296
          %v300 = vpack.c.b16 %v298, %v298
          %vm301 = vsmask.f32 7424
          %v303 = vshrl.u32 %v299, 16
          %v305 = vshll.u32 %v299, 16
          %v307 = vrot.slane %v305, 1
          %v308 = vor.u32 %v303, %v307
          %v310 = vshll.u32 %v300, 16
          %v312 = vrot.slane %v310, 1
          %v313 = vsel %vm301, %v308, %v312
          %v322 = vunpack.c.l.b16 %v285
          %v323 = vunpack.c.l.b16 %v286
          %v324 = vunpack.c.l.b16 %v287
          %v325 = vunpack.c.l.b16 %v288
          %v326 = vunpack.c.l.b16 %v289
          %v327 = vunpack.c.l.b16 %v290
          %v328 = vunpack.c.l.b16 %v291
          %v329 = vunpack.c.l.b16 %v292
          %v330 = vpack.c.b16 %v323, %v322
          %v331 = vpack.c.b16 %v325, %v324
          %v332 = vpack.c.b16 %v327, %v326
          %v333 = vpack.c.b16 %v329, %v328
          %vm338 = vcmask 523264
          %v340 = vsel %vm338, %v313, 0
          %342 = vmatpush.bf16.msra.mxu0 0
          %343 = vmatpush.bf16.msra.mxu0 0
          %344 = vmatpush.bf16.msra.mxu0 0
          %345 = vmatpush.bf16.msra.mxu0 0
          %346 = vmatpush.bf16.msra.mxu0 %v333
          %347 = vmatpush.bf16.msra.mxu0 %v332
          %348 = vmatpush.bf16.msra.mxu0 %v331
          %349 = vmatpush.bf16.msra.mxu0 %v330
          %350 = vmatmul.bf16.gmra.mxu0 %v340
          %v351 = vpop.f32.mrf.mxu0
          %v352 = vadd.f32 0.0, %v351
          %v353 = vpop.f32.mrf.mxu0
          %v354 = vadd.f32 0.0, %v353
          %355 = vdwg.mxu0
          %v364 = vunpack.c.l.b16 %v275
          %v365 = vunpack.c.l.b16 %v276
          %v366 = vunpack.c.l.b16 %v277
          %v367 = vunpack.c.l.b16 %v278
          %v368 = vunpack.c.l.b16 %v279
          %v369 = vunpack.c.l.b16 %v280
          %v370 = vunpack.c.l.b16 %v281
          %v371 = vunpack.c.l.b16 %v282
          %v372 = vpack.c.b16 %v365, %v364
          %v373 = vpack.c.b16 %v367, %v366
          %v374 = vpack.c.b16 %v369, %v368
          %v375 = vpack.c.b16 %v371, %v370
          %v380 = vsel %vm338, %v299, 0
          %382 = vmatpush.bf16.msra.mxu0 0
          %383 = vmatpush.bf16.msra.mxu0 0
          %384 = vmatpush.bf16.msra.mxu0 0
          %385 = vmatpush.bf16.msra.mxu0 0
          %386 = vmatpush.bf16.msra.mxu0 %v375
          %387 = vmatpush.bf16.msra.mxu0 %v374
          %388 = vmatpush.bf16.msra.mxu0 %v373
          %389 = vmatpush.bf16.msra.mxu0 %v372
          %390 = vmatmul.bf16.gmra.mxu0 %v380
          %v391 = vpop.f32.mrf.mxu0
          %v392 = vadd.f32 %v352, %v391
          %v393 = vpop.f32.mrf.mxu0
          %v394 = vadd.f32 %v354, %v393
          %395 = vdwg.mxu0
          %v396 = vld [vmem:[%s272] sm:$0xe]
          %s397 = scalar_lea.vmem %s1, 64
          %v398 = vld [vmem:[%s397] sm:$0xf]
          %v399 = vld [vmem:[%s397 + $0x4] sm:$0xf]
          %v400 = vld [vmem:[%s397 + $0x8] sm:$0xf]
          %v401 = vld [vmem:[%s397 + $0xc] sm:$0xf]
          %v402 = vld [vmem:[%s397 + $0x10] sm:$0xf]
          %v403 = vld [vmem:[%s397 + $0x14] sm:$0xf]
          %v404 = vld [vmem:[%s397 + $0x18] sm:$0xf]
          %v405 = vld [vmem:[%s397 + $0x1c] sm:$0xf]
          %v407 = vunpack.c.l.b16 %v396
          %v408 = vpack.c.b16 %v297, %v407
          %vm409 = vcmask 1046528
          %v410 = vrot.slane %v408, 1
          %v411 = vrot.slane %v300, 1
          %v412 = vsel %vm409, %v410, %v411
          %v421 = vunpack.c.l.b16 %v398
          %v422 = vunpack.c.l.b16 %v399
          %v423 = vunpack.c.l.b16 %v400
          %v424 = vunpack.c.l.b16 %v401
          %v425 = vunpack.c.l.b16 %v402
          %v426 = vunpack.c.l.b16 %v403
          %v427 = vunpack.c.l.b16 %v404
          %v428 = vunpack.c.l.b16 %v405
          %v429 = vpack.c.b16 %v422, %v421
          %v430 = vpack.c.b16 %v424, %v423
          %v431 = vpack.c.b16 %v426, %v425
          %v432 = vpack.c.b16 %v428, %v427
          %v438 = vsel %vm338, %v412, 0
          %440 = vmatpush.bf16.msra.mxu0 0
          %441 = vmatpush.bf16.msra.mxu0 0
          %442 = vmatpush.bf16.msra.mxu0 0
          %443 = vmatpush.bf16.msra.mxu0 0
          %444 = vmatpush.bf16.msra.mxu0 %v432
          %445 = vmatpush.bf16.msra.mxu0 %v431
          %446 = vmatpush.bf16.msra.mxu0 %v430
          %447 = vmatpush.bf16.msra.mxu0 %v429
          %448 = vmatmul.bf16.gmra.mxu0 %v438
          %v449 = vpop.f32.mrf.mxu0
          %v450 = vadd.f32 0.0, %v449
          %v451 = vpop.f32.mrf.mxu0
          %v452 = vadd.f32 0.0, %v451
          %453 = vdwg.mxu0
          %v454 = vadd.f32 %v392, %v450
          %v455 = vadd.f32 %v394, %v452
          %s456 = sadd.s32 %s265, 1
          %s457 = smul.u32 %s456, 3
          %s458 = smul.addr %s457, 4
          %s459 = scalar_lea.vmem %s257, %s458
          %v460 = vld [vmem:[%s459] sm:$0xf]
          %v461 = vld [vmem:[%s459 + $0x4] sm:$0xf]
          %s462 = scalar_lea.vmem %s1, 96
          %v463 = vld [vmem:[%s462] sm:$0xf]
          %v464 = vld [vmem:[%s462 + $0x4] sm:$0xf]
          %v465 = vld [vmem:[%s462 + $0x8] sm:$0xf]
          %v466 = vld [vmem:[%s462 + $0xc] sm:$0xf]
          %v467 = vld [vmem:[%s462 + $0x10] sm:$0xf]
          %v468 = vld [vmem:[%s462 + $0x14] sm:$0xf]
          %v469 = vld [vmem:[%s462 + $0x18] sm:$0xf]
          %v470 = vld [vmem:[%s462 + $0x1c] sm:$0xf]
          %v473 = vunpack.c.l.b16 %v460
          %v474 = vunpack.c.l.b16 %v461
          %v475 = vpack.c.b16 %v474, %v473
          %v484 = vunpack.c.l.b16 %v463
          %v485 = vunpack.c.l.b16 %v464
          %v486 = vunpack.c.l.b16 %v465
          %v487 = vunpack.c.l.b16 %v466
          %v488 = vunpack.c.l.b16 %v467
          %v489 = vunpack.c.l.b16 %v468
          %v490 = vunpack.c.l.b16 %v469
          %v491 = vunpack.c.l.b16 %v470
          %v492 = vpack.c.b16 %v485, %v484
          %v493 = vpack.c.b16 %v487, %v486
          %v494 = vpack.c.b16 %v489, %v488
          %v495 = vpack.c.b16 %v491, %v490
          %v501 = vsel %vm338, %v475, 0
          %503 = vmatpush.bf16.msra.mxu0 0
          %504 = vmatpush.bf16.msra.mxu0 0
          %505 = vmatpush.bf16.msra.mxu0 0
          %506 = vmatpush.bf16.msra.mxu0 0
          %507 = vmatpush.bf16.msra.mxu0 %v495
          %508 = vmatpush.bf16.msra.mxu0 %v494
          %509 = vmatpush.bf16.msra.mxu0 %v493
          %510 = vmatpush.bf16.msra.mxu0 %v492
          %511 = vmatmul.bf16.gmra.mxu0 %v501
          %v512 = vpop.f32.mrf.mxu0
          %v513 = vadd.f32 0.0, %v512
          %v514 = vpop.f32.mrf.mxu0
          %v515 = vadd.f32 0.0, %v514
          %516 = vdwg.mxu0
          %v517 = vadd.f32 %v454, %v513
          %v518 = vadd.f32 %v455, %v515
          %v519 = vld [vmem:[%s459] sm:$0xf]
          %v520 = vld [vmem:[%s459 + $0x4] sm:$0xf]
          %v521 = vld [vmem:[%s459 + $0x8] sm:$0x1]
          %s522 = scalar_lea.vmem %s1, 128
          %v523 = vld [vmem:[%s522] sm:$0xf]
          %v524 = vld [vmem:[%s522 + $0x4] sm:$0xf]
          %v525 = vld [vmem:[%s522 + $0x8] sm:$0xf]
          %v526 = vld [vmem:[%s522 + $0xc] sm:$0xf]
          %v527 = vld [vmem:[%s522 + $0x10] sm:$0xf]
          %v528 = vld [vmem:[%s522 + $0x14] sm:$0xf]
          %v529 = vld [vmem:[%s522 + $0x18] sm:$0xf]
          %v530 = vld [vmem:[%s522 + $0x1c] sm:$0xf]
          %v534 = vunpack.c.l.b16 %v519
          %v535 = vunpack.c.l.b16 %v520
          %v536 = vunpack.c.l.b16 %v521
          %v537 = vpack.c.b16 %v535, %v534
          %v538 = vpack.c.b16 %v536, %v536
          %v540 = vshrl.u32 %v537, 16
          %v542 = vshll.u32 %v537, 16
          %v544 = vrot.slane %v542, 1
          %v545 = vor.u32 %v540, %v544
          %v547 = vshll.u32 %v538, 16
          %v549 = vrot.slane %v547, 1
          %v550 = vsel %vm301, %v545, %v549
          %v559 = vunpack.c.l.b16 %v523
          %v560 = vunpack.c.l.b16 %v524
          %v561 = vunpack.c.l.b16 %v525
          %v562 = vunpack.c.l.b16 %v526
          %v563 = vunpack.c.l.b16 %v527
          %v564 = vunpack.c.l.b16 %v528
          %v565 = vunpack.c.l.b16 %v529
          %v566 = vunpack.c.l.b16 %v530
          %v567 = vpack.c.b16 %v560, %v559
          %v568 = vpack.c.b16 %v562, %v561
          %v569 = vpack.c.b16 %v564, %v563
          %v570 = vpack.c.b16 %v566, %v565
          %v576 = vsel %vm338, %v550, 0
          %578 = vmatpush.bf16.msra.mxu0 0
          %579 = vmatpush.bf16.msra.mxu0 0
          %580 = vmatpush.bf16.msra.mxu0 0
          %581 = vmatpush.bf16.msra.mxu0 0
          %582 = vmatpush.bf16.msra.mxu0 %v570
          %583 = vmatpush.bf16.msra.mxu0 %v569
          %584 = vmatpush.bf16.msra.mxu0 %v568
          %585 = vmatpush.bf16.msra.mxu0 %v567
          %586 = vmatmul.bf16.gmra.mxu0 %v576
          %v587 = vpop.f32.mrf.mxu0
          %v588 = vadd.f32 0.0, %v587
          %v589 = vpop.f32.mrf.mxu0
          %v590 = vadd.f32 0.0, %v589
          %591 = vdwg.mxu0
          %v592 = vadd.f32 %v517, %v588
          %v593 = vadd.f32 %v518, %v590
          %v594 = vld [vmem:[%s459] sm:$0xe]
          %s595 = scalar_lea.vmem %s1, 160
          %v596 = vld [vmem:[%s595] sm:$0xf]
          %v597 = vld [vmem:[%s595 + $0x4] sm:$0xf]
          %v598 = vld [vmem:[%s595 + $0x8] sm:$0xf]
          %v599 = vld [vmem:[%s595 + $0xc] sm:$0xf]
          %v600 = vld [vmem:[%s595 + $0x10] sm:$0xf]
          %v601 = vld [vmem:[%s595 + $0x14] sm:$0xf]
          %v602 = vld [vmem:[%s595 + $0x18] sm:$0xf]
          %v603 = vld [vmem:[%s595 + $0x1c] sm:$0xf]
          %v605 = vunpack.c.l.b16 %v594
          %v606 = vpack.c.b16 %v535, %v605
          %v607 = vrot.slane %v606, 1
          %v608 = vrot.slane %v538, 1
          %v609 = vsel %vm409, %v607, %v608
          %v618 = vunpack.c.l.b16 %v596
          %v619 = vunpack.c.l.b16 %v597
          %v620 = vunpack.c.l.b16 %v598
          %v621 = vunpack.c.l.b16 %v599
          %v622 = vunpack.c.l.b16 %v600
          %v623 = vunpack.c.l.b16 %v601
          %v624 = vunpack.c.l.b16 %v602
          %v625 = vunpack.c.l.b16 %v603
          %v626 = vpack.c.b16 %v619, %v618
          %v627 = vpack.c.b16 %v621, %v620
          %v628 = vpack.c.b16 %v623, %v622
          %v629 = vpack.c.b16 %v625, %v624
          %v635 = vsel %vm338, %v609, 0
          %637 = vmatpush.bf16.msra.mxu0 0
          %638 = vmatpush.bf16.msra.mxu0 0
          %639 = vmatpush.bf16.msra.mxu0 0
          %640 = vmatpush.bf16.msra.mxu0 0
          %641 = vmatpush.bf16.msra.mxu0 %v629
          %642 = vmatpush.bf16.msra.mxu0 %v628
          %643 = vmatpush.bf16.msra.mxu0 %v627
          %644 = vmatpush.bf16.msra.mxu0 %v626
          %645 = vmatmul.bf16.gmra.mxu0 %v635
          %v646 = vpop.f32.mrf.mxu0
          %v647 = vadd.f32 0.0, %v646
          %v648 = vpop.f32.mrf.mxu0
          %v649 = vadd.f32 0.0, %v648
          %650 = vdwg.mxu0
          %v651 = vadd.f32 %v592, %v647
          %v652 = vadd.f32 %v593, %v649
          %s653 = sadd.s32 %s265, 2
          %s654 = smul.u32 %s653, 3
          %s655 = smul.addr %s654, 4
          %s656 = scalar_lea.vmem %s257, %s655
          %v657 = vld [vmem:[%s656] sm:$0xf]
          %v658 = vld [vmem:[%s656 + $0x4] sm:$0xf]
          %s659 = scalar_lea.vmem %s1, 192
          %v660 = vld [vmem:[%s659] sm:$0xf]
          %v661 = vld [vmem:[%s659 + $0x4] sm:$0xf]
          %v662 = vld [vmem:[%s659 + $0x8] sm:$0xf]
          %v663 = vld [vmem:[%s659 + $0xc] sm:$0xf]
          %v664 = vld [vmem:[%s659 + $0x10] sm:$0xf]
          %v665 = vld [vmem:[%s659 + $0x14] sm:$0xf]
          %v666 = vld [vmem:[%s659 + $0x18] sm:$0xf]
          %v667 = vld [vmem:[%s659 + $0x1c] sm:$0xf]
          %v670 = vunpack.c.l.b16 %v657
          %v671 = vunpack.c.l.b16 %v658
          %v672 = vpack.c.b16 %v671, %v670
          %v681 = vunpack.c.l.b16 %v660
          %v682 = vunpack.c.l.b16 %v661
          %v683 = vunpack.c.l.b16 %v662
          %v684 = vunpack.c.l.b16 %v663
          %v685 = vunpack.c.l.b16 %v664
          %v686 = vunpack.c.l.b16 %v665
          %v687 = vunpack.c.l.b16 %v666
          %v688 = vunpack.c.l.b16 %v667
          %v689 = vpack.c.b16 %v682, %v681
          %v690 = vpack.c.b16 %v684, %v683
          %v691 = vpack.c.b16 %v686, %v685
          %v692 = vpack.c.b16 %v688, %v687
          %v698 = vsel %vm338, %v672, 0
          %700 = vmatpush.bf16.msra.mxu0 0
          %701 = vmatpush.bf16.msra.mxu0 0
          %702 = vmatpush.bf16.msra.mxu0 0
          %703 = vmatpush.bf16.msra.mxu0 0
          %704 = vmatpush.bf16.msra.mxu0 %v692
          %705 = vmatpush.bf16.msra.mxu0 %v691
          %706 = vmatpush.bf16.msra.mxu0 %v690
          %707 = vmatpush.bf16.msra.mxu0 %v689
          %708 = vmatmul.bf16.gmra.mxu0 %v698
          %v709 = vpop.f32.mrf.mxu0
          %v710 = vadd.f32 0.0, %v709
          %v711 = vpop.f32.mrf.mxu0
          %v712 = vadd.f32 0.0, %v711
          %713 = vdwg.mxu0
          %v714 = vadd.f32 %v651, %v710
          %v715 = vadd.f32 %v652, %v712
          %v716 = vld [vmem:[%s656] sm:$0xf]
          %v717 = vld [vmem:[%s656 + $0x4] sm:$0xf]
          %v718 = vld [vmem:[%s656 + $0x8] sm:$0x1]
          %s719 = scalar_lea.vmem %s1, 224
          %v720 = vld [vmem:[%s719] sm:$0xf]
          %v721 = vld [vmem:[%s719 + $0x4] sm:$0xf]
          %v722 = vld [vmem:[%s719 + $0x8] sm:$0xf]
          %v723 = vld [vmem:[%s719 + $0xc] sm:$0xf]
          %v724 = vld [vmem:[%s719 + $0x10] sm:$0xf]
          %v725 = vld [vmem:[%s719 + $0x14] sm:$0xf]
          %v726 = vld [vmem:[%s719 + $0x18] sm:$0xf]
          %v727 = vld [vmem:[%s719 + $0x1c] sm:$0xf]
          %v731 = vunpack.c.l.b16 %v716
          %v732 = vunpack.c.l.b16 %v717
          %v733 = vunpack.c.l.b16 %v718
          %v734 = vpack.c.b16 %v732, %v731
          %v735 = vpack.c.b16 %v733, %v733
          %v737 = vshrl.u32 %v734, 16
          %v739 = vshll.u32 %v734, 16
          %v741 = vrot.slane %v739, 1
          %v742 = vor.u32 %v737, %v741
          %v744 = vshll.u32 %v735, 16
          %v746 = vrot.slane %v744, 1
          %v747 = vsel %vm301, %v742, %v746
          %v756 = vunpack.c.l.b16 %v720
          %v757 = vunpack.c.l.b16 %v721
          %v758 = vunpack.c.l.b16 %v722
          %v759 = vunpack.c.l.b16 %v723
          %v760 = vunpack.c.l.b16 %v724
          %v761 = vunpack.c.l.b16 %v725
          %v762 = vunpack.c.l.b16 %v726
          %v763 = vunpack.c.l.b16 %v727
          %v764 = vpack.c.b16 %v757, %v756
          %v765 = vpack.c.b16 %v759, %v758
          %v766 = vpack.c.b16 %v761, %v760
          %v767 = vpack.c.b16 %v763, %v762
          %v773 = vsel %vm338, %v747, 0
          %775 = vmatpush.bf16.msra.mxu0 0
          %776 = vmatpush.bf16.msra.mxu0 0
          %777 = vmatpush.bf16.msra.mxu0 0
          %778 = vmatpush.bf16.msra.mxu0 0
          %779 = vmatpush.bf16.msra.mxu0 %v767
          %780 = vmatpush.bf16.msra.mxu0 %v766
          %781 = vmatpush.bf16.msra.mxu0 %v765
          %782 = vmatpush.bf16.msra.mxu0 %v764
          %783 = vmatmul.bf16.gmra.mxu0 %v773
          %v784 = vpop.f32.mrf.mxu0
          %v785 = vadd.f32 0.0, %v784
          %v786 = vpop.f32.mrf.mxu0
          %v787 = vadd.f32 0.0, %v786
          %788 = vdwg.mxu0
          %v789 = vadd.f32 %v714, %v785
          %v790 = vadd.f32 %v715, %v787
          %v791 = vld [vmem:[%s656] sm:$0xe]
          %s792 = scalar_lea.vmem %s1, 256
          %v793 = vld [vmem:[%s792] sm:$0xf]
          %v794 = vld [vmem:[%s792 + $0x4] sm:$0xf]
          %v795 = vld [vmem:[%s792 + $0x8] sm:$0xf]
          %v796 = vld [vmem:[%s792 + $0xc] sm:$0xf]
          %v797 = vld [vmem:[%s792 + $0x10] sm:$0xf]
          %v798 = vld [vmem:[%s792 + $0x14] sm:$0xf]
          %v799 = vld [vmem:[%s792 + $0x18] sm:$0xf]
          %v800 = vld [vmem:[%s792 + $0x1c] sm:$0xf]
          %v802 = vunpack.c.l.b16 %v791
          %v803 = vpack.c.b16 %v732, %v802
          %v804 = vrot.slane %v803, 1
          %v805 = vrot.slane %v735, 1
          %v806 = vsel %vm409, %v804, %v805
          %v815 = vunpack.c.l.b16 %v793
          %v816 = vunpack.c.l.b16 %v794
          %v817 = vunpack.c.l.b16 %v795
          %v818 = vunpack.c.l.b16 %v796
          %v819 = vunpack.c.l.b16 %v797
          %v820 = vunpack.c.l.b16 %v798
          %v821 = vunpack.c.l.b16 %v799
          %v822 = vunpack.c.l.b16 %v800
          %v823 = vpack.c.b16 %v816, %v815
          %v824 = vpack.c.b16 %v818, %v817
          %v825 = vpack.c.b16 %v820, %v819
          %v826 = vpack.c.b16 %v822, %v821
          %v832 = vsel %vm338, %v806, 0
          %834 = vmatpush.bf16.msra.mxu0 0
          %835 = vmatpush.bf16.msra.mxu0 0
          %836 = vmatpush.bf16.msra.mxu0 0
          %837 = vmatpush.bf16.msra.mxu0 0
          %838 = vmatpush.bf16.msra.mxu0 %v826
          %839 = vmatpush.bf16.msra.mxu0 %v825
          %840 = vmatpush.bf16.msra.mxu0 %v824
          %841 = vmatpush.bf16.msra.mxu0 %v823
          %842 = vmatmul.bf16.gmra.mxu0 %v832
          %v843 = vpop.f32.mrf.mxu0
          %v844 = vadd.f32 0.0, %v843
          %v845 = vpop.f32.mrf.mxu0
          %v846 = vadd.f32 0.0, %v845
          %847 = vdwg.mxu0
          %v848 = vadd.f32 %v789, %v844
          %v849 = vadd.f32 %v790, %v846
          %v850 = vld [vmem:[%s2] sm:$0x1]
          %v852 = vperm.slane %v850, 0
          %v854 = vadd.f32 %v848, %v852
          %v855 = vadd.f32 %v849, %v852
          %v856 = vmax.f32 %v854, 0.0
          %v857 = vmax.f32 %v855, 0.0
          %v858 = vpack.c.bf16 %v856, %v856
          %v859 = vpack.c.bf16 %v857, %v857
          %s860 = smul.u32 %s265, 2
          %s861 = smul.addr %s860, 4
          %s862 = scalar_lea.vmem %s245, %s861 [#allocation2]
          %vm863 = vcmask 125952
          %864 = vst.msk [vmem:[%s862] sm:$0xf] %vm863, %v858
          %865 = vst.msk [vmem:[%s862 + $0x4] sm:$0xf] %vm863, %v859
          %v866 = vld [vmem:[%s459] sm:$0xf]
          %v867 = vld [vmem:[%s459 + $0x4] sm:$0xf]
          %v868 = vld [vmem:[%s459 + $0x8] sm:$0x1]
          %v869 = vld [vmem:[%s3] sm:$0xf]
          %v870 = vld [vmem:[%s3 + $0x4] sm:$0xf]
          %v871 = vld [vmem:[%s3 + $0x8] sm:$0xf]
          %v872 = vld [vmem:[%s3 + $0xc] sm:$0xf]
          %v873 = vld [vmem:[%s3 + $0x10] sm:$0xf]
          %v874 = vld [vmem:[%s3 + $0x14] sm:$0xf]
          %v875 = vld [vmem:[%s3 + $0x18] sm:$0xf]
          %v876 = vld [vmem:[%s3 + $0x1c] sm:$0xf]
          %v877 = vld [vmem:[%s4] sm:$0x1]
          %v879 = vperm.slane %v877, 0
          %v884 = vunpack.c.l.b16 %v866
          %v885 = vunpack.c.l.b16 %v867
          %v886 = vunpack.c.l.b16 %v868
          %v887 = vpack.c.b16 %v885, %v884
          %v888 = vpack.c.b16 %v886, %v886
          %v890 = vshrl.u32 %v887, 16
          %v892 = vshll.u32 %v887, 16
          %v894 = vrot.slane %v892, 1
          %v895 = vor.u32 %v890, %v894
          %v897 = vshll.u32 %v888, 16
          %v899 = vrot.slane %v897, 1
          %v900 = vsel %vm301, %v895, %v899
          %v909 = vunpack.c.l.b16 %v869
          %v910 = vunpack.c.l.b16 %v870
          %v911 = vunpack.c.l.b16 %v871
          %v912 = vunpack.c.l.b16 %v872
          %v913 = vunpack.c.l.b16 %v873
          %v914 = vunpack.c.l.b16 %v874
          %v915 = vunpack.c.l.b16 %v875
          %v916 = vunpack.c.l.b16 %v876
          %v917 = vpack.c.b16 %v910, %v909
          %v918 = vpack.c.b16 %v912, %v911
          %v919 = vpack.c.b16 %v914, %v913
          %v920 = vpack.c.b16 %v916, %v915
          %v926 = vsel %vm338, %v900, 0
          %928 = vmatpush.bf16.msra.mxu0 0
          %929 = vmatpush.bf16.msra.mxu0 0
          %930 = vmatpush.bf16.msra.mxu0 0
          %931 = vmatpush.bf16.msra.mxu0 0
          %932 = vmatpush.bf16.msra.mxu0 %v920
          %933 = vmatpush.bf16.msra.mxu0 %v919
          %934 = vmatpush.bf16.msra.mxu0 %v918
          %935 = vmatpush.bf16.msra.mxu0 %v917
          %936 = vmatmul.bf16.gmra.mxu0 %v926
          %v937 = vpop.f32.mrf.mxu0
          %v938 = vadd.f32 %v879, %v937
          %v939 = vpop.f32.mrf.mxu0
          %v940 = vadd.f32 %v879, %v939
          %941 = vdwg.mxu0
          %v942 = vsub.f32 0.0, %v938
          %v943 = vsub.f32 0.0, %v940
          %v944 = vmul.f32 %v942, 1.442695
          %v945 = vpow.pop %v944
          %v946 = vmul.f32 %v943, 1.442695
          %v947 = vpow.pop %v946
          %v948 = vadd.f32 %v945, 1.0
          %v949 = vadd.f32 %v947, 1.0
          %v950 = vrcp.pop %v948
          %v951 = vmul.f32 %v948, %v950
          %v952 = vsub.f32 1.0, %v951
          %v953 = vmul.f32 %v950, %v952
          %v954 = vadd.f32 %v950, %v953
          %vm955 = vweird.f32 %v948
          %vm956 = vweird.f32 %v950
          %vm957 = vmor %vm955, %vm956
          %v958 = vsel %vm957, %v950, %v954
          %v959 = vand.u32 2147483647, %v948
          %vm960 = vcmp.eq.f32.partialorder %v959, 8.507059e+37
          %v961 = vand.u32 %v948, 2147483648
          %v962 = vor.u32 1.1754944e-38, %v961
          %v963 = vsel %vm960, %v962, %v958
          %v964 = vmul.f32 1.0, %v963
          %v965 = vrcp.pop %v949
          %v966 = vmul.f32 %v949, %v965
          %v967 = vsub.f32 1.0, %v966
          %v968 = vmul.f32 %v965, %v967
          %v969 = vadd.f32 %v965, %v968
          %vm970 = vweird.f32 %v949
          %vm971 = vweird.f32 %v965
          %vm972 = vmor %vm970, %vm971
          %v973 = vsel %vm972, %v965, %v969
          %v974 = vand.u32 2147483647, %v949
          %vm975 = vcmp.eq.f32.partialorder %v974, 8.507059e+37
          %v976 = vand.u32 %v949, 2147483648
          %v977 = vor.u32 1.1754944e-38, %v976
          %v978 = vsel %vm975, %v977, %v973
          %v979 = vmul.f32 1.0, %v978
          %vm980 = vcmask 31744
          %v981 = vsel %vm980, %v964, 0.0
          %982 = vadd.xlane.f32.xlu0 %v981
          %v983 = vpop.xlane.xlu0 %982
          %v984 = vsel %vm980, %v979, 0.0
          %985 = vadd.xlane.f32.xlu0 %v984
          %v986 = vpop.xlane.xlu0 %985
          %s987 = smul.u32 %s265, 16
          %s988 = scalar_lea.vmem %s262, %s987
          %vm989 = vcmask 7168
          %990 = vst.msk [vmem:[%s988] sm:$0xff] %vm989, %v983
          %991 = vst.msk [vmem:[%s988 + $0x8] sm:$0xff] %vm989, %v986
        $region45: #{boundary_head_forward.9} parent=39 // loop_footer
          %s269 = sadd.s32 1, %s265
        $region46: #{boundary_head_forward.9} parent=39 // loop_footer_branch
          %264 = sbr.rel target = $region42
        $region47: #{boundary_head_forward.9} parent=39 // loop_exit
          _
        %s992 = sand.u32 %s139, 1
        %s993 = scalar_lea.sflag [#allocation3], %s992
        %s994 = sand.u32 %s139, 1
        %s995 = smul.addr %s994, 128
        %s996 = scalar_lea.vmem [#allocation2], %s995
        %p997 = scmp.lt.s32.totalorder %s21, 1
        %s998 = scalar_select %p997, %s21, 1
        %s999 = smul.addr %s998, 32
        %s1000 = smul.addr %s999, 8
        %s1001 = scalar_lea.vmem %s6, %s1000
        // Predicated region
        $region48: #{boundary_head_forward.9} parent=39 // pred_check
          %p1002 = pneg %p149
        $region49: #{boundary_head_forward.9} parent=39 // pred_check_branch
          %1004 = sbr.rel (%p1002) target = $region51
        $region50: #{boundary_head_forward.9} parent=39 // pred_region
          %1006 = vsyncadd %s993, 0
          %s1007 = smul.addr %s21, 32
          %s1008 = smul.addr %s1007, 4
          %s1009 = scalar_lea.hbm %s5, %s1008
          %s1010 = sshll.u32 %s996, 4
          %s1011 = int_to_ptr.vmem [resolvable:$true] %s1010
          %s1012 = sshll.u32 %s1009, 4
          %s1013 = int_to_ptr.hbm [resolvable:$true] %s1012
          %1018 = dma.vmem_to_hbm [thread:$0]  %s1011, 2048, %s1013, %s993, 64, 64, 4
        $region51: #{boundary_head_forward.9} parent=39 // pred_fallthru
          _
        // Predicated region
        $region52: #{boundary_head_forward.9} parent=39 // pred_check
          %p1019 = pneg %p175
        $region53: #{boundary_head_forward.9} parent=39 // pred_check_branch
          %1021 = sbr.rel (%p1019) target = $region55
        $region54: #{boundary_head_forward.9} parent=39 // pred_region
          _
        $region55: #{boundary_head_forward.9} parent=39 // pred_fallthru
          _
      $region40: #{boundary_head_forward.9} parent=5 // pred_fallthru
        _
      %p1022 = scmp.le.s32.totalorder 2, %s16
      // Predicated region
      $region56: #{boundary_head_forward.9} parent=5 // pred_check
        %p1023 = pneg %p1022
      $region57: #{boundary_head_forward.9} parent=5 // pred_check_branch
        %1025 = sbr.rel (%p1023) target = $region59
      $region58: #{boundary_head_forward.9} parent=5 // pred_region
        %s1026 = ssub.s32 %s16, 2
        // Predicated region
        $region60: #{boundary_head_forward.9} parent=58 // pred_check
          %p1027 = pneg %p155
        $region61: #{boundary_head_forward.9} parent=58 // pred_check_branch
          %1029 = sbr.rel (%p1027) target = $region63
        $region62: #{boundary_head_forward.9} parent=58 // pred_region
          %s1030 = sand.u32 %s140, 1
          %s1031 = scalar_lea.sflag [#allocation3], %s1030
          %s1032 = sand.u32 %s140, 1
          %s1033 = smul.addr %s1032, 128
          %s1034 = scalar_lea.vmem [#allocation2], %s1033
          %1036 = dma.done %s1031, 2048
        $region63: #{boundary_head_forward.9} parent=58 // pred_fallthru
          _
        // Predicated region
        $region64: #{boundary_head_forward.9} parent=58 // pred_check
          %p1037 = pneg %p181
        $region65: #{boundary_head_forward.9} parent=58 // pred_check_branch
          %1039 = sbr.rel (%p1037) target = $region67
        $region66: #{boundary_head_forward.9} parent=58 // pred_region
          %p1040 = scmp.lt.s32.totalorder %s22, 1
          %s1041 = scalar_select %p1040, %s22, 1
          %s1042 = smul.addr %s1041, 32
          %s1043 = smul.addr %s1042, 8
          %s1044 = scalar_lea.vmem %s6, %s1043
        $region67: #{boundary_head_forward.9} parent=58 // pred_fallthru
          _
      $region59: #{boundary_head_forward.9} parent=5 // pred_fallthru
        _
    $region6: #{boundary_head_forward.9} parent=1 // loop_footer
      %s20 = sadd.s32 1, %s16
    $region7: #{boundary_head_forward.9} parent=1 // loop_footer_branch
      %15 = sbr.rel target = $region3
    $region8: #{boundary_head_forward.9} parent=1 // loop_exit
      _
    %1045 = vsyncpa [#allocation3], 1
    %s1046 = scalar_lea.sflag [#allocation3], 1
    %1047 = vsyncpa %s1046, 1

</llo_original>
